<compile_context>
chip_gen: v5e
topology: v5e:2x2
jax: 0.10.0
libtpu: 0.0.40
codegen_flags: <defaults>
</compile_context>

<pallas_src>
import math
import functools

import jax
import jax.numpy as jnp
from jax.experimental import pallas as pl
from jax.experimental.pallas import tpu as pltpu


_VMEM_LIMIT_BYTES = 48 * 1024 * 1024   # scoped VMEM: fits v7x's 64 MiB physical
_VMEM_TILE_BUDGET = 40 * 1024 * 1024   # budget for gi scratch + seq blocks


def _gru_layer_kernel(x_ref, wi_ref, wh_ref, bi_ref, bhn_ref,
                      out_ref, state_ref, gi_ref, *, hidden: int):
    """One (batch_block, time_chunk) grid step of a single GRU layer.

    x_ref     : (Tc, Bt, Din)  time-major input chunk
    wi_ref    : (Din, 3H)      fused input->hidden weights [r|z|n]
    wh_ref    : (H,   3H)      fused hidden->hidden weights [r|z|n]
    bi_ref    : (1,   3H)      fused input bias with b_hr/b_hz folded in (f32)
    bhn_ref   : (1,   H)       hidden bias of the n gate (f32)
    out_ref   : (Tc, Bt, H)    time-major output chunk
    state_ref : (Bt,  H)       resident across the (arbitrary) time axis;
                               serves as the h carry AND the final-state output
    gi_ref    : (Tc, Bt, 3H)   VMEM scratch staging the input projection
    """
    Hp = hidden
    Tc, Bt, Din = x_ref.shape

    @pl.when(pl.program_id(1) == 0)
    def _():
        state_ref[...] = jnp.zeros_like(state_ref)

    # Hoisted input projection: ONE (Tc*Bt, Din) @ (Din, 3H) MXU matmul per
    # chunk, staged into VMEM scratch.  Only h @ wh stays in the serial loop.
    wi = wi_ref[...]
    x2 = x_ref[...].reshape(Tc * Bt, Din).astype(wi.dtype)
    gi = jnp.dot(x2, wi, preferred_element_type=jnp.float32) + bi_ref[...]
    gi_ref[...] = gi.reshape(Tc, Bt, 3 * Hp)

    wh = wh_ref[...]
    bhn = bhn_ref[...]
    h = state_ref[...]
    # Static unroll over the chunk; per-step lane-dense stores bound live ranges.
    for t in range(Tc):
        gi_t = gi_ref[t]                                          # (Bt, 3H)
        gh = jnp.dot(h.astype(wh.dtype), wh,
                     preferred_element_type=jnp.float32)          # (Bt, 3H)
        # PyTorch GRU gates (b_hr/b_hz pre-folded into bi; f32 elementwise):
        rz = jax.nn.sigmoid(gi_t[:, :2 * Hp] + gh[:, :2 * Hp])    # [ r | z ]
        n = jnp.tanh(gi_t[:, 2 * Hp:] + rz[:, :Hp] * (gh[:, 2 * Hp:] + bhn))
        h = n + rz[:, Hp:] * (h - n)                              # (1-z)n + zh
        out_ref[t] = h.astype(out_ref.dtype)
    state_ref[...] = h


def _gru_layer(x, wi, wh, bi, bhn, *, hidden_padded, time_chunk, batch_blocks,
               out_dtype):
    """Run one GRU layer.  x is time-major (T, B, Din)."""
    T, B, Din = x.shape
    Hp = hidden_padded
    Tc = time_chunk
    nb = batch_blocks
    Bt = B // nb
    nt = T // Tc

    kernel = functools.partial(_gru_layer_kernel, hidden=Hp)

    seq_shape = jax.ShapeDtypeStruct((T, B, Hp), out_dtype)
    state_shape = jax.ShapeDtypeStruct((B, Hp), jnp.float32)
    x_spec = pl.BlockSpec((Tc, Bt, Din), lambda b, t: (t, b, 0))
    seq_spec = pl.BlockSpec((Tc, Bt, Hp), lambda b, t: (t, b, 0))
    state_spec = pl.BlockSpec((Bt, Hp), lambda b, t: (b, 0))

    def build(single_buffer_weights):
        def resident(a):
            # Grid-invariant operand: whole-array block, constant block index.
            ndim = a.ndim
            idx = lambda b, t: (0,) * ndim
            if single_buffer_weights:
                # Don't double-buffer operands whose block never changes
                # (VMEM headroom for big H, critical on v7x's 64 MiB).
                return pl.BlockSpec(a.shape, idx, pipeline_mode=pl.Buffered(1))
            return pl.BlockSpec(a.shape, idx)

        return pl.pallas_call(
            kernel,
            out_shape=(seq_shape, state_shape),
            grid=(nb, nt),
            in_specs=[x_spec, resident(wi), resident(wh),
                      resident(bi), resident(bhn)],
            out_specs=(seq_spec, state_spec),
            scratch_shapes=[pltpu.VMEM((Tc, Bt, 3 * Hp), jnp.float32)],
            compiler_params=pltpu.CompilerParams(
                dimension_semantics=("parallel", "arbitrary"),
                vmem_limit_bytes=_VMEM_LIMIT_BYTES),
        )

    try:
        return build(True)(x, wi, wh, bi, bhn)
    except Exception:
        # Fallback for jax versions where BlockSpec.pipeline_mode /
        # pl.Buffered(1) is unsupported: default (double-buffered) weights.
        return build(False)(x, wi, wh, bi, bhn)


def _round_up(x, m):
    return ((x + m - 1) // m) * m


def _pad_gate_cols(a, H, Hp):
    """Zero-pad each of the three [r|z|n] column blocks from H to Hp."""
    if Hp == H:
        return a
    r, z, n = jnp.split(a, 3, axis=-1)
    pad = [(0, 0)] * (a.ndim - 1) + [(0, Hp - H)]
    return jnp.concatenate(
        [jnp.pad(r, pad), jnp.pad(z, pad), jnp.pad(n, pad)], axis=-1)


def _prepare_layer_params(p, H, Hp, pad_input_rows, param_dtype):
    """Fold biases, zero-pad hidden dim to Hp, cast weights for the MXU.

    All padding is with zeros which (with the GRU gate equations) keeps every
    padded hidden unit exactly 0 at every time step, so the [:H] slice of the
    result is exact.
    """
    wi, wh, bi, bh = p["wi"], p["wh"], p["bi"], p["bh"]
    # Fold b_hr / b_hz into the input bias (same pre-activation); only b_hn
    # must stay separate: n = tanh(gi_n + r * (gh_n + b_hn)).
    bi = bi.at[:, :2 * H].add(bh[:, :2 * H])
    bhn = bh[:, 2 * H:]
    if Hp != H:
        if pad_input_rows:   # layers > 0 consume the previous layer's padded h
            wi = jnp.pad(wi, ((0, Hp - H), (0, 0)))
        wh = jnp.pad(wh, ((0, Hp - H), (0, 0)))
        wi = _pad_gate_cols(wi, H, Hp)
        wh = _pad_gate_cols(wh, H, Hp)
        bi = _pad_gate_cols(bi, H, Hp)
        bhn = jnp.pad(bhn, ((0, 0), (0, Hp - H)))
    # NOTE: per-gate lane padding is kept even for tiny H (packing 3H<=128
    # lanes would need masked gate extraction and is only worth it for H<~42).
    return (wi.astype(param_dtype), wh.astype(param_dtype),
            bi.astype(jnp.float32), bhn.astype(jnp.float32))


def _choose_time_chunk(T, B, d_in, Hp, requested=None):
    """Largest Tc (<=64) dividing T whose per-chunk working set fits the budget."""
    if requested is not None:
        assert T % requested == 0, (T, requested)
        return requested

    def chunk_bytes(tc):
        # f32 gi scratch + double-buffered input & output sequence blocks.
        return 4 * tc * B * (3 * Hp + 2 * d_in + 2 * Hp)

    candidates = [tc for tc in (64, 32, 16, 8) if T % tc == 0]
    if not candidates:
        return T                     # tiny T: whole sequence in one chunk
    for tc in candidates:            # prefer the largest fitting chunk
        if chunk_bytes(tc) <= _VMEM_TILE_BUDGET:
            return tc
    return candidates[-1]


def init_encoder_params(key, input_size, hidden_size, num_layers):
    """Fused GRU params (gate order [r|z|n]), U(-1/sqrt(H), 1/sqrt(H)) like torch."""
    bound = 1.0 / math.sqrt(hidden_size)
    layers = []
    for layer in range(num_layers):
        in_dim = input_size if layer == 0 else hidden_size
        key, k1, k2, k3, k4 = jax.random.split(key, 5)
        u = lambda k, shape: jax.random.uniform(
            k, shape, dtype=jnp.float32, minval=-bound, maxval=bound)
        layers.append({
            "wi": u(k1, (in_dim, 3 * hidden_size)),       # x @ wi
            "wh": u(k2, (hidden_size, 3 * hidden_size)),  # h @ wh
            "bi": u(k3, (1, 3 * hidden_size)),
            "bh": u(k4, (1, 3 * hidden_size)),
        })
    return layers


def encoder_forward(X, layer_params, *, param_dtype=jnp.bfloat16,
                    time_chunk=None, batch_blocks=1):
    """Equivalent of Encoder.forward.

    X: (bs, num_steps, input_size)
    returns (output (num_steps, bs, H), state (num_layers, bs, H))

    batch_blocks: keep at 1 on v5e/v6e (single TensorCore: the grid is a purely
      sequential loop, splitting the batch only serializes the recurrence);
      set to 2 on v7x (2 TCs) when B is large and B // 2 is a multiple of 8.
    """
    X = X.astype(jnp.float32)
    B, T, I = X.shape
    H = layer_params[0]["wh"].shape[0]
    Hp = _round_up(H, 128)                       # lane-dense padded hidden dim
    num_layers = len(layer_params)

    assert batch_blocks in (1, 2) and B % batch_blocks == 0
    assert batch_blocks == 1 or (B // batch_blocks) % 8 == 0
    Tc = _choose_time_chunk(T, B, max(I, Hp), Hp, requested=time_chunk)
    assert T % Tc == 0

    # Time-major everywhere: one cheap wrapper transpose of X for layer 0, then
    # every layer reads and writes (T, B, .); the module's (T, B, H) output
    # layout is produced directly by the lane/sublane-dense per-step stores.
    x = jnp.transpose(X, (1, 0, 2))
    finals = []
    for li, p in enumerate(layer_params):
        wi, wh, bi, bhn = _prepare_layer_params(
            p, H, Hp, pad_input_rows=(li > 0), param_dtype=param_dtype)
        last = (li == num_layers - 1)
        # Intermediate activations stored in the matmul dtype (bf16 fast path):
        # the next layer casts to it for the MXU anyway -> halves HBM traffic.
        out_dtype = jnp.float32 if last else param_dtype
        x, h_last = _gru_layer(
            x, wi, wh, bi, bhn, hidden_padded=Hp, time_chunk=Tc,
            batch_blocks=batch_blocks, out_dtype=out_dtype)
        finals.append(h_last)
        # TODO(synk): nn.GRU inter-layer dropout (dropout=0.0 default / eval) is identity; skipped.
    output = x[..., :H]                           # (T, B, H) time-major, f32
    state = jnp.stack(finals, axis=0)[..., :H]    # (num_layers, B, H)
    return output, state


def encoder_reference(X, layer_params):
    """Pure-JAX f32 reference (lax.scan), matching torch.nn.GRU semantics."""
    x_tm = jnp.transpose(X, (1, 0, 2)).astype(jnp.float32)
    finals = []
    for p in layer_params:
        H = p["wh"].shape[0]
        wi, wh, bi, bh = p["wi"], p["wh"], p["bi"], p["bh"]

        def step(h, x, wi=wi, wh=wh, bi=bi, bh=bh, H=H):
            gi = x @ wi + bi
            gh = h @ wh + bh
            r = jax.nn.sigmoid(gi[:, :H] + gh[:, :H])
            z = jax.nn.sigmoid(gi[:, H:2 * H] + gh[:, H:2 * H])
            n = jnp.tanh(gi[:, 2 * H:] + r * gh[:, 2 * H:])
            h_new = (1.0 - z) * n + z * h
            return h_new, h_new

        h0 = jnp.zeros((x_tm.shape[1], H), jnp.float32)
        h_last, ys = jax.lax.scan(step, h0, x_tm)
        x_tm = ys
        finals.append(h_last)
    return x_tm, jnp.stack(finals, axis=0)


if __name__ == "__main__":
    bs, num_steps, input_size = 2, 16, 16
    hidden_size, num_layers = 32, 2

    key = jax.random.PRNGKey(0)
    kx, kp = jax.random.split(key)
    X = jax.random.normal(kx, (bs, num_steps, input_size), dtype=jnp.float32)
    params = init_encoder_params(kp, input_size, hidden_size, num_layers)

    # Performance configuration: bf16 matmul inputs + bf16 inter-layer
    # activations, f32 accumulation/gate math.
    out_bf16, state_bf16 = encoder_forward(X, params, param_dtype=jnp.bfloat16)
    out_bf16 = jax.block_until_ready(out_bf16)
    state_bf16 = jax.block_until_ready(state_bf16)
    assert out_bf16.shape == (num_steps, bs, hidden_size)
    assert state_bf16.shape == (num_layers, bs, hidden_size)

    # Full-f32 path for a tight structural/numerical check.
    out_f32, state_f32 = encoder_forward(X, params, param_dtype=jnp.float32)
    out_f32 = jax.block_until_ready(out_f32)
    state_f32 = jax.block_until_ready(state_f32)

    ref_out, ref_state = encoder_reference(X, params)

    assert jnp.allclose(out_f32, ref_out, atol=1e-3, rtol=1e-3)
    assert jnp.allclose(state_f32, ref_state, atol=1e-3, rtol=1e-3)
    # bf16 matmul inputs/activations: hidden-state rounding compounds over T.
    assert jnp.allclose(out_bf16, ref_out, atol=5e-2, rtol=5e-2)
    assert jnp.allclose(state_bf16, ref_state, atol=5e-2, rtol=5e-2)

    print("KERNEL_OK")
</pallas_src>

<mosaic_0001>
module attributes {stable_mosaic.version = 11 : i64} {
  func.func @_gru_layer_kernel(%arg0: i32, %arg1: i32, %arg2: memref<16x2x16xf32, #tpu.memory_space<vmem>>, %arg3: memref<16x384xbf16, #tpu.memory_space<vmem>>, %arg4: memref<128x384xbf16, #tpu.memory_space<vmem>>, %arg5: memref<1x384xf32, #tpu.memory_space<vmem>>, %arg6: memref<1x128xf32, #tpu.memory_space<vmem>>, %arg7: memref<16x2x128xbf16, #tpu.memory_space<vmem>>, %arg8: memref<2x128xf32, #tpu.memory_space<vmem>>, %arg9: memref<16x2x384xf32, #tpu.memory_space<vmem>>) attributes {dimension_semantics = [#tpu.dimension_semantics<parallel>, #tpu.dimension_semantics<arbitrary>], iteration_bounds = array<i64: 1, 1>, scalar_prefetch = 0 : i64, scratch_operands = 1 : i64, tpu.core_type = #tpu.core_type<tc>, window_params = [{transform_indices = @transform_0, window_bounds = array<i64: 16, 2, 16>}, {pipeline_mode = #tpu.pipeline_mode<synchronous>, transform_indices = @transform_1, window_bounds = array<i64: 16, 384>}, {pipeline_mode = #tpu.pipeline_mode<synchronous>, transform_indices = @transform_2, window_bounds = array<i64: 128, 384>}, {pipeline_mode = #tpu.pipeline_mode<synchronous>, transform_indices = @transform_3, window_bounds = array<i64: 1, 384>}, {pipeline_mode = #tpu.pipeline_mode<synchronous>, transform_indices = @transform_4, window_bounds = array<i64: 1, 128>}, {transform_indices = @transform_5, window_bounds = array<i64: 16, 2, 128>}, {transform_indices = @transform_6, window_bounds = array<i64: 2, 128>}]} {
    %c0_i32 = arith.constant 0 : i32
    %0 = arith.cmpi eq, %arg1, %c0_i32 : i32
    %1 = arith.extui %0 : i1 to i32
    %c0_i32_0 = arith.constant 0 : i32
    %2 = arith.cmpi ne, %1, %c0_i32_0 : i32
    scf.if %2 {
      %cst_131 = arith.constant 0.000000e+00 : f32
      %465 = vector.broadcast %cst_131 : f32 to vector<2x128xf32>
      %c0_132 = arith.constant 0 : index
      %c0_133 = arith.constant 0 : index
      %466 = vector.load %arg8[%c0_132, %c0_133] : memref<2x128xf32, #tpu.memory_space<vmem>>, vector<2x128xf32>
      tpu.vector_store %arg8[%c0_132, %c0_133], %465 {strides = array<i32>} : memref<2x128xf32, #tpu.memory_space<vmem>>, vector<2x128xf32>,
    } else {
    }
    %c0 = arith.constant 0 : index
    %c0_1 = arith.constant 0 : index
    %3 = vector.load %arg3[%c0, %c0_1] : memref<16x384xbf16, #tpu.memory_space<vmem>>, vector<16x384xbf16>
    %c0_2 = arith.constant 0 : index
    %c0_3 = arith.constant 0 : index
    %c0_4 = arith.constant 0 : index
    %4 = vector.load %arg2[%c0_2, %c0_3, %c0_4] : memref<16x2x16xf32, #tpu.memory_space<vmem>>, vector<16x2x16xf32>
    %5 = vector.shape_cast %4 : vector<16x2x16xf32> to vector<32x16xf32>
    %6 = arith.truncf %5 : vector<32x16xf32> to vector<32x16xbf16>
    %cst = arith.constant dense<0.000000e+00> : vector<32x384xf32>
    %7 = tpu.matmul %6, %3, %cst {dimension_numbers = #tpu.dot_dimension_numbers<[1], [0], [0], [1], [0, 0, 1, 1], [], []>} : vector<32x16xbf16>, vector<16x384xbf16>, vector<32x384xf32> -> vector<32x384xf32>
    %c0_5 = arith.constant 0 : index
    %c0_6 = arith.constant 0 : index
    %8 = vector.load %arg5[%c0_5, %c0_6] : memref<1x384xf32, #tpu.memory_space<vmem>>, vector<1x384xf32>
    %9 = vector.broadcast %8 : vector<1x384xf32> to vector<32x384xf32>
    %10 = arith.addf %7, %9 : vector<32x384xf32>
    %11 = vector.shape_cast %10 : vector<32x384xf32> to vector<16x2x384xf32>
    %c0_7 = arith.constant 0 : index
    %c0_8 = arith.constant 0 : index
    %c0_9 = arith.constant 0 : index
    %12 = vector.load %arg9[%c0_7, %c0_8, %c0_9] : memref<16x2x384xf32, #tpu.memory_space<vmem>>, vector<16x2x384xf32>
    tpu.vector_store %arg9[%c0_7, %c0_8, %c0_9], %11 {strides = array<i32>} : memref<16x2x384xf32, #tpu.memory_space<vmem>>, vector<16x2x384xf32>,
    %c0_10 = arith.constant 0 : index
    %c0_11 = arith.constant 0 : index
    %13 = vector.load %arg4[%c0_10, %c0_11] : memref<128x384xbf16, #tpu.memory_space<vmem>>, vector<128x384xbf16>
    %c0_12 = arith.constant 0 : index
    %c0_13 = arith.constant 0 : index
    %14 = vector.load %arg6[%c0_12, %c0_13] : memref<1x128xf32, #tpu.memory_space<vmem>>, vector<1x128xf32>
    %c0_14 = arith.constant 0 : index
    %c0_15 = arith.constant 0 : index
    %15 = vector.load %arg8[%c0_14, %c0_15] : memref<2x128xf32, #tpu.memory_space<vmem>>, vector<2x128xf32>
    %c0_16 = arith.constant 0 : index
    %c0_17 = arith.constant 0 : index
    %c0_18 = arith.constant 0 : index
    %16 = vector.load %arg9[%c0_16, %c0_17, %c0_18] : memref<16x2x384xf32, #tpu.memory_space<vmem>>, vector<1x2x384xf32>
    %17 = vector.shape_cast %16 : vector<1x2x384xf32> to vector<2x384xf32>
    %18 = arith.truncf %15 : vector<2x128xf32> to vector<2x128xbf16>
    %cst_19 = arith.constant dense<0.000000e+00> : vector<2x384xf32>
    %19 = tpu.matmul %18, %13, %cst_19 {dimension_numbers = #tpu.dot_dimension_numbers<[1], [0], [0], [1], [0, 0, 1, 1], [], []>} : vector<2x128xbf16>, vector<128x384xbf16>, vector<2x384xf32> -> vector<2x384xf32>
    %20 = vector.extract_strided_slice %17 {offsets = [0, 0], sizes = [2, 256], strides = [1, 1]} : vector<2x384xf32> to vector<2x256xf32>
    %21 = vector.extract_strided_slice %19 {offsets = [0, 0], sizes = [2, 256], strides = [1, 1]} : vector<2x384xf32> to vector<2x256xf32>
    %22 = arith.addf %20, %21 : vector<2x256xf32>
    %23 = arith.negf %22 : vector<2x256xf32>
    %24 = math.exp %23 : vector<2x256xf32>
    %cst_20 = arith.constant 1.000000e+00 : f32
    %25 = vector.broadcast %cst_20 : f32 to vector<2x256xf32>
    %26 = arith.addf %25, %24 : vector<2x256xf32>
    %27 = arith.divf %25, %26 : vector<2x256xf32>
    %28 = vector.extract_strided_slice %17 {offsets = [0, 256], sizes = [2, 128], strides = [1, 1]} : vector<2x384xf32> to vector<2x128xf32>
    %29 = vector.extract_strided_slice %27 {offsets = [0, 0], sizes = [2, 128], strides = [1, 1]} : vector<2x256xf32> to vector<2x128xf32>
    %30 = vector.extract_strided_slice %19 {offsets = [0, 256], sizes = [2, 128], strides = [1, 1]} : vector<2x384xf32> to vector<2x128xf32>
    %31 = vector.broadcast %14 : vector<1x128xf32> to vector<2x128xf32>
    %32 = arith.addf %30, %31 : vector<2x128xf32>
    %33 = arith.mulf %29, %32 : vector<2x128xf32>
    %34 = arith.addf %28, %33 : vector<2x128xf32>
    %35 = math.tanh %34 : vector<2x128xf32>
    %36 = vector.extract_strided_slice %27 {offsets = [0, 128], sizes = [2, 128], strides = [1, 1]} : vector<2x256xf32> to vector<2x128xf32>
    %37 = arith.subf %15, %35 : vector<2x128xf32>
    %38 = arith.mulf %36, %37 : vector<2x128xf32>
    %39 = arith.addf %35, %38 : vector<2x128xf32>
    %40 = arith.truncf %39 : vector<2x128xf32> to vector<2x128xbf16>
    %c0_21 = arith.constant 0 : index
    %c0_22 = arith.constant 0 : index
    %c0_23 = arith.constant 0 : index
    %41 = vector.load %arg7[%c0_21, %c0_22, %c0_23] : memref<16x2x128xbf16, #tpu.memory_space<vmem>>, vector<1x2x128xbf16>
    %42 = vector.shape_cast %41 : vector<1x2x128xbf16> to vector<2x128xbf16>
    %43 = vector.shape_cast %40 : vector<2x128xbf16> to vector<1x2x128xbf16>
    tpu.vector_store %arg7[%c0_21, %c0_22, %c0_23], %43 {strides = array<i32>} : memref<16x2x128xbf16, #tpu.memory_space<vmem>>, vector<1x2x128xbf16>,
    %c1 = arith.constant 1 : index
    %c0_24 = arith.constant 0 : index
    %c0_25 = arith.constant 0 : index
    %44 = vector.load %arg9[%c1, %c0_24, %c0_25] : memref<16x2x384xf32, #tpu.memory_space<vmem>>, vector<1x2x384xf32>
    %45 = vector.shape_cast %44 : vector<1x2x384xf32> to vector<2x384xf32>
    %46 = arith.truncf %39 : vector<2x128xf32> to vector<2x128xbf16>
    %cst_26 = arith.constant dense<0.000000e+00> : vector<2x384xf32>
    %47 = tpu.matmul %46, %13, %cst_26 {dimension_numbers = #tpu.dot_dimension_numbers<[1], [0], [0], [1], [0, 0, 1, 1], [], []>} : vector<2x128xbf16>, vector<128x384xbf16>, vector<2x384xf32> -> vector<2x384xf32>
    %48 = vector.extract_strided_slice %45 {offsets = [0, 0], sizes = [2, 256], strides = [1, 1]} : vector<2x384xf32> to vector<2x256xf32>
    %49 = vector.extract_strided_slice %47 {offsets = [0, 0], sizes = [2, 256], strides = [1, 1]} : vector<2x384xf32> to vector<2x256xf32>
    %50 = arith.addf %48, %49 : vector<2x256xf32>
    %51 = arith.negf %50 : vector<2x256xf32>
    %52 = math.exp %51 : vector<2x256xf32>
    %cst_27 = arith.constant 1.000000e+00 : f32
    %53 = vector.broadcast %cst_27 : f32 to vector<2x256xf32>
    %54 = arith.addf %53, %52 : vector<2x256xf32>
    %55 = arith.divf %53, %54 : vector<2x256xf32>
    %56 = vector.extract_strided_slice %45 {offsets = [0, 256], sizes = [2, 128], strides = [1, 1]} : vector<2x384xf32> to vector<2x128xf32>
    %57 = vector.extract_strided_slice %55 {offsets = [0, 0], sizes = [2, 128], strides = [1, 1]} : vector<2x256xf32> to vector<2x128xf32>
    %58 = vector.extract_strided_slice %47 {offsets = [0, 256], sizes = [2, 128], strides = [1, 1]} : vector<2x384xf32> to vector<2x128xf32>
    %59 = vector.broadcast %14 : vector<1x128xf32> to vector<2x128xf32>
    %60 = arith.addf %58, %59 : vector<2x128xf32>
    %61 = arith.mulf %57, %60 : vector<2x128xf32>
    %62 = arith.addf %56, %61 : vector<2x128xf32>
    %63 = math.tanh %62 : vector<2x128xf32>
    %64 = vector.extract_strided_slice %55 {offsets = [0, 128], sizes = [2, 128], strides = [1, 1]} : vector<2x256xf32> to vector<2x128xf32>
    %65 = arith.subf %39, %63 : vector<2x128xf32>
    %66 = arith.mulf %64, %65 : vector<2x128xf32>
    %67 = arith.addf %63, %66 : vector<2x128xf32>
    %68 = arith.truncf %67 : vector<2x128xf32> to vector<2x128xbf16>
    %c1_28 = arith.constant 1 : index
    %c0_29 = arith.constant 0 : index
    %c0_30 = arith.constant 0 : index
    %69 = vector.load %arg7[%c1_28, %c0_29, %c0_30] : memref<16x2x128xbf16, #tpu.memory_space<vmem>>, vector<1x2x128xbf16>
    %70 = vector.shape_cast %69 : vector<1x2x128xbf16> to vector<2x128xbf16>
    %71 = vector.shape_cast %68 : vector<2x128xbf16> to vector<1x2x128xbf16>
    tpu.vector_store %arg7[%c1_28, %c0_29, %c0_30], %71 {strides = array<i32>} : memref<16x2x128xbf16, #tpu.memory_space<vmem>>, vector<1x2x128xbf16>,
    %c2 = arith.constant 2 : index
    %c0_31 = arith.constant 0 : index
    %c0_32 = arith.constant 0 : index
    %72 = vector.load %arg9[%c2, %c0_31, %c0_32] : memref<16x2x384xf32, #tpu.memory_space<vmem>>, vector<1x2x384xf32>
    %73 = vector.shape_cast %72 : vector<1x2x384xf32> to vector<2x384xf32>
    %74 = arith.truncf %67 : vector<2x128xf32> to vector<2x128xbf16>
    %cst_33 = arith.constant dense<0.000000e+00> : vector<2x384xf32>
    %75 = tpu.matmul %74, %13, %cst_33 {dimension_numbers = #tpu.dot_dimension_numbers<[1], [0], [0], [1], [0, 0, 1, 1], [], []>} : vector<2x128xbf16>, vector<128x384xbf16>, vector<2x384xf32> -> vector<2x384xf32>
    %76 = vector.extract_strided_slice %73 {offsets = [0, 0], sizes = [2, 256], strides = [1, 1]} : vector<2x384xf32> to vector<2x256xf32>
    %77 = vector.extract_strided_slice %75 {offsets = [0, 0], sizes = [2, 256], strides = [1, 1]} : vector<2x384xf32> to vector<2x256xf32>
    %78 = arith.addf %76, %77 : vector<2x256xf32>
    %79 = arith.negf %78 : vector<2x256xf32>
    %80 = math.exp %79 : vector<2x256xf32>
    %cst_34 = arith.constant 1.000000e+00 : f32
    %81 = vector.broadcast %cst_34 : f32 to vector<2x256xf32>
    %82 = arith.addf %81, %80 : vector<2x256xf32>
    %83 = arith.divf %81, %82 : vector<2x256xf32>
    %84 = vector.extract_strided_slice %73 {offsets = [0, 256], sizes = [2, 128], strides = [1, 1]} : vector<2x384xf32> to vector<2x128xf32>
    %85 = vector.extract_strided_slice %83 {offsets = [0, 0], sizes = [2, 128], strides = [1, 1]} : vector<2x256xf32> to vector<2x128xf32>
    %86 = vector.extract_strided_slice %75 {offsets = [0, 256], sizes = [2, 128], strides = [1, 1]} : vector<2x384xf32> to vector<2x128xf32>
    %87 = vector.broadcast %14 : vector<1x128xf32> to vector<2x128xf32>
    %88 = arith.addf %86, %87 : vector<2x128xf32>
    %89 = arith.mulf %85, %88 : vector<2x128xf32>
    %90 = arith.addf %84, %89 : vector<2x128xf32>
    %91 = math.tanh %90 : vector<2x128xf32>
    %92 = vector.extract_strided_slice %83 {offsets = [0, 128], sizes = [2, 128], strides = [1, 1]} : vector<2x256xf32> to vector<2x128xf32>
    %93 = arith.subf %67, %91 : vector<2x128xf32>
    %94 = arith.mulf %92, %93 : vector<2x128xf32>
    %95 = arith.addf %91, %94 : vector<2x128xf32>
    %96 = arith.truncf %95 : vector<2x128xf32> to vector<2x128xbf16>
    %c2_35 = arith.constant 2 : index
    %c0_36 = arith.constant 0 : index
    %c0_37 = arith.constant 0 : index
    %97 = vector.load %arg7[%c2_35, %c0_36, %c0_37] : memref<16x2x128xbf16, #tpu.memory_space<vmem>>, vector<1x2x128xbf16>
    %98 = vector.shape_cast %97 : vector<1x2x128xbf16> to vector<2x128xbf16>
    %99 = vector.shape_cast %96 : vector<2x128xbf16> to vector<1x2x128xbf16>
    tpu.vector_store %arg7[%c2_35, %c0_36, %c0_37], %99 {strides = array<i32>} : memref<16x2x128xbf16, #tpu.memory_space<vmem>>, vector<1x2x128xbf16>,
    %c3 = arith.constant 3 : index
    %c0_38 = arith.constant 0 : index
    %c0_39 = arith.constant 0 : index
    %100 = vector.load %arg9[%c3, %c0_38, %c0_39] : memref<16x2x384xf32, #tpu.memory_space<vmem>>, vector<1x2x384xf32>
    %101 = vector.shape_cast %100 : vector<1x2x384xf32> to vector<2x384xf32>
    %102 = arith.truncf %95 : vector<2x128xf32> to vector<2x128xbf16>
    %cst_40 = arith.constant dense<0.000000e+00> : vector<2x384xf32>
    %103 = tpu.matmul %102, %13, %cst_40 {dimension_numbers = #tpu.dot_dimension_numbers<[1], [0], [0], [1], [0, 0, 1, 1], [], []>} : vector<2x128xbf16>, vector<128x384xbf16>, vector<2x384xf32> -> vector<2x384xf32>
    %104 = vector.extract_strided_slice %101 {offsets = [0, 0], sizes = [2, 256], strides = [1, 1]} : vector<2x384xf32> to vector<2x256xf32>
    %105 = vector.extract_strided_slice %103 {offsets = [0, 0], sizes = [2, 256], strides = [1, 1]} : vector<2x384xf32> to vector<2x256xf32>
    %106 = arith.addf %104, %105 : vector<2x256xf32>
    %107 = arith.negf %106 : vector<2x256xf32>
    %108 = math.exp %107 : vector<2x256xf32>
    %cst_41 = arith.constant 1.000000e+00 : f32
    %109 = vector.broadcast %cst_41 : f32 to vector<2x256xf32>
    %110 = arith.addf %109, %108 : vector<2x256xf32>
    %111 = arith.divf %109, %110 : vector<2x256xf32>
    %112 = vector.extract_strided_slice %101 {offsets = [0, 256], sizes = [2, 128], strides = [1, 1]} : vector<2x384xf32> to vector<2x128xf32>
    %113 = vector.extract_strided_slice %111 {offsets = [0, 0], sizes = [2, 128], strides = [1, 1]} : vector<2x256xf32> to vector<2x128xf32>
    %114 = vector.extract_strided_slice %103 {offsets = [0, 256], sizes = [2, 128], strides = [1, 1]} : vector<2x384xf32> to vector<2x128xf32>
    %115 = vector.broadcast %14 : vector<1x128xf32> to vector<2x128xf32>
    %116 = arith.addf %114, %115 : vector<2x128xf32>
    %117 = arith.mulf %113, %116 : vector<2x128xf32>
    %118 = arith.addf %112, %117 : vector<2x128xf32>
    %119 = math.tanh %118 : vector<2x128xf32>
    %120 = vector.extract_strided_slice %111 {offsets = [0, 128], sizes = [2, 128], strides = [1, 1]} : vector<2x256xf32> to vector<2x128xf32>
    %121 = arith.subf %95, %119 : vector<2x128xf32>
    %122 = arith.mulf %120, %121 : vector<2x128xf32>
    %123 = arith.addf %119, %122 : vector<2x128xf32>
    %124 = arith.truncf %123 : vector<2x128xf32> to vector<2x128xbf16>
    %c3_42 = arith.constant 3 : index
    %c0_43 = arith.constant 0 : index
    %c0_44 = arith.constant 0 : index
    %125 = vector.load %arg7[%c3_42, %c0_43, %c0_44] : memref<16x2x128xbf16, #tpu.memory_space<vmem>>, vector<1x2x128xbf16>
    %126 = vector.shape_cast %125 : vector<1x2x128xbf16> to vector<2x128xbf16>
    %127 = vector.shape_cast %124 : vector<2x128xbf16> to vector<1x2x128xbf16>
    tpu.vector_store %arg7[%c3_42, %c0_43, %c0_44], %127 {strides = array<i32>} : memref<16x2x128xbf16, #tpu.memory_space<vmem>>, vector<1x2x128xbf16>,
    %c4 = arith.constant 4 : index
    %c0_45 = arith.constant 0 : index
    %c0_46 = arith.constant 0 : index
    %128 = vector.load %arg9[%c4, %c0_45, %c0_46] : memref<16x2x384xf32, #tpu.memory_space<vmem>>, vector<1x2x384xf32>
    %129 = vector.shape_cast %128 : vector<1x2x384xf32> to vector<2x384xf32>
    %130 = arith.truncf %123 : vector<2x128xf32> to vector<2x128xbf16>
    %cst_47 = arith.constant dense<0.000000e+00> : vector<2x384xf32>
    %131 = tpu.matmul %130, %13, %cst_47 {dimension_numbers = #tpu.dot_dimension_numbers<[1], [0], [0], [1], [0, 0, 1, 1], [], []>} : vector<2x128xbf16>, vector<128x384xbf16>, vector<2x384xf32> -> vector<2x384xf32>
    %132 = vector.extract_strided_slice %129 {offsets = [0, 0], sizes = [2, 256], strides = [1, 1]} : vector<2x384xf32> to vector<2x256xf32>
    %133 = vector.extract_strided_slice %131 {offsets = [0, 0], sizes = [2, 256], strides = [1, 1]} : vector<2x384xf32> to vector<2x256xf32>
    %134 = arith.addf %132, %133 : vector<2x256xf32>
    %135 = arith.negf %134 : vector<2x256xf32>
    %136 = math.exp %135 : vector<2x256xf32>
    %cst_48 = arith.constant 1.000000e+00 : f32
    %137 = vector.broadcast %cst_48 : f32 to vector<2x256xf32>
    %138 = arith.addf %137, %136 : vector<2x256xf32>
    %139 = arith.divf %137, %138 : vector<2x256xf32>
    %140 = vector.extract_strided_slice %129 {offsets = [0, 256], sizes = [2, 128], strides = [1, 1]} : vector<2x384xf32> to vector<2x128xf32>
    %141 = vector.extract_strided_slice %139 {offsets = [0, 0], sizes = [2, 128], strides = [1, 1]} : vector<2x256xf32> to vector<2x128xf32>
    %142 = vector.extract_strided_slice %131 {offsets = [0, 256], sizes = [2, 128], strides = [1, 1]} : vector<2x384xf32> to vector<2x128xf32>
    %143 = vector.broadcast %14 : vector<1x128xf32> to vector<2x128xf32>
    %144 = arith.addf %142, %143 : vector<2x128xf32>
    %145 = arith.mulf %141, %144 : vector<2x128xf32>
    %146 = arith.addf %140, %145 : vector<2x128xf32>
    %147 = math.tanh %146 : vector<2x128xf32>
    %148 = vector.extract_strided_slice %139 {offsets = [0, 128], sizes = [2, 128], strides = [1, 1]} : vector<2x256xf32> to vector<2x128xf32>
    %149 = arith.subf %123, %147 : vector<2x128xf32>
    %150 = arith.mulf %148, %149 : vector<2x128xf32>
    %151 = arith.addf %147, %150 : vector<2x128xf32>
    %152 = arith.truncf %151 : vector<2x128xf32> to vector<2x128xbf16>
    %c4_49 = arith.constant 4 : index
    %c0_50 = arith.constant 0 : index
    %c0_51 = arith.constant 0 : index
    %153 = vector.load %arg7[%c4_49, %c0_50, %c0_51] : memref<16x2x128xbf16, #tpu.memory_space<vmem>>, vector<1x2x128xbf16>
    %154 = vector.shape_cast %153 : vector<1x2x128xbf16> to vector<2x128xbf16>
    %155 = vector.shape_cast %152 : vector<2x128xbf16> to vector<1x2x128xbf16>
    tpu.vector_store %arg7[%c4_49, %c0_50, %c0_51], %155 {strides = array<i32>} : memref<16x2x128xbf16, #tpu.memory_space<vmem>>, vector<1x2x128xbf16>,
    %c5 = arith.constant 5 : index
    %c0_52 = arith.constant 0 : index
    %c0_53 = arith.constant 0 : index
    %156 = vector.load %arg9[%c5, %c0_52, %c0_53] : memref<16x2x384xf32, #tpu.memory_space<vmem>>, vector<1x2x384xf32>
    %157 = vector.shape_cast %156 : vector<1x2x384xf32> to vector<2x384xf32>
    %158 = arith.truncf %151 : vector<2x128xf32> to vector<2x128xbf16>
    %cst_54 = arith.constant dense<0.000000e+00> : vector<2x384xf32>
    %159 = tpu.matmul %158, %13, %cst_54 {dimension_numbers = #tpu.dot_dimension_numbers<[1], [0], [0], [1], [0, 0, 1, 1], [], []>} : vector<2x128xbf16>, vector<128x384xbf16>, vector<2x384xf32> -> vector<2x384xf32>
    %160 = vector.extract_strided_slice %157 {offsets = [0, 0], sizes = [2, 256], strides = [1, 1]} : vector<2x384xf32> to vector<2x256xf32>
    %161 = vector.extract_strided_slice %159 {offsets = [0, 0], sizes = [2, 256], strides = [1, 1]} : vector<2x384xf32> to vector<2x256xf32>
    %162 = arith.addf %160, %161 : vector<2x256xf32>
    %163 = arith.negf %162 : vector<2x256xf32>
    %164 = math.exp %163 : vector<2x256xf32>
    %cst_55 = arith.constant 1.000000e+00 : f32
    %165 = vector.broadcast %cst_55 : f32 to vector<2x256xf32>
    %166 = arith.addf %165, %164 : vector<2x256xf32>
    %167 = arith.divf %165, %166 : vector<2x256xf32>
    %168 = vector.extract_strided_slice %157 {offsets = [0, 256], sizes = [2, 128], strides = [1, 1]} : vector<2x384xf32> to vector<2x128xf32>
    %169 = vector.extract_strided_slice %167 {offsets = [0, 0], sizes = [2, 128], strides = [1, 1]} : vector<2x256xf32> to vector<2x128xf32>
    %170 = vector.extract_strided_slice %159 {offsets = [0, 256], sizes = [2, 128], strides = [1, 1]} : vector<2x384xf32> to vector<2x128xf32>
    %171 = vector.broadcast %14 : vector<1x128xf32> to vector<2x128xf32>
    %172 = arith.addf %170, %171 : vector<2x128xf32>
    %173 = arith.mulf %169, %172 : vector<2x128xf32>
    %174 = arith.addf %168, %173 : vector<2x128xf32>
    %175 = math.tanh %174 : vector<2x128xf32>
    %176 = vector.extract_strided_slice %167 {offsets = [0, 128], sizes = [2, 128], strides = [1, 1]} : vector<2x256xf32> to vector<2x128xf32>
    %177 = arith.subf %151, %175 : vector<2x128xf32>
    %178 = arith.mulf %176, %177 : vector<2x128xf32>
    %179 = arith.addf %175, %178 : vector<2x128xf32>
    %180 = arith.truncf %179 : vector<2x128xf32> to vector<2x128xbf16>
    %c5_56 = arith.constant 5 : index
    %c0_57 = arith.constant 0 : index
    %c0_58 = arith.constant 0 : index
    %181 = vector.load %arg7[%c5_56, %c0_57, %c0_58] : memref<16x2x128xbf16, #tpu.memory_space<vmem>>, vector<1x2x128xbf16>
    %182 = vector.shape_cast %181 : vector<1x2x128xbf16> to vector<2x128xbf16>
    %183 = vector.shape_cast %180 : vector<2x128xbf16> to vector<1x2x128xbf16>
    tpu.vector_store %arg7[%c5_56, %c0_57, %c0_58], %183 {strides = array<i32>} : memref<16x2x128xbf16, #tpu.memory_space<vmem>>, vector<1x2x128xbf16>,
    %c6 = arith.constant 6 : index
    %c0_59 = arith.constant 0 : index
    %c0_60 = arith.constant 0 : index
    %184 = vector.load %arg9[%c6, %c0_59, %c0_60] : memref<16x2x384xf32, #tpu.memory_space<vmem>>, vector<1x2x384xf32>
    %185 = vector.shape_cast %184 : vector<1x2x384xf32> to vector<2x384xf32>
    %186 = arith.truncf %179 : vector<2x128xf32> to vector<2x128xbf16>
    %cst_61 = arith.constant dense<0.000000e+00> : vector<2x384xf32>
    %187 = tpu.matmul %186, %13, %cst_61 {dimension_numbers = #tpu.dot_dimension_numbers<[1], [0], [0], [1], [0, 0, 1, 1], [], []>} : vector<2x128xbf16>, vector<128x384xbf16>, vector<2x384xf32> -> vector<2x384xf32>
    %188 = vector.extract_strided_slice %185 {offsets = [0, 0], sizes = [2, 256], strides = [1, 1]} : vector<2x384xf32> to vector<2x256xf32>
    %189 = vector.extract_strided_slice %187 {offsets = [0, 0], sizes = [2, 256], strides = [1, 1]} : vector<2x384xf32> to vector<2x256xf32>
    %190 = arith.addf %188, %189 : vector<2x256xf32>
    %191 = arith.negf %190 : vector<2x256xf32>
    %192 = math.exp %191 : vector<2x256xf32>
    %cst_62 = arith.constant 1.000000e+00 : f32
    %193 = vector.broadcast %cst_62 : f32 to vector<2x256xf32>
    %194 = arith.addf %193, %192 : vector<2x256xf32>
    %195 = arith.divf %193, %194 : vector<2x256xf32>
    %196 = vector.extract_strided_slice %185 {offsets = [0, 256], sizes = [2, 128], strides = [1, 1]} : vector<2x384xf32> to vector<2x128xf32>
    %197 = vector.extract_strided_slice %195 {offsets = [0, 0], sizes = [2, 128], strides = [1, 1]} : vector<2x256xf32> to vector<2x128xf32>
    %198 = vector.extract_strided_slice %187 {offsets = [0, 256], sizes = [2, 128], strides = [1, 1]} : vector<2x384xf32> to vector<2x128xf32>
    %199 = vector.broadcast %14 : vector<1x128xf32> to vector<2x128xf32>
    %200 = arith.addf %198, %199 : vector<2x128xf32>
    %201 = arith.mulf %197, %200 : vector<2x128xf32>
    %202 = arith.addf %196, %201 : vector<2x128xf32>
    %203 = math.tanh %202 : vector<2x128xf32>
    %204 = vector.extract_strided_slice %195 {offsets = [0, 128], sizes = [2, 128], strides = [1, 1]} : vector<2x256xf32> to vector<2x128xf32>
    %205 = arith.subf %179, %203 : vector<2x128xf32>
    %206 = arith.mulf %204, %205 : vector<2x128xf32>
    %207 = arith.addf %203, %206 : vector<2x128xf32>
    %208 = arith.truncf %207 : vector<2x128xf32> to vector<2x128xbf16>
    %c6_63 = arith.constant 6 : index
    %c0_64 = arith.constant 0 : index
    %c0_65 = arith.constant 0 : index
    %209 = vector.load %arg7[%c6_63, %c0_64, %c0_65] : memref<16x2x128xbf16, #tpu.memory_space<vmem>>, vector<1x2x128xbf16>
    %210 = vector.shape_cast %209 : vector<1x2x128xbf16> to vector<2x128xbf16>
    %211 = vector.shape_cast %208 : vector<2x128xbf16> to vector<1x2x128xbf16>
    tpu.vector_store %arg7[%c6_63, %c0_64, %c0_65], %211 {strides = array<i32>} : memref<16x2x128xbf16, #tpu.memory_space<vmem>>, vector<1x2x128xbf16>,
    %c7 = arith.constant 7 : index
    %c0_66 = arith.constant 0 : index
    %c0_67 = arith.constant 0 : index
    %212 = vector.load %arg9[%c7, %c0_66, %c0_67] : memref<16x2x384xf32, #tpu.memory_space<vmem>>, vector<1x2x384xf32>
    %213 = vector.shape_cast %212 : vector<1x2x384xf32> to vector<2x384xf32>
    %214 = arith.truncf %207 : vector<2x128xf32> to vector<2x128xbf16>
    %cst_68 = arith.constant dense<0.000000e+00> : vector<2x384xf32>
    %215 = tpu.matmul %214, %13, %cst_68 {dimension_numbers = #tpu.dot_dimension_numbers<[1], [0], [0], [1], [0, 0, 1, 1], [], []>} : vector<2x128xbf16>, vector<128x384xbf16>, vector<2x384xf32> -> vector<2x384xf32>
    %216 = vector.extract_strided_slice %213 {offsets = [0, 0], sizes = [2, 256], strides = [1, 1]} : vector<2x384xf32> to vector<2x256xf32>
    %217 = vector.extract_strided_slice %215 {offsets = [0, 0], sizes = [2, 256], strides = [1, 1]} : vector<2x384xf32> to vector<2x256xf32>
    %218 = arith.addf %216, %217 : vector<2x256xf32>
    %219 = arith.negf %218 : vector<2x256xf32>
    %220 = math.exp %219 : vector<2x256xf32>
    %cst_69 = arith.constant 1.000000e+00 : f32
    %221 = vector.broadcast %cst_69 : f32 to vector<2x256xf32>
    %222 = arith.addf %221, %220 : vector<2x256xf32>
    %223 = arith.divf %221, %222 : vector<2x256xf32>
    %224 = vector.extract_strided_slice %213 {offsets = [0, 256], sizes = [2, 128], strides = [1, 1]} : vector<2x384xf32> to vector<2x128xf32>
    %225 = vector.extract_strided_slice %223 {offsets = [0, 0], sizes = [2, 128], strides = [1, 1]} : vector<2x256xf32> to vector<2x128xf32>
    %226 = vector.extract_strided_slice %215 {offsets = [0, 256], sizes = [2, 128], strides = [1, 1]} : vector<2x384xf32> to vector<2x128xf32>
    %227 = vector.broadcast %14 : vector<1x128xf32> to vector<2x128xf32>
    %228 = arith.addf %226, %227 : vector<2x128xf32>
    %229 = arith.mulf %225, %228 : vector<2x128xf32>
    %230 = arith.addf %224, %229 : vector<2x128xf32>
    %231 = math.tanh %230 : vector<2x128xf32>
    %232 = vector.extract_strided_slice %223 {offsets = [0, 128], sizes = [2, 128], strides = [1, 1]} : vector<2x256xf32> to vector<2x128xf32>
    %233 = arith.subf %207, %231 : vector<2x128xf32>
    %234 = arith.mulf %232, %233 : vector<2x128xf32>
    %235 = arith.addf %231, %234 : vector<2x128xf32>
    %236 = arith.truncf %235 : vector<2x128xf32> to vector<2x128xbf16>
    %c7_70 = arith.constant 7 : index
    %c0_71 = arith.constant 0 : index
    %c0_72 = arith.constant 0 : index
    %237 = vector.load %arg7[%c7_70, %c0_71, %c0_72] : memref<16x2x128xbf16, #tpu.memory_space<vmem>>, vector<1x2x128xbf16>
    %238 = vector.shape_cast %237 : vector<1x2x128xbf16> to vector<2x128xbf16>
    %239 = vector.shape_cast %236 : vector<2x128xbf16> to vector<1x2x128xbf16>
    tpu.vector_store %arg7[%c7_70, %c0_71, %c0_72], %239 {strides = array<i32>} : memref<16x2x128xbf16, #tpu.memory_space<vmem>>, vector<1x2x128xbf16>,
    %c8 = arith.constant 8 : index
    %c0_73 = arith.constant 0 : index
    %c0_74 = arith.constant 0 : index
    %240 = vector.load %arg9[%c8, %c0_73, %c0_74] : memref<16x2x384xf32, #tpu.memory_space<vmem>>, vector<1x2x384xf32>
    %241 = vector.shape_cast %240 : vector<1x2x384xf32> to vector<2x384xf32>
    %242 = arith.truncf %235 : vector<2x128xf32> to vector<2x128xbf16>
    %cst_75 = arith.constant dense<0.000000e+00> : vector<2x384xf32>
    %243 = tpu.matmul %242, %13, %cst_75 {dimension_numbers = #tpu.dot_dimension_numbers<[1], [0], [0], [1], [0, 0, 1, 1], [], []>} : vector<2x128xbf16>, vector<128x384xbf16>, vector<2x384xf32> -> vector<2x384xf32>
    %244 = vector.extract_strided_slice %241 {offsets = [0, 0], sizes = [2, 256], strides = [1, 1]} : vector<2x384xf32> to vector<2x256xf32>
    %245 = vector.extract_strided_slice %243 {offsets = [0, 0], sizes = [2, 256], strides = [1, 1]} : vector<2x384xf32> to vector<2x256xf32>
    %246 = arith.addf %244, %245 : vector<2x256xf32>
    %247 = arith.negf %246 : vector<2x256xf32>
    %248 = math.exp %247 : vector<2x256xf32>
    %cst_76 = arith.constant 1.000000e+00 : f32
    %249 = vector.broadcast %cst_76 : f32 to vector<2x256xf32>
    %250 = arith.addf %249, %248 : vector<2x256xf32>
    %251 = arith.divf %249, %250 : vector<2x256xf32>
    %252 = vector.extract_strided_slice %241 {offsets = [0, 256], sizes = [2, 128], strides = [1, 1]} : vector<2x384xf32> to vector<2x128xf32>
    %253 = vector.extract_strided_slice %251 {offsets = [0, 0], sizes = [2, 128], strides = [1, 1]} : vector<2x256xf32> to vector<2x128xf32>
    %254 = vector.extract_strided_slice %243 {offsets = [0, 256], sizes = [2, 128], strides = [1, 1]} : vector<2x384xf32> to vector<2x128xf32>
    %255 = vector.broadcast %14 : vector<1x128xf32> to vector<2x128xf32>
    %256 = arith.addf %254, %255 : vector<2x128xf32>
    %257 = arith.mulf %253, %256 : vector<2x128xf32>
    %258 = arith.addf %252, %257 : vector<2x128xf32>
    %259 = math.tanh %258 : vector<2x128xf32>
    %260 = vector.extract_strided_slice %251 {offsets = [0, 128], sizes = [2, 128], strides = [1, 1]} : vector<2x256xf32> to vector<2x128xf32>
    %261 = arith.subf %235, %259 : vector<2x128xf32>
    %262 = arith.mulf %260, %261 : vector<2x128xf32>
    %263 = arith.addf %259, %262 : vector<2x128xf32>
    %264 = arith.truncf %263 : vector<2x128xf32> to vector<2x128xbf16>
    %c8_77 = arith.constant 8 : index
    %c0_78 = arith.constant 0 : index
    %c0_79 = arith.constant 0 : index
    %265 = vector.load %arg7[%c8_77, %c0_78, %c0_79] : memref<16x2x128xbf16, #tpu.memory_space<vmem>>, vector<1x2x128xbf16>
    %266 = vector.shape_cast %265 : vector<1x2x128xbf16> to vector<2x128xbf16>
    %267 = vector.shape_cast %264 : vector<2x128xbf16> to vector<1x2x128xbf16>
    tpu.vector_store %arg7[%c8_77, %c0_78, %c0_79], %267 {strides = array<i32>} : memref<16x2x128xbf16, #tpu.memory_space<vmem>>, vector<1x2x128xbf16>,
    %c9 = arith.constant 9 : index
    %c0_80 = arith.constant 0 : index
    %c0_81 = arith.constant 0 : index
    %268 = vector.load %arg9[%c9, %c0_80, %c0_81] : memref<16x2x384xf32, #tpu.memory_space<vmem>>, vector<1x2x384xf32>
    %269 = vector.shape_cast %268 : vector<1x2x384xf32> to vector<2x384xf32>
    %270 = arith.truncf %263 : vector<2x128xf32> to vector<2x128xbf16>
    %cst_82 = arith.constant dense<0.000000e+00> : vector<2x384xf32>
    %271 = tpu.matmul %270, %13, %cst_82 {dimension_numbers = #tpu.dot_dimension_numbers<[1], [0], [0], [1], [0, 0, 1, 1], [], []>} : vector<2x128xbf16>, vector<128x384xbf16>, vector<2x384xf32> -> vector<2x384xf32>
    %272 = vector.extract_strided_slice %269 {offsets = [0, 0], sizes = [2, 256], strides = [1, 1]} : vector<2x384xf32> to vector<2x256xf32>
    %273 = vector.extract_strided_slice %271 {offsets = [0, 0], sizes = [2, 256], strides = [1, 1]} : vector<2x384xf32> to vector<2x256xf32>
    %274 = arith.addf %272, %273 : vector<2x256xf32>
    %275 = arith.negf %274 : vector<2x256xf32>
    %276 = math.exp %275 : vector<2x256xf32>
    %cst_83 = arith.constant 1.000000e+00 : f32
    %277 = vector.broadcast %cst_83 : f32 to vector<2x256xf32>
    %278 = arith.addf %277, %276 : vector<2x256xf32>
    %279 = arith.divf %277, %278 : vector<2x256xf32>
    %280 = vector.extract_strided_slice %269 {offsets = [0, 256], sizes = [2, 128], strides = [1, 1]} : vector<2x384xf32> to vector<2x128xf32>
    %281 = vector.extract_strided_slice %279 {offsets = [0, 0], sizes = [2, 128], strides = [1, 1]} : vector<2x256xf32> to vector<2x128xf32>
    %282 = vector.extract_strided_slice %271 {offsets = [0, 256], sizes = [2, 128], strides = [1, 1]} : vector<2x384xf32> to vector<2x128xf32>
    %283 = vector.broadcast %14 : vector<1x128xf32> to vector<2x128xf32>
    %284 = arith.addf %282, %283 : vector<2x128xf32>
    %285 = arith.mulf %281, %284 : vector<2x128xf32>
    %286 = arith.addf %280, %285 : vector<2x128xf32>
    %287 = math.tanh %286 : vector<2x128xf32>
    %288 = vector.extract_strided_slice %279 {offsets = [0, 128], sizes = [2, 128], strides = [1, 1]} : vector<2x256xf32> to vector<2x128xf32>
    %289 = arith.subf %263, %287 : vector<2x128xf32>
    %290 = arith.mulf %288, %289 : vector<2x128xf32>
    %291 = arith.addf %287, %290 : vector<2x128xf32>
    %292 = arith.truncf %291 : vector<2x128xf32> to vector<2x128xbf16>
    %c9_84 = arith.constant 9 : index
    %c0_85 = arith.constant 0 : index
    %c0_86 = arith.constant 0 : index
    %293 = vector.load %arg7[%c9_84, %c0_85, %c0_86] : memref<16x2x128xbf16, #tpu.memory_space<vmem>>, vector<1x2x128xbf16>
    %294 = vector.shape_cast %293 : vector<1x2x128xbf16> to vector<2x128xbf16>
    %295 = vector.shape_cast %292 : vector<2x128xbf16> to vector<1x2x128xbf16>
    tpu.vector_store %arg7[%c9_84, %c0_85, %c0_86], %295 {strides = array<i32>} : memref<16x2x128xbf16, #tpu.memory_space<vmem>>, vector<1x2x128xbf16>,
    %c10 = arith.constant 10 : index
    %c0_87 = arith.constant 0 : index
    %c0_88 = arith.constant 0 : index
    %296 = vector.load %arg9[%c10, %c0_87, %c0_88] : memref<16x2x384xf32, #tpu.memory_space<vmem>>, vector<1x2x384xf32>
    %297 = vector.shape_cast %296 : vector<1x2x384xf32> to vector<2x384xf32>
    %298 = arith.truncf %291 : vector<2x128xf32> to vector<2x128xbf16>
    %cst_89 = arith.constant dense<0.000000e+00> : vector<2x384xf32>
    %299 = tpu.matmul %298, %13, %cst_89 {dimension_numbers = #tpu.dot_dimension_numbers<[1], [0], [0], [1], [0, 0, 1, 1], [], []>} : vector<2x128xbf16>, vector<128x384xbf16>, vector<2x384xf32> -> vector<2x384xf32>
    %300 = vector.extract_strided_slice %297 {offsets = [0, 0], sizes = [2, 256], strides = [1, 1]} : vector<2x384xf32> to vector<2x256xf32>
    %301 = vector.extract_strided_slice %299 {offsets = [0, 0], sizes = [2, 256], strides = [1, 1]} : vector<2x384xf32> to vector<2x256xf32>
    %302 = arith.addf %300, %301 : vector<2x256xf32>
    %303 = arith.negf %302 : vector<2x256xf32>
    %304 = math.exp %303 : vector<2x256xf32>
    %cst_90 = arith.constant 1.000000e+00 : f32
    %305 = vector.broadcast %cst_90 : f32 to vector<2x256xf32>
    %306 = arith.addf %305, %304 : vector<2x256xf32>
    %307 = arith.divf %305, %306 : vector<2x256xf32>
    %308 = vector.extract_strided_slice %297 {offsets = [0, 256], sizes = [2, 128], strides = [1, 1]} : vector<2x384xf32> to vector<2x128xf32>
    %309 = vector.extract_strided_slice %307 {offsets = [0, 0], sizes = [2, 128], strides = [1, 1]} : vector<2x256xf32> to vector<2x128xf32>
    %310 = vector.extract_strided_slice %299 {offsets = [0, 256], sizes = [2, 128], strides = [1, 1]} : vector<2x384xf32> to vector<2x128xf32>
    %311 = vector.broadcast %14 : vector<1x128xf32> to vector<2x128xf32>
    %312 = arith.addf %310, %311 : vector<2x128xf32>
    %313 = arith.mulf %309, %312 : vector<2x128xf32>
    %314 = arith.addf %308, %313 : vector<2x128xf32>
    %315 = math.tanh %314 : vector<2x128xf32>
    %316 = vector.extract_strided_slice %307 {offsets = [0, 128], sizes = [2, 128], strides = [1, 1]} : vector<2x256xf32> to vector<2x128xf32>
    %317 = arith.subf %291, %315 : vector<2x128xf32>
    %318 = arith.mulf %316, %317 : vector<2x128xf32>
    %319 = arith.addf %315, %318 : vector<2x128xf32>
    %320 = arith.truncf %319 : vector<2x128xf32> to vector<2x128xbf16>
    %c10_91 = arith.constant 10 : index
    %c0_92 = arith.constant 0 : index
    %c0_93 = arith.constant 0 : index
    %321 = vector.load %arg7[%c10_91, %c0_92, %c0_93] : memref<16x2x128xbf16, #tpu.memory_space<vmem>>, vector<1x2x128xbf16>
    %322 = vector.shape_cast %321 : vector<1x2x128xbf16> to vector<2x128xbf16>
    %323 = vector.shape_cast %320 : vector<2x128xbf16> to vector<1x2x128xbf16>
    tpu.vector_store %arg7[%c10_91, %c0_92, %c0_93], %323 {strides = array<i32>} : memref<16x2x128xbf16, #tpu.memory_space<vmem>>, vector<1x2x128xbf16>,
    %c11 = arith.constant 11 : index
    %c0_94 = arith.constant 0 : index
    %c0_95 = arith.constant 0 : index
    %324 = vector.load %arg9[%c11, %c0_94, %c0_95] : memref<16x2x384xf32, #tpu.memory_space<vmem>>, vector<1x2x384xf32>
    %325 = vector.shape_cast %324 : vector<1x2x384xf32> to vector<2x384xf32>
    %326 = arith.truncf %319 : vector<2x128xf32> to vector<2x128xbf16>
    %cst_96 = arith.constant dense<0.000000e+00> : vector<2x384xf32>
    %327 = tpu.matmul %326, %13, %cst_96 {dimension_numbers = #tpu.dot_dimension_numbers<[1], [0], [0], [1], [0, 0, 1, 1], [], []>} : vector<2x128xbf16>, vector<128x384xbf16>, vector<2x384xf32> -> vector<2x384xf32>
    %328 = vector.extract_strided_slice %325 {offsets = [0, 0], sizes = [2, 256], strides = [1, 1]} : vector<2x384xf32> to vector<2x256xf32>
    %329 = vector.extract_strided_slice %327 {offsets = [0, 0], sizes = [2, 256], strides = [1, 1]} : vector<2x384xf32> to vector<2x256xf32>
    %330 = arith.addf %328, %329 : vector<2x256xf32>
    %331 = arith.negf %330 : vector<2x256xf32>
    %332 = math.exp %331 : vector<2x256xf32>
    %cst_97 = arith.constant 1.000000e+00 : f32
    %333 = vector.broadcast %cst_97 : f32 to vector<2x256xf32>
    %334 = arith.addf %333, %332 : vector<2x256xf32>
    %335 = arith.divf %333, %334 : vector<2x256xf32>
    %336 = vector.extract_strided_slice %325 {offsets = [0, 256], sizes = [2, 128], strides = [1, 1]} : vector<2x384xf32> to vector<2x128xf32>
    %337 = vector.extract_strided_slice %335 {offsets = [0, 0], sizes = [2, 128], strides = [1, 1]} : vector<2x256xf32> to vector<2x128xf32>
    %338 = vector.extract_strided_slice %327 {offsets = [0, 256], sizes = [2, 128], strides = [1, 1]} : vector<2x384xf32> to vector<2x128xf32>
    %339 = vector.broadcast %14 : vector<1x128xf32> to vector<2x128xf32>
    %340 = arith.addf %338, %339 : vector<2x128xf32>
    %341 = arith.mulf %337, %340 : vector<2x128xf32>
    %342 = arith.addf %336, %341 : vector<2x128xf32>
    %343 = math.tanh %342 : vector<2x128xf32>
    %344 = vector.extract_strided_slice %335 {offsets = [0, 128], sizes = [2, 128], strides = [1, 1]} : vector<2x256xf32> to vector<2x128xf32>
    %345 = arith.subf %319, %343 : vector<2x128xf32>
    %346 = arith.mulf %344, %345 : vector<2x128xf32>
    %347 = arith.addf %343, %346 : vector<2x128xf32>
    %348 = arith.truncf %347 : vector<2x128xf32> to vector<2x128xbf16>
    %c11_98 = arith.constant 11 : index
    %c0_99 = arith.constant 0 : index
    %c0_100 = arith.constant 0 : index
    %349 = vector.load %arg7[%c11_98, %c0_99, %c0_100] : memref<16x2x128xbf16, #tpu.memory_space<vmem>>, vector<1x2x128xbf16>
    %350 = vector.shape_cast %349 : vector<1x2x128xbf16> to vector<2x128xbf16>
    %351 = vector.shape_cast %348 : vector<2x128xbf16> to vector<1x2x128xbf16>
    tpu.vector_store %arg7[%c11_98, %c0_99, %c0_100], %351 {strides = array<i32>} : memref<16x2x128xbf16, #tpu.memory_space<vmem>>, vector<1x2x128xbf16>,
    %c12 = arith.constant 12 : index
    %c0_101 = arith.constant 0 : index
    %c0_102 = arith.constant 0 : index
    %352 = vector.load %arg9[%c12, %c0_101, %c0_102] : memref<16x2x384xf32, #tpu.memory_space<vmem>>, vector<1x2x384xf32>
    %353 = vector.shape_cast %352 : vector<1x2x384xf32> to vector<2x384xf32>
    %354 = arith.truncf %347 : vector<2x128xf32> to vector<2x128xbf16>
    %cst_103 = arith.constant dense<0.000000e+00> : vector<2x384xf32>
    %355 = tpu.matmul %354, %13, %cst_103 {dimension_numbers = #tpu.dot_dimension_numbers<[1], [0], [0], [1], [0, 0, 1, 1], [], []>} : vector<2x128xbf16>, vector<128x384xbf16>, vector<2x384xf32> -> vector<2x384xf32>
    %356 = vector.extract_strided_slice %353 {offsets = [0, 0], sizes = [2, 256], strides = [1, 1]} : vector<2x384xf32> to vector<2x256xf32>
    %357 = vector.extract_strided_slice %355 {offsets = [0, 0], sizes = [2, 256], strides = [1, 1]} : vector<2x384xf32> to vector<2x256xf32>
    %358 = arith.addf %356, %357 : vector<2x256xf32>
    %359 = arith.negf %358 : vector<2x256xf32>
    %360 = math.exp %359 : vector<2x256xf32>
    %cst_104 = arith.constant 1.000000e+00 : f32
    %361 = vector.broadcast %cst_104 : f32 to vector<2x256xf32>
    %362 = arith.addf %361, %360 : vector<2x256xf32>
    %363 = arith.divf %361, %362 : vector<2x256xf32>
    %364 = vector.extract_strided_slice %353 {offsets = [0, 256], sizes = [2, 128], strides = [1, 1]} : vector<2x384xf32> to vector<2x128xf32>
    %365 = vector.extract_strided_slice %363 {offsets = [0, 0], sizes = [2, 128], strides = [1, 1]} : vector<2x256xf32> to vector<2x128xf32>
    %366 = vector.extract_strided_slice %355 {offsets = [0, 256], sizes = [2, 128], strides = [1, 1]} : vector<2x384xf32> to vector<2x128xf32>
    %367 = vector.broadcast %14 : vector<1x128xf32> to vector<2x128xf32>
    %368 = arith.addf %366, %367 : vector<2x128xf32>
    %369 = arith.mulf %365, %368 : vector<2x128xf32>
    %370 = arith.addf %364, %369 : vector<2x128xf32>
    %371 = math.tanh %370 : vector<2x128xf32>
    %372 = vector.extract_strided_slice %363 {offsets = [0, 128], sizes = [2, 128], strides = [1, 1]} : vector<2x256xf32> to vector<2x128xf32>
    %373 = arith.subf %347, %371 : vector<2x128xf32>
    %374 = arith.mulf %372, %373 : vector<2x128xf32>
    %375 = arith.addf %371, %374 : vector<2x128xf32>
    %376 = arith.truncf %375 : vector<2x128xf32> to vector<2x128xbf16>
    %c12_105 = arith.constant 12 : index
    %c0_106 = arith.constant 0 : index
    %c0_107 = arith.constant 0 : index
    %377 = vector.load %arg7[%c12_105, %c0_106, %c0_107] : memref<16x2x128xbf16, #tpu.memory_space<vmem>>, vector<1x2x128xbf16>
    %378 = vector.shape_cast %377 : vector<1x2x128xbf16> to vector<2x128xbf16>
    %379 = vector.shape_cast %376 : vector<2x128xbf16> to vector<1x2x128xbf16>
    tpu.vector_store %arg7[%c12_105, %c0_106, %c0_107], %379 {strides = array<i32>} : memref<16x2x128xbf16, #tpu.memory_space<vmem>>, vector<1x2x128xbf16>,
    %c13 = arith.constant 13 : index
    %c0_108 = arith.constant 0 : index
    %c0_109 = arith.constant 0 : index
    %380 = vector.load %arg9[%c13, %c0_108, %c0_109] : memref<16x2x384xf32, #tpu.memory_space<vmem>>, vector<1x2x384xf32>
    %381 = vector.shape_cast %380 : vector<1x2x384xf32> to vector<2x384xf32>
    %382 = arith.truncf %375 : vector<2x128xf32> to vector<2x128xbf16>
    %cst_110 = arith.constant dense<0.000000e+00> : vector<2x384xf32>
    %383 = tpu.matmul %382, %13, %cst_110 {dimension_numbers = #tpu.dot_dimension_numbers<[1], [0], [0], [1], [0, 0, 1, 1], [], []>} : vector<2x128xbf16>, vector<128x384xbf16>, vector<2x384xf32> -> vector<2x384xf32>
    %384 = vector.extract_strided_slice %381 {offsets = [0, 0], sizes = [2, 256], strides = [1, 1]} : vector<2x384xf32> to vector<2x256xf32>
    %385 = vector.extract_strided_slice %383 {offsets = [0, 0], sizes = [2, 256], strides = [1, 1]} : vector<2x384xf32> to vector<2x256xf32>
    %386 = arith.addf %384, %385 : vector<2x256xf32>
    %387 = arith.negf %386 : vector<2x256xf32>
    %388 = math.exp %387 : vector<2x256xf32>
    %cst_111 = arith.constant 1.000000e+00 : f32
    %389 = vector.broadcast %cst_111 : f32 to vector<2x256xf32>
    %390 = arith.addf %389, %388 : vector<2x256xf32>
    %391 = arith.divf %389, %390 : vector<2x256xf32>
    %392 = vector.extract_strided_slice %381 {offsets = [0, 256], sizes = [2, 128], strides = [1, 1]} : vector<2x384xf32> to vector<2x128xf32>
    %393 = vector.extract_strided_slice %391 {offsets = [0, 0], sizes = [2, 128], strides = [1, 1]} : vector<2x256xf32> to vector<2x128xf32>
    %394 = vector.extract_strided_slice %383 {offsets = [0, 256], sizes = [2, 128], strides = [1, 1]} : vector<2x384xf32> to vector<2x128xf32>
    %395 = vector.broadcast %14 : vector<1x128xf32> to vector<2x128xf32>
    %396 = arith.addf %394, %395 : vector<2x128xf32>
    %397 = arith.mulf %393, %396 : vector<2x128xf32>
    %398 = arith.addf %392, %397 : vector<2x128xf32>
    %399 = math.tanh %398 : vector<2x128xf32>
    %400 = vector.extract_strided_slice %391 {offsets = [0, 128], sizes = [2, 128], strides = [1, 1]} : vector<2x256xf32> to vector<2x128xf32>
    %401 = arith.subf %375, %399 : vector<2x128xf32>
    %402 = arith.mulf %400, %401 : vector<2x128xf32>
    %403 = arith.addf %399, %402 : vector<2x128xf32>
    %404 = arith.truncf %403 : vector<2x128xf32> to vector<2x128xbf16>
    %c13_112 = arith.constant 13 : index
    %c0_113 = arith.constant 0 : index
    %c0_114 = arith.constant 0 : index
    %405 = vector.load %arg7[%c13_112, %c0_113, %c0_114] : memref<16x2x128xbf16, #tpu.memory_space<vmem>>, vector<1x2x128xbf16>
    %406 = vector.shape_cast %405 : vector<1x2x128xbf16> to vector<2x128xbf16>
    %407 = vector.shape_cast %404 : vector<2x128xbf16> to vector<1x2x128xbf16>
    tpu.vector_store %arg7[%c13_112, %c0_113, %c0_114], %407 {strides = array<i32>} : memref<16x2x128xbf16, #tpu.memory_space<vmem>>, vector<1x2x128xbf16>,
    %c14 = arith.constant 14 : index
    %c0_115 = arith.constant 0 : index
    %c0_116 = arith.constant 0 : index
    %408 = vector.load %arg9[%c14, %c0_115, %c0_116] : memref<16x2x384xf32, #tpu.memory_space<vmem>>, vector<1x2x384xf32>
    %409 = vector.shape_cast %408 : vector<1x2x384xf32> to vector<2x384xf32>
    %410 = arith.truncf %403 : vector<2x128xf32> to vector<2x128xbf16>
    %cst_117 = arith.constant dense<0.000000e+00> : vector<2x384xf32>
    %411 = tpu.matmul %410, %13, %cst_117 {dimension_numbers = #tpu.dot_dimension_numbers<[1], [0], [0], [1], [0, 0, 1, 1], [], []>} : vector<2x128xbf16>, vector<128x384xbf16>, vector<2x384xf32> -> vector<2x384xf32>
    %412 = vector.extract_strided_slice %409 {offsets = [0, 0], sizes = [2, 256], strides = [1, 1]} : vector<2x384xf32> to vector<2x256xf32>
    %413 = vector.extract_strided_slice %411 {offsets = [0, 0], sizes = [2, 256], strides = [1, 1]} : vector<2x384xf32> to vector<2x256xf32>
    %414 = arith.addf %412, %413 : vector<2x256xf32>
    %415 = arith.negf %414 : vector<2x256xf32>
    %416 = math.exp %415 : vector<2x256xf32>
    %cst_118 = arith.constant 1.000000e+00 : f32
    %417 = vector.broadcast %cst_118 : f32 to vector<2x256xf32>
    %418 = arith.addf %417, %416 : vector<2x256xf32>
    %419 = arith.divf %417, %418 : vector<2x256xf32>
    %420 = vector.extract_strided_slice %409 {offsets = [0, 256], sizes = [2, 128], strides = [1, 1]} : vector<2x384xf32> to vector<2x128xf32>
    %421 = vector.extract_strided_slice %419 {offsets = [0, 0], sizes = [2, 128], strides = [1, 1]} : vector<2x256xf32> to vector<2x128xf32>
    %422 = vector.extract_strided_slice %411 {offsets = [0, 256], sizes = [2, 128], strides = [1, 1]} : vector<2x384xf32> to vector<2x128xf32>
    %423 = vector.broadcast %14 : vector<1x128xf32> to vector<2x128xf32>
    %424 = arith.addf %422, %423 : vector<2x128xf32>
    %425 = arith.mulf %421, %424 : vector<2x128xf32>
    %426 = arith.addf %420, %425 : vector<2x128xf32>
    %427 = math.tanh %426 : vector<2x128xf32>
    %428 = vector.extract_strided_slice %419 {offsets = [0, 128], sizes = [2, 128], strides = [1, 1]} : vector<2x256xf32> to vector<2x128xf32>
    %429 = arith.subf %403, %427 : vector<2x128xf32>
    %430 = arith.mulf %428, %429 : vector<2x128xf32>
    %431 = arith.addf %427, %430 : vector<2x128xf32>
    %432 = arith.truncf %431 : vector<2x128xf32> to vector<2x128xbf16>
    %c14_119 = arith.constant 14 : index
    %c0_120 = arith.constant 0 : index
    %c0_121 = arith.constant 0 : index
    %433 = vector.load %arg7[%c14_119, %c0_120, %c0_121] : memref<16x2x128xbf16, #tpu.memory_space<vmem>>, vector<1x2x128xbf16>
    %434 = vector.shape_cast %433 : vector<1x2x128xbf16> to vector<2x128xbf16>
    %435 = vector.shape_cast %432 : vector<2x128xbf16> to vector<1x2x128xbf16>
    tpu.vector_store %arg7[%c14_119, %c0_120, %c0_121], %435 {strides = array<i32>} : memref<16x2x128xbf16, #tpu.memory_space<vmem>>, vector<1x2x128xbf16>,
    %c15 = arith.constant 15 : index
    %c0_122 = arith.constant 0 : index
    %c0_123 = arith.constant 0 : index
    %436 = vector.load %arg9[%c15, %c0_122, %c0_123] : memref<16x2x384xf32, #tpu.memory_space<vmem>>, vector<1x2x384xf32>
    %437 = vector.shape_cast %436 : vector<1x2x384xf32> to vector<2x384xf32>
    %438 = arith.truncf %431 : vector<2x128xf32> to vector<2x128xbf16>
    %cst_124 = arith.constant dense<0.000000e+00> : vector<2x384xf32>
    %439 = tpu.matmul %438, %13, %cst_124 {dimension_numbers = #tpu.dot_dimension_numbers<[1], [0], [0], [1], [0, 0, 1, 1], [], []>} : vector<2x128xbf16>, vector<128x384xbf16>, vector<2x384xf32> -> vector<2x384xf32>
    %440 = vector.extract_strided_slice %437 {offsets = [0, 0], sizes = [2, 256], strides = [1, 1]} : vector<2x384xf32> to vector<2x256xf32>
    %441 = vector.extract_strided_slice %439 {offsets = [0, 0], sizes = [2, 256], strides = [1, 1]} : vector<2x384xf32> to vector<2x256xf32>
    %442 = arith.addf %440, %441 : vector<2x256xf32>
    %443 = arith.negf %442 : vector<2x256xf32>
    %444 = math.exp %443 : vector<2x256xf32>
    %cst_125 = arith.constant 1.000000e+00 : f32
    %445 = vector.broadcast %cst_125 : f32 to vector<2x256xf32>
    %446 = arith.addf %445, %444 : vector<2x256xf32>
    %447 = arith.divf %445, %446 : vector<2x256xf32>
    %448 = vector.extract_strided_slice %437 {offsets = [0, 256], sizes = [2, 128], strides = [1, 1]} : vector<2x384xf32> to vector<2x128xf32>
    %449 = vector.extract_strided_slice %447 {offsets = [0, 0], sizes = [2, 128], strides = [1, 1]} : vector<2x256xf32> to vector<2x128xf32>
    %450 = vector.extract_strided_slice %439 {offsets = [0, 256], sizes = [2, 128], strides = [1, 1]} : vector<2x384xf32> to vector<2x128xf32>
    %451 = vector.broadcast %14 : vector<1x128xf32> to vector<2x128xf32>
    %452 = arith.addf %450, %451 : vector<2x128xf32>
    %453 = arith.mulf %449, %452 : vector<2x128xf32>
    %454 = arith.addf %448, %453 : vector<2x128xf32>
    %455 = math.tanh %454 : vector<2x128xf32>
    %456 = vector.extract_strided_slice %447 {offsets = [0, 128], sizes = [2, 128], strides = [1, 1]} : vector<2x256xf32> to vector<2x128xf32>
    %457 = arith.subf %431, %455 : vector<2x128xf32>
    %458 = arith.mulf %456, %457 : vector<2x128xf32>
    %459 = arith.addf %455, %458 : vector<2x128xf32>
    %460 = arith.truncf %459 : vector<2x128xf32> to vector<2x128xbf16>
    %c15_126 = arith.constant 15 : index
    %c0_127 = arith.constant 0 : index
    %c0_128 = arith.constant 0 : index
    %461 = vector.load %arg7[%c15_126, %c0_127, %c0_128] : memref<16x2x128xbf16, #tpu.memory_space<vmem>>, vector<1x2x128xbf16>
    %462 = vector.shape_cast %461 : vector<1x2x128xbf16> to vector<2x128xbf16>
    %463 = vector.shape_cast %460 : vector<2x128xbf16> to vector<1x2x128xbf16>
    tpu.vector_store %arg7[%c15_126, %c0_127, %c0_128], %463 {strides = array<i32>} : memref<16x2x128xbf16, #tpu.memory_space<vmem>>, vector<1x2x128xbf16>,
    %c0_129 = arith.constant 0 : index
    %c0_130 = arith.constant 0 : index
    %464 = vector.load %arg8[%c0_129, %c0_130] : memref<2x128xf32, #tpu.memory_space<vmem>>, vector<2x128xf32>
    tpu.vector_store %arg8[%c0_129, %c0_130], %459 {strides = array<i32>} : memref<2x128xf32, #tpu.memory_space<vmem>>, vector<2x128xf32>,
    return
  }
  func.func @transform_0(%arg0: i32, %arg1: i32) -> (i32, i32, i32) {
    %c0_i32 = arith.constant 0 : i32
    %c0_i32_0 = arith.constant 0 : i32
    return %arg1, %arg0, %c0_i32 : i32, i32, i32
  }
  func.func @transform_1(%arg0: i32, %arg1: i32) -> (i32, i32) {
    %c0_i32 = arith.constant 0 : i32
    %c0_i32_0 = arith.constant 0 : i32
    %c0_i32_1 = arith.constant 0 : i32
    return %c0_i32, %c0_i32_0 : i32, i32
  }
  func.func @transform_2(%arg0: i32, %arg1: i32) -> (i32, i32) {
    %c0_i32 = arith.constant 0 : i32
    %c0_i32_0 = arith.constant 0 : i32
    %c0_i32_1 = arith.constant 0 : i32
    return %c0_i32, %c0_i32_0 : i32, i32
  }
  func.func @transform_3(%arg0: i32, %arg1: i32) -> (i32, i32) {
    %c0_i32 = arith.constant 0 : i32
    %c0_i32_0 = arith.constant 0 : i32
    %c0_i32_1 = arith.constant 0 : i32
    return %c0_i32, %c0_i32_0 : i32, i32
  }
  func.func @transform_4(%arg0: i32, %arg1: i32) -> (i32, i32) {
    %c0_i32 = arith.constant 0 : i32
    %c0_i32_0 = arith.constant 0 : i32
    %c0_i32_1 = arith.constant 0 : i32
    return %c0_i32, %c0_i32_0 : i32, i32
  }
  func.func @transform_5(%arg0: i32, %arg1: i32) -> (i32, i32, i32) {
    %c0_i32 = arith.constant 0 : i32
    %c0_i32_0 = arith.constant 0 : i32
    return %arg1, %arg0, %c0_i32 : i32, i32, i32
  }
  func.func @transform_6(%arg0: i32, %arg1: i32) -> (i32, i32) {
    %c0_i32 = arith.constant 0 : i32
    %c0_i32_0 = arith.constant 0 : i32
    return %arg0, %c0_i32 : i32, i32
  }
}

module attributes {stable_mosaic.version = 11 : i64} {
  func.func @_gru_layer_kernel(%arg0: i32, %arg1: i32, %arg2: memref<16x2x16xf32, #tpu.memory_space<vmem>>, %arg3: memref<16x384xbf16, #tpu.memory_space<vmem>>, %arg4: memref<128x384xbf16, #tpu.memory_space<vmem>>, %arg5: memref<1x384xf32, #tpu.memory_space<vmem>>, %arg6: memref<1x128xf32, #tpu.memory_space<vmem>>, %arg7: memref<16x2x128xbf16, #tpu.memory_space<vmem>>, %arg8: memref<2x128xf32, #tpu.memory_space<vmem>>, %arg9: memref<16x2x384xf32, #tpu.memory_space<vmem>>) attributes {dimension_semantics = [#tpu.dimension_semantics<parallel>, #tpu.dimension_semantics<arbitrary>], iteration_bounds = array<i64: 1, 1>, scalar_prefetch = 0 : i64, scratch_operands = 1 : i64, tpu.core_type = #tpu.core_type<tc>, window_params = [{transform_indices = @transform_0, window_bounds = array<i64: 16, 2, 16>}, {pipeline_mode = #tpu.pipeline_mode<synchronous>, transform_indices = @transform_1, window_bounds = array<i64: 16, 384>}, {pipeline_mode = #tpu.pipeline_mode<synchronous>, transform_indices = @transform_2, window_bounds = array<i64: 128, 384>}, {pipeline_mode = #tpu.pipeline_mode<synchronous>, transform_indices = @transform_3, window_bounds = array<i64: 1, 384>}, {pipeline_mode = #tpu.pipeline_mode<synchronous>, transform_indices = @transform_4, window_bounds = array<i64: 1, 128>}, {transform_indices = @transform_5, window_bounds = array<i64: 16, 2, 128>}, {transform_indices = @transform_6, window_bounds = array<i64: 2, 128>}]} {
    %c0_i32 = arith.constant 0 : i32
    %0 = arith.cmpi eq, %arg1, %c0_i32 : i32
    %1 = arith.extui %0 : i1 to i32
    %c0_i32_0 = arith.constant 0 : i32
    %2 = arith.cmpi ne, %1, %c0_i32_0 : i32
    scf.if %2 {
      %cst_131 = arith.constant 0.000000e+00 : f32
      %465 = vector.broadcast %cst_131 : f32 to vector<2x128xf32>
      %c0_132 = arith.constant 0 : index
      %c0_133 = arith.constant 0 : index
      %466 = vector.load %arg8[%c0_132, %c0_133] : memref<2x128xf32, #tpu.memory_space<vmem>>, vector<2x128xf32>
      tpu.vector_store %arg8[%c0_132, %c0_133], %465 {strides = array<i32>} : memref<2x128xf32, #tpu.memory_space<vmem>>, vector<2x128xf32>,
    } else {
    }
    %c0 = arith.constant 0 : index
    %c0_1 = arith.constant 0 : index
    %3 = vector.load %arg3[%c0, %c0_1] : memref<16x384xbf16, #tpu.memory_space<vmem>>, vector<16x384xbf16>
    %c0_2 = arith.constant 0 : index
    %c0_3 = arith.constant 0 : index
    %c0_4 = arith.constant 0 : index
    %4 = vector.load %arg2[%c0_2, %c0_3, %c0_4] : memref<16x2x16xf32, #tpu.memory_space<vmem>>, vector<16x2x16xf32>
    %5 = vector.shape_cast %4 : vector<16x2x16xf32> to vector<32x16xf32>
    %6 = arith.truncf %5 : vector<32x16xf32> to vector<32x16xbf16>
    %cst = arith.constant dense<0.000000e+00> : vector<32x384xf32>
    %7 = tpu.matmul %6, %3, %cst {dimension_numbers = #tpu.dot_dimension_numbers<[1], [0], [0], [1], [0, 0, 1, 1], [], []>} : vector<32x16xbf16>, vector<16x384xbf16>, vector<32x384xf32> -> vector<32x384xf32>
    %c0_5 = arith.constant 0 : index
    %c0_6 = arith.constant 0 : index
    %8 = vector.load %arg5[%c0_5, %c0_6] : memref<1x384xf32, #tpu.memory_space<vmem>>, vector<1x384xf32>
    %9 = vector.broadcast %8 : vector<1x384xf32> to vector<32x384xf32>
    %10 = arith.addf %7, %9 : vector<32x384xf32>
    %11 = vector.shape_cast %10 : vector<32x384xf32> to vector<16x2x384xf32>
    %c0_7 = arith.constant 0 : index
    %c0_8 = arith.constant 0 : index
    %c0_9 = arith.constant 0 : index
    %12 = vector.load %arg9[%c0_7, %c0_8, %c0_9] : memref<16x2x384xf32, #tpu.memory_space<vmem>>, vector<16x2x384xf32>
    tpu.vector_store %arg9[%c0_7, %c0_8, %c0_9], %11 {strides = array<i32>} : memref<16x2x384xf32, #tpu.memory_space<vmem>>, vector<16x2x384xf32>,
    %c0_10 = arith.constant 0 : index
    %c0_11 = arith.constant 0 : index
    %13 = vector.load %arg4[%c0_10, %c0_11] : memref<128x384xbf16, #tpu.memory_space<vmem>>, vector<128x384xbf16>
    %c0_12 = arith.constant 0 : index
    %c0_13 = arith.constant 0 : index
    %14 = vector.load %arg6[%c0_12, %c0_13] : memref<1x128xf32, #tpu.memory_space<vmem>>, vector<1x128xf32>
    %c0_14 = arith.constant 0 : index
    %c0_15 = arith.constant 0 : index
    %15 = vector.load %arg8[%c0_14, %c0_15] : memref<2x128xf32, #tpu.memory_space<vmem>>, vector<2x128xf32>
    %c0_16 = arith.constant 0 : index
    %c0_17 = arith.constant 0 : index
    %c0_18 = arith.constant 0 : index
    %16 = vector.load %arg9[%c0_16, %c0_17, %c0_18] : memref<16x2x384xf32, #tpu.memory_space<vmem>>, vector<1x2x384xf32>
    %17 = vector.shape_cast %16 : vector<1x2x384xf32> to vector<2x384xf32>
    %18 = arith.truncf %15 : vector<2x128xf32> to vector<2x128xbf16>
    %cst_19 = arith.constant dense<0.000000e+00> : vector<2x384xf32>
    %19 = tpu.matmul %18, %13, %cst_19 {dimension_numbers = #tpu.dot_dimension_numbers<[1], [0], [0], [1], [0, 0, 1, 1], [], []>} : vector<2x128xbf16>, vector<128x384xbf16>, vector<2x384xf32> -> vector<2x384xf32>
    %20 = vector.extract_strided_slice %17 {offsets = [0, 0], sizes = [2, 256], strides = [1, 1]} : vector<2x384xf32> to vector<2x256xf32>
    %21 = vector.extract_strided_slice %19 {offsets = [0, 0], sizes = [2, 256], strides = [1, 1]} : vector<2x384xf32> to vector<2x256xf32>
    %22 = arith.addf %20, %21 : vector<2x256xf32>
    %23 = arith.negf %22 : vector<2x256xf32>
    %24 = math.exp %23 : vector<2x256xf32>
    %cst_20 = arith.constant 1.000000e+00 : f32
    %25 = vector.broadcast %cst_20 : f32 to vector<2x256xf32>
    %26 = arith.addf %25, %24 : vector<2x256xf32>
    %27 = arith.divf %25, %26 : vector<2x256xf32>
    %28 = vector.extract_strided_slice %17 {offsets = [0, 256], sizes = [2, 128], strides = [1, 1]} : vector<2x384xf32> to vector<2x128xf32>
    %29 = vector.extract_strided_slice %27 {offsets = [0, 0], sizes = [2, 128], strides = [1, 1]} : vector<2x256xf32> to vector<2x128xf32>
    %30 = vector.extract_strided_slice %19 {offsets = [0, 256], sizes = [2, 128], strides = [1, 1]} : vector<2x384xf32> to vector<2x128xf32>
    %31 = vector.broadcast %14 : vector<1x128xf32> to vector<2x128xf32>
    %32 = arith.addf %30, %31 : vector<2x128xf32>
    %33 = arith.mulf %29, %32 : vector<2x128xf32>
    %34 = arith.addf %28, %33 : vector<2x128xf32>
    %35 = math.tanh %34 : vector<2x128xf32>
    %36 = vector.extract_strided_slice %27 {offsets = [0, 128], sizes = [2, 128], strides = [1, 1]} : vector<2x256xf32> to vector<2x128xf32>
    %37 = arith.subf %15, %35 : vector<2x128xf32>
    %38 = arith.mulf %36, %37 : vector<2x128xf32>
    %39 = arith.addf %35, %38 : vector<2x128xf32>
    %40 = arith.truncf %39 : vector<2x128xf32> to vector<2x128xbf16>
    %c0_21 = arith.constant 0 : index
    %c0_22 = arith.constant 0 : index
    %c0_23 = arith.constant 0 : index
    %41 = vector.load %arg7[%c0_21, %c0_22, %c0_23] : memref<16x2x128xbf16, #tpu.memory_space<vmem>>, vector<1x2x128xbf16>
    %42 = vector.shape_cast %41 : vector<1x2x128xbf16> to vector<2x128xbf16>
    %43 = vector.shape_cast %40 : vector<2x128xbf16> to vector<1x2x128xbf16>
    tpu.vector_store %arg7[%c0_21, %c0_22, %c0_23], %43 {strides = array<i32>} : memref<16x2x128xbf16, #tpu.memory_space<vmem>>, vector<1x2x128xbf16>,
    %c1 = arith.constant 1 : index
    %c0_24 = arith.constant 0 : index
    %c0_25 = arith.constant 0 : index
    %44 = vector.load %arg9[%c1, %c0_24, %c0_25] : memref<16x2x384xf32, #tpu.memory_space<vmem>>, vector<1x2x384xf32>
    %45 = vector.shape_cast %44 : vector<1x2x384xf32> to vector<2x384xf32>
    %46 = arith.truncf %39 : vector<2x128xf32> to vector<2x128xbf16>
    %cst_26 = arith.constant dense<0.000000e+00> : vector<2x384xf32>
    %47 = tpu.matmul %46, %13, %cst_26 {dimension_numbers = #tpu.dot_dimension_numbers<[1], [0], [0], [1], [0, 0, 1, 1], [], []>} : vector<2x128xbf16>, vector<128x384xbf16>, vector<2x384xf32> -> vector<2x384xf32>
    %48 = vector.extract_strided_slice %45 {offsets = [0, 0], sizes = [2, 256], strides = [1, 1]} : vector<2x384xf32> to vector<2x256xf32>
    %49 = vector.extract_strided_slice %47 {offsets = [0, 0], sizes = [2, 256], strides = [1, 1]} : vector<2x384xf32> to vector<2x256xf32>
    %50 = arith.addf %48, %49 : vector<2x256xf32>
    %51 = arith.negf %50 : vector<2x256xf32>
    %52 = math.exp %51 : vector<2x256xf32>
    %cst_27 = arith.constant 1.000000e+00 : f32
    %53 = vector.broadcast %cst_27 : f32 to vector<2x256xf32>
    %54 = arith.addf %53, %52 : vector<2x256xf32>
    %55 = arith.divf %53, %54 : vector<2x256xf32>
    %56 = vector.extract_strided_slice %45 {offsets = [0, 256], sizes = [2, 128], strides = [1, 1]} : vector<2x384xf32> to vector<2x128xf32>
    %57 = vector.extract_strided_slice %55 {offsets = [0, 0], sizes = [2, 128], strides = [1, 1]} : vector<2x256xf32> to vector<2x128xf32>
    %58 = vector.extract_strided_slice %47 {offsets = [0, 256], sizes = [2, 128], strides = [1, 1]} : vector<2x384xf32> to vector<2x128xf32>
    %59 = vector.broadcast %14 : vector<1x128xf32> to vector<2x128xf32>
    %60 = arith.addf %58, %59 : vector<2x128xf32>
    %61 = arith.mulf %57, %60 : vector<2x128xf32>
    %62 = arith.addf %56, %61 : vector<2x128xf32>
    %63 = math.tanh %62 : vector<2x128xf32>
    %64 = vector.extract_strided_slice %55 {offsets = [0, 128], sizes = [2, 128], strides = [1, 1]} : vector<2x256xf32> to vector<2x128xf32>
    %65 = arith.subf %39, %63 : vector<2x128xf32>
    %66 = arith.mulf %64, %65 : vector<2x128xf32>
    %67 = arith.addf %63, %66 : vector<2x128xf32>
    %68 = arith.truncf %67 : vector<2x128xf32> to vector<2x128xbf16>
    %c1_28 = arith.constant 1 : index
    %c0_29 = arith.constant 0 : index
    %c0_30 = arith.constant 0 : index
    %69 = vector.load %arg7[%c1_28, %c0_29, %c0_30] : memref<16x2x128xbf16, #tpu.memory_space<vmem>>, vector<1x2x128xbf16>
    %70 = vector.shape_cast %69 : vector<1x2x128xbf16> to vector<2x128xbf16>
    %71 = vector.shape_cast %68 : vector<2x128xbf16> to vector<1x2x128xbf16>
    tpu.vector_store %arg7[%c1_28, %c0_29, %c0_30], %71 {strides = array<i32>} : memref<16x2x128xbf16, #tpu.memory_space<vmem>>, vector<1x2x128xbf16>,
    %c2 = arith.constant 2 : index
    %c0_31 = arith.constant 0 : index
    %c0_32 = arith.constant 0 : index
    %72 = vector.load %arg9[%c2, %c0_31, %c0_32] : memref<16x2x384xf32, #tpu.memory_space<vmem>>, vector<1x2x384xf32>
    %73 = vector.shape_cast %72 : vector<1x2x384xf32> to vector<2x384xf32>
    %74 = arith.truncf %67 : vector<2x128xf32> to vector<2x128xbf16>
    %cst_33 = arith.constant dense<0.000000e+00> : vector<2x384xf32>
    %75 = tpu.matmul %74, %13, %cst_33 {dimension_numbers = #tpu.dot_dimension_numbers<[1], [0], [0], [1], [0, 0, 1, 1], [], []>} : vector<2x128xbf16>, vector<128x384xbf16>, vector<2x384xf32> -> vector<2x384xf32>
    %76 = vector.extract_strided_slice %73 {offsets = [0, 0], sizes = [2, 256], strides = [1, 1]} : vector<2x384xf32> to vector<2x256xf32>
    %77 = vector.extract_strided_slice %75 {offsets = [0, 0], sizes = [2, 256], strides = [1, 1]} : vector<2x384xf32> to vector<2x256xf32>
    %78 = arith.addf %76, %77 : vector<2x256xf32>
    %79 = arith.negf %78 : vector<2x256xf32>
    %80 = math.exp %79 : vector<2x256xf32>
    %cst_34 = arith.constant 1.000000e+00 : f32
    %81 = vector.broadcast %cst_34 : f32 to vector<2x256xf32>
    %82 = arith.addf %81, %80 : vector<2x256xf32>
    %83 = arith.divf %81, %82 : vector<2x256xf32>
    %84 = vector.extract_strided_slice %73 {offsets = [0, 256], sizes = [2, 128], strides = [1, 1]} : vector<2x384xf32> to vector<2x128xf32>
    %85 = vector.extract_strided_slice %83 {offsets = [0, 0], sizes = [2, 128], strides = [1, 1]} : vector<2x256xf32> to vector<2x128xf32>
    %86 = vector.extract_strided_slice %75 {offsets = [0, 256], sizes = [2, 128], strides = [1, 1]} : vector<2x384xf32> to vector<2x128xf32>
    %87 = vector.broadcast %14 : vector<1x128xf32> to vector<2x128xf32>
    %88 = arith.addf %86, %87 : vector<2x128xf32>
    %89 = arith.mulf %85, %88 : vector<2x128xf32>
    %90 = arith.addf %84, %89 : vector<2x128xf32>
    %91 = math.tanh %90 : vector<2x128xf32>
    %92 = vector.extract_strided_slice %83 {offsets = [0, 128], sizes = [2, 128], strides = [1, 1]} : vector<2x256xf32> to vector<2x128xf32>
    %93 = arith.subf %67, %91 : vector<2x128xf32>
    %94 = arith.mulf %92, %93 : vector<2x128xf32>
    %95 = arith.addf %91, %94 : vector<2x128xf32>
    %96 = arith.truncf %95 : vector<2x128xf32> to vector<2x128xbf16>
    %c2_35 = arith.constant 2 : index
    %c0_36 = arith.constant 0 : index
    %c0_37 = arith.constant 0 : index
    %97 = vector.load %arg7[%c2_35, %c0_36, %c0_37] : memref<16x2x128xbf16, #tpu.memory_space<vmem>>, vector<1x2x128xbf16>
    %98 = vector.shape_cast %97 : vector<1x2x128xbf16> to vector<2x128xbf16>
    %99 = vector.shape_cast %96 : vector<2x128xbf16> to vector<1x2x128xbf16>
    tpu.vector_store %arg7[%c2_35, %c0_36, %c0_37], %99 {strides = array<i32>} : memref<16x2x128xbf16, #tpu.memory_space<vmem>>, vector<1x2x128xbf16>,
    %c3 = arith.constant 3 : index
    %c0_38 = arith.constant 0 : index
    %c0_39 = arith.constant 0 : index
    %100 = vector.load %arg9[%c3, %c0_38, %c0_39] : memref<16x2x384xf32, #tpu.memory_space<vmem>>, vector<1x2x384xf32>
    %101 = vector.shape_cast %100 : vector<1x2x384xf32> to vector<2x384xf32>
    %102 = arith.truncf %95 : vector<2x128xf32> to vector<2x128xbf16>
    %cst_40 = arith.constant dense<0.000000e+00> : vector<2x384xf32>
    %103 = tpu.matmul %102, %13, %cst_40 {dimension_numbers = #tpu.dot_dimension_numbers<[1], [0], [0], [1], [0, 0, 1, 1], [], []>} : vector<2x128xbf16>, vector<128x384xbf16>, vector<2x384xf32> -> vector<2x384xf32>
    %104 = vector.extract_strided_slice %101 {offsets = [0, 0], sizes = [2, 256], strides = [1, 1]} : vector<2x384xf32> to vector<2x256xf32>
    %105 = vector.extract_strided_slice %103 {offsets = [0, 0], sizes = [2, 256], strides = [1, 1]} : vector<2x384xf32> to vector<2x256xf32>
    %106 = arith.addf %104, %105 : vector<2x256xf32>
    %107 = arith.negf %106 : vector<2x256xf32>
    %108 = math.exp %107 : vector<2x256xf32>
    %cst_41 = arith.constant 1.000000e+00 : f32
    %109 = vector.broadcast %cst_41 : f32 to vector<2x256xf32>
    %110 = arith.addf %109, %108 : vector<2x256xf32>
    %111 = arith.divf %109, %110 : vector<2x256xf32>
    %112 = vector.extract_strided_slice %101 {offsets = [0, 256], sizes = [2, 128], strides = [1, 1]} : vector<2x384xf32> to vector<2x128xf32>
    %113 = vector.extract_strided_slice %111 {offsets = [0, 0], sizes = [2, 128], strides = [1, 1]} : vector<2x256xf32> to vector<2x128xf32>
    %114 = vector.extract_strided_slice %103 {offsets = [0, 256], sizes = [2, 128], strides = [1, 1]} : vector<2x384xf32> to vector<2x128xf32>
    %115 = vector.broadcast %14 : vector<1x128xf32> to vector<2x128xf32>
    %116 = arith.addf %114, %115 : vector<2x128xf32>
    %117 = arith.mulf %113, %116 : vector<2x128xf32>
    %118 = arith.addf %112, %117 : vector<2x128xf32>
    %119 = math.tanh %118 : vector<2x128xf32>
    %120 = vector.extract_strided_slice %111 {offsets = [0, 128], sizes = [2, 128], strides = [1, 1]} : vector<2x256xf32> to vector<2x128xf32>
    %121 = arith.subf %95, %119 : vector<2x128xf32>
    %122 = arith.mulf %120, %121 : vector<2x128xf32>
    %123 = arith.addf %119, %122 : vector<2x128xf32>
    %124 = arith.truncf %123 : vector<2x128xf32> to vector<2x128xbf16>
    %c3_42 = arith.constant 3 : index
    %c0_43 = arith.constant 0 : index
    %c0_44 = arith.constant 0 : index
    %125 = vector.load %arg7[%c3_42, %c0_43, %c0_44] : memref<16x2x128xbf16, #tpu.memory_space<vmem>>, vector<1x2x128xbf16>
    %126 = vector.shape_cast %125 : vector<1x2x128xbf16> to vector<2x128xbf16>
    %127 = vector.shape_cast %124 : vector<2x128xbf16> to vector<1x2x128xbf16>
    tpu.vector_store %arg7[%c3_42, %c0_43, %c0_44], %127 {strides = array<i32>} : memref<16x2x128xbf16, #tpu.memory_space<vmem>>, vector<1x2x128xbf16>,
    %c4 = arith.constant 4 : index
    %c0_45 = arith.constant 0 : index
    %c0_46 = arith.constant 0 : index
    %128 = vector.load %arg9[%c4, %c0_45, %c0_46] : memref<16x2x384xf32, #tpu.memory_space<vmem>>, vector<1x2x384xf32>
    %129 = vector.shape_cast %128 : vector<1x2x384xf32> to vector<2x384xf32>
    %130 = arith.truncf %123 : vector<2x128xf32> to vector<2x128xbf16>
    %cst_47 = arith.constant dense<0.000000e+00> : vector<2x384xf32>
    %131 = tpu.matmul %130, %13, %cst_47 {dimension_numbers = #tpu.dot_dimension_numbers<[1], [0], [0], [1], [0, 0, 1, 1], [], []>} : vector<2x128xbf16>, vector<128x384xbf16>, vector<2x384xf32> -> vector<2x384xf32>
    %132 = vector.extract_strided_slice %129 {offsets = [0, 0], sizes = [2, 256], strides = [1, 1]} : vector<2x384xf32> to vector<2x256xf32>
    %133 = vector.extract_strided_slice %131 {offsets = [0, 0], sizes = [2, 256], strides = [1, 1]} : vector<2x384xf32> to vector<2x256xf32>
    %134 = arith.addf %132, %133 : vector<2x256xf32>
    %135 = arith.negf %134 : vector<2x256xf32>
    %136 = math.exp %135 : vector<2x256xf32>
    %cst_48 = arith.constant 1.000000e+00 : f32
    %137 = vector.broadcast %cst_48 : f32 to vector<2x256xf32>
    %138 = arith.addf %137, %136 : vector<2x256xf32>
    %139 = arith.divf %137, %138 : vector<2x256xf32>
    %140 = vector.extract_strided_slice %129 {offsets = [0, 256], sizes = [2, 128], strides = [1, 1]} : vector<2x384xf32> to vector<2x128xf32>
    %141 = vector.extract_strided_slice %139 {offsets = [0, 0], sizes = [2, 128], strides = [1, 1]} : vector<2x256xf32> to vector<2x128xf32>
    %142 = vector.extract_strided_slice %131 {offsets = [0, 256], sizes = [2, 128], strides = [1, 1]} : vector<2x384xf32> to vector<2x128xf32>
    %143 = vector.broadcast %14 : vector<1x128xf32> to vector<2x128xf32>
    %144 = arith.addf %142, %143 : vector<2x128xf32>
    %145 = arith.mulf %141, %144 : vector<2x128xf32>
    %146 = arith.addf %140, %145 : vector<2x128xf32>
    %147 = math.tanh %146 : vector<2x128xf32>
    %148 = vector.extract_strided_slice %139 {offsets = [0, 128], sizes = [2, 128], strides = [1, 1]} : vector<2x256xf32> to vector<2x128xf32>
    %149 = arith.subf %123, %147 : vector<2x128xf32>
    %150 = arith.mulf %148, %149 : vector<2x128xf32>
    %151 = arith.addf %147, %150 : vector<2x128xf32>
    %152 = arith.truncf %151 : vector<2x128xf32> to vector<2x128xbf16>
    %c4_49 = arith.constant 4 : index
    %c0_50 = arith.constant 0 : index
    %c0_51 = arith.constant 0 : index
    %153 = vector.load %arg7[%c4_49, %c0_50, %c0_51] : memref<16x2x128xbf16, #tpu.memory_space<vmem>>, vector<1x2x128xbf16>
    %154 = vector.shape_cast %153 : vector<1x2x128xbf16> to vector<2x128xbf16>
    %155 = vector.shape_cast %152 : vector<2x128xbf16> to vector<1x2x128xbf16>
    tpu.vector_store %arg7[%c4_49, %c0_50, %c0_51], %155 {strides = array<i32>} : memref<16x2x128xbf16, #tpu.memory_space<vmem>>, vector<1x2x128xbf16>,
    %c5 = arith.constant 5 : index
    %c0_52 = arith.constant 0 : index
    %c0_53 = arith.constant 0 : index
    %156 = vector.load %arg9[%c5, %c0_52, %c0_53] : memref<16x2x384xf32, #tpu.memory_space<vmem>>, vector<1x2x384xf32>
    %157 = vector.shape_cast %156 : vector<1x2x384xf32> to vector<2x384xf32>
    %158 = arith.truncf %151 : vector<2x128xf32> to vector<2x128xbf16>
    %cst_54 = arith.constant dense<0.000000e+00> : vector<2x384xf32>
    %159 = tpu.matmul %158, %13, %cst_54 {dimension_numbers = #tpu.dot_dimension_numbers<[1], [0], [0], [1], [0, 0, 1, 1], [], []>} : vector<2x128xbf16>, vector<128x384xbf16>, vector<2x384xf32> -> vector<2x384xf32>
    %160 = vector.extract_strided_slice %157 {offsets = [0, 0], sizes = [2, 256], strides = [1, 1]} : vector<2x384xf32> to vector<2x256xf32>
    %161 = vector.extract_strided_slice %159 {offsets = [0, 0], sizes = [2, 256], strides = [1, 1]} : vector<2x384xf32> to vector<2x256xf32>
    %162 = arith.addf %160, %161 : vector<2x256xf32>
    %163 = arith.negf %162 : vector<2x256xf32>
    %164 = math.exp %163 : vector<2x256xf32>
    %cst_55 = arith.constant 1.000000e+00 : f32
    %165 = vector.broadcast %cst_55 : f32 to vector<2x256xf32>
    %166 = arith.addf %165, %164 : vector<2x256xf32>
    %167 = arith.divf %165, %166 : vector<2x256xf32>
    %168 = vector.extract_strided_slice %157 {offsets = [0, 256], sizes = [2, 128], strides = [1, 1]} : vector<2x384xf32> to vector<2x128xf32>
    %169 = vector.extract_strided_slice %167 {offsets = [0, 0], sizes = [2, 128], strides = [1, 1]} : vector<2x256xf32> to vector<2x128xf32>
    %170 = vector.extract_strided_slice %159 {offsets = [0, 256], sizes = [2, 128], strides = [1, 1]} : vector<2x384xf32> to vector<2x128xf32>
    %171 = vector.broadcast %14 : vector<1x128xf32> to vector<2x128xf32>
    %172 = arith.addf %170, %171 : vector<2x128xf32>
    %173 = arith.mulf %169, %172 : vector<2x128xf32>
    %174 = arith.addf %168, %173 : vector<2x128xf32>
    %175 = math.tanh %174 : vector<2x128xf32>
    %176 = vector.extract_strided_slice %167 {offsets = [0, 128], sizes = [2, 128], strides = [1, 1]} : vector<2x256xf32> to vector<2x128xf32>
    %177 = arith.subf %151, %175 : vector<2x128xf32>
    %178 = arith.mulf %176, %177 : vector<2x128xf32>
    %179 = arith.addf %175, %178 : vector<2x128xf32>
    %180 = arith.truncf %179 : vector<2x128xf32> to vector<2x128xbf16>
    %c5_56 = arith.constant 5 : index
    %c0_57 = arith.constant 0 : index
    %c0_58 = arith.constant 0 : index
    %181 = vector.load %arg7[%c5_56, %c0_57, %c0_58] : memref<16x2x128xbf16, #tpu.memory_space<vmem>>, vector<1x2x128xbf16>
    %182 = vector.shape_cast %181 : vector<1x2x128xbf16> to vector<2x128xbf16>
    %183 = vector.shape_cast %180 : vector<2x128xbf16> to vector<1x2x128xbf16>
    tpu.vector_store %arg7[%c5_56, %c0_57, %c0_58], %183 {strides = array<i32>} : memref<16x2x128xbf16, #tpu.memory_space<vmem>>, vector<1x2x128xbf16>,
    %c6 = arith.constant 6 : index
    %c0_59 = arith.constant 0 : index
    %c0_60 = arith.constant 0 : index
    %184 = vector.load %arg9[%c6, %c0_59, %c0_60] : memref<16x2x384xf32, #tpu.memory_space<vmem>>, vector<1x2x384xf32>
    %185 = vector.shape_cast %184 : vector<1x2x384xf32> to vector<2x384xf32>
    %186 = arith.truncf %179 : vector<2x128xf32> to vector<2x128xbf16>
    %cst_61 = arith.constant dense<0.000000e+00> : vector<2x384xf32>
    %187 = tpu.matmul %186, %13, %cst_61 {dimension_numbers = #tpu.dot_dimension_numbers<[1], [0], [0], [1], [0, 0, 1, 1], [], []>} : vector<2x128xbf16>, vector<128x384xbf16>, vector<2x384xf32> -> vector<2x384xf32>
    %188 = vector.extract_strided_slice %185 {offsets = [0, 0], sizes = [2, 256], strides = [1, 1]} : vector<2x384xf32> to vector<2x256xf32>
    %189 = vector.extract_strided_slice %187 {offsets = [0, 0], sizes = [2, 256], strides = [1, 1]} : vector<2x384xf32> to vector<2x256xf32>
    %190 = arith.addf %188, %189 : vector<2x256xf32>
    %191 = arith.negf %190 : vector<2x256xf32>
    %192 = math.exp %191 : vector<2x256xf32>
    %cst_62 = arith.constant 1.000000e+00 : f32
    %193 = vector.broadcast %cst_62 : f32 to vector<2x256xf32>
    %194 = arith.addf %193, %192 : vector<2x256xf32>
    %195 = arith.divf %193, %194 : vector<2x256xf32>
    %196 = vector.extract_strided_slice %185 {offsets = [0, 256], sizes = [2, 128], strides = [1, 1]} : vector<2x384xf32> to vector<2x128xf32>
    %197 = vector.extract_strided_slice %195 {offsets = [0, 0], sizes = [2, 128], strides = [1, 1]} : vector<2x256xf32> to vector<2x128xf32>
    %198 = vector.extract_strided_slice %187 {offsets = [0, 256], sizes = [2, 128], strides = [1, 1]} : vector<2x384xf32> to vector<2x128xf32>
    %199 = vector.broadcast %14 : vector<1x128xf32> to vector<2x128xf32>
    %200 = arith.addf %198, %199 : vector<2x128xf32>
    %201 = arith.mulf %197, %200 : vector<2x128xf32>
    %202 = arith.addf %196, %201 : vector<2x128xf32>
    %203 = math.tanh %202 : vector<2x128xf32>
    %204 = vector.extract_strided_slice %195 {offsets = [0, 128], sizes = [2, 128], strides = [1, 1]} : vector<2x256xf32> to vector<2x128xf32>
    %205 = arith.subf %179, %203 : vector<2x128xf32>
    %206 = arith.mulf %204, %205 : vector<2x128xf32>
    %207 = arith.addf %203, %206 : vector<2x128xf32>
    %208 = arith.truncf %207 : vector<2x128xf32> to vector<2x128xbf16>
    %c6_63 = arith.constant 6 : index
    %c0_64 = arith.constant 0 : index
    %c0_65 = arith.constant 0 : index
    %209 = vector.load %arg7[%c6_63, %c0_64, %c0_65] : memref<16x2x128xbf16, #tpu.memory_space<vmem>>, vector<1x2x128xbf16>
    %210 = vector.shape_cast %209 : vector<1x2x128xbf16> to vector<2x128xbf16>
    %211 = vector.shape_cast %208 : vector<2x128xbf16> to vector<1x2x128xbf16>
    tpu.vector_store %arg7[%c6_63, %c0_64, %c0_65], %211 {strides = array<i32>} : memref<16x2x128xbf16, #tpu.memory_space<vmem>>, vector<1x2x128xbf16>,
    %c7 = arith.constant 7 : index
    %c0_66 = arith.constant 0 : index
    %c0_67 = arith.constant 0 : index
    %212 = vector.load %arg9[%c7, %c0_66, %c0_67] : memref<16x2x384xf32, #tpu.memory_space<vmem>>, vector<1x2x384xf32>
    %213 = vector.shape_cast %212 : vector<1x2x384xf32> to vector<2x384xf32>
    %214 = arith.truncf %207 : vector<2x128xf32> to vector<2x128xbf16>
    %cst_68 = arith.constant dense<0.000000e+00> : vector<2x384xf32>
    %215 = tpu.matmul %214, %13, %cst_68 {dimension_numbers = #tpu.dot_dimension_numbers<[1], [0], [0], [1], [0, 0, 1, 1], [], []>} : vector<2x128xbf16>, vector<128x384xbf16>, vector<2x384xf32> -> vector<2x384xf32>
    %216 = vector.extract_strided_slice %213 {offsets = [0, 0], sizes = [2, 256], strides = [1, 1]} : vector<2x384xf32> to vector<2x256xf32>
    %217 = vector.extract_strided_slice %215 {offsets = [0, 0], sizes = [2, 256], strides = [1, 1]} : vector<2x384xf32> to vector<2x256xf32>
    %218 = arith.addf %216, %217 : vector<2x256xf32>
    %219 = arith.negf %218 : vector<2x256xf32>
    %220 = math.exp %219 : vector<2x256xf32>
    %cst_69 = arith.constant 1.000000e+00 : f32
    %221 = vector.broadcast %cst_69 : f32 to vector<2x256xf32>
    %222 = arith.addf %221, %220 : vector<2x256xf32>
    %223 = arith.divf %221, %222 : vector<2x256xf32>
    %224 = vector.extract_strided_slice %213 {offsets = [0, 256], sizes = [2, 128], strides = [1, 1]} : vector<2x384xf32> to vector<2x128xf32>
    %225 = vector.extract_strided_slice %223 {offsets = [0, 0], sizes = [2, 128], strides = [1, 1]} : vector<2x256xf32> to vector<2x128xf32>
    %226 = vector.extract_strided_slice %215 {offsets = [0, 256], sizes = [2, 128], strides = [1, 1]} : vector<2x384xf32> to vector<2x128xf32>
    %227 = vector.broadcast %14 : vector<1x128xf32> to vector<2x128xf32>
    %228 = arith.addf %226, %227 : vector<2x128xf32>
    %229 = arith.mulf %225, %228 : vector<2x128xf32>
    %230 = arith.addf %224, %229 : vector<2x128xf32>
    %231 = math.tanh %230 : vector<2x128xf32>
    %232 = vector.extract_strided_slice %223 {offsets = [0, 128], sizes = [2, 128], strides = [1, 1]} : vector<2x256xf32> to vector<2x128xf32>
    %233 = arith.subf %207, %231 : vector<2x128xf32>
    %234 = arith.mulf %232, %233 : vector<2x128xf32>
    %235 = arith.addf %231, %234 : vector<2x128xf32>
    %236 = arith.truncf %235 : vector<2x128xf32> to vector<2x128xbf16>
    %c7_70 = arith.constant 7 : index
    %c0_71 = arith.constant 0 : index
    %c0_72 = arith.constant 0 : index
    %237 = vector.load %arg7[%c7_70, %c0_71, %c0_72] : memref<16x2x128xbf16, #tpu.memory_space<vmem>>, vector<1x2x128xbf16>
    %238 = vector.shape_cast %237 : vector<1x2x128xbf16> to vector<2x128xbf16>
    %239 = vector.shape_cast %236 : vector<2x128xbf16> to vector<1x2x128xbf16>
    tpu.vector_store %arg7[%c7_70, %c0_71, %c0_72], %239 {strides = array<i32>} : memref<16x2x128xbf16, #tpu.memory_space<vmem>>, vector<1x2x128xbf16>,
    %c8 = arith.constant 8 : index
    %c0_73 = arith.constant 0 : index
    %c0_74 = arith.constant 0 : index
    %240 = vector.load %arg9[%c8, %c0_73, %c0_74] : memref<16x2x384xf32, #tpu.memory_space<vmem>>, vector<1x2x384xf32>
    %241 = vector.shape_cast %240 : vector<1x2x384xf32> to vector<2x384xf32>
    %242 = arith.truncf %235 : vector<2x128xf32> to vector<2x128xbf16>
    %cst_75 = arith.constant dense<0.000000e+00> : vector<2x384xf32>
    %243 = tpu.matmul %242, %13, %cst_75 {dimension_numbers = #tpu.dot_dimension_numbers<[1], [0], [0], [1], [0, 0, 1, 1], [], []>} : vector<2x128xbf16>, vector<128x384xbf16>, vector<2x384xf32> -> vector<2x384xf32>
    %244 = vector.extract_strided_slice %241 {offsets = [0, 0], sizes = [2, 256], strides = [1, 1]} : vector<2x384xf32> to vector<2x256xf32>
    %245 = vector.extract_strided_slice %243 {offsets = [0, 0], sizes = [2, 256], strides = [1, 1]} : vector<2x384xf32> to vector<2x256xf32>
    %246 = arith.addf %244, %245 : vector<2x256xf32>
    %247 = arith.negf %246 : vector<2x256xf32>
    %248 = math.exp %247 : vector<2x256xf32>
    %cst_76 = arith.constant 1.000000e+00 : f32
    %249 = vector.broadcast %cst_76 : f32 to vector<2x256xf32>
    %250 = arith.addf %249, %248 : vector<2x256xf32>
    %251 = arith.divf %249, %250 : vector<2x256xf32>
    %252 = vector.extract_strided_slice %241 {offsets = [0, 256], sizes = [2, 128], strides = [1, 1]} : vector<2x384xf32> to vector<2x128xf32>
    %253 = vector.extract_strided_slice %251 {offsets = [0, 0], sizes = [2, 128], strides = [1, 1]} : vector<2x256xf32> to vector<2x128xf32>
    %254 = vector.extract_strided_slice %243 {offsets = [0, 256], sizes = [2, 128], strides = [1, 1]} : vector<2x384xf32> to vector<2x128xf32>
    %255 = vector.broadcast %14 : vector<1x128xf32> to vector<2x128xf32>
    %256 = arith.addf %254, %255 : vector<2x128xf32>
    %257 = arith.mulf %253, %256 : vector<2x128xf32>
    %258 = arith.addf %252, %257 : vector<2x128xf32>
    %259 = math.tanh %258 : vector<2x128xf32>
    %260 = vector.extract_strided_slice %251 {offsets = [0, 128], sizes = [2, 128], strides = [1, 1]} : vector<2x256xf32> to vector<2x128xf32>
    %261 = arith.subf %235, %259 : vector<2x128xf32>
    %262 = arith.mulf %260, %261 : vector<2x128xf32>
    %263 = arith.addf %259, %262 : vector<2x128xf32>
    %264 = arith.truncf %263 : vector<2x128xf32> to vector<2x128xbf16>
    %c8_77 = arith.constant 8 : index
    %c0_78 = arith.constant 0 : index
    %c0_79 = arith.constant 0 : index
    %265 = vector.load %arg7[%c8_77, %c0_78, %c0_79] : memref<16x2x128xbf16, #tpu.memory_space<vmem>>, vector<1x2x128xbf16>
    %266 = vector.shape_cast %265 : vector<1x2x128xbf16> to vector<2x128xbf16>
    %267 = vector.shape_cast %264 : vector<2x128xbf16> to vector<1x2x128xbf16>
    tpu.vector_store %arg7[%c8_77, %c0_78, %c0_79], %267 {strides = array<i32>} : memref<16x2x128xbf16, #tpu.memory_space<vmem>>, vector<1x2x128xbf16>,
    %c9 = arith.constant 9 : index
    %c0_80 = arith.constant 0 : index
    %c0_81 = arith.constant 0 : index
    %268 = vector.load %arg9[%c9, %c0_80, %c0_81] : memref<16x2x384xf32, #tpu.memory_space<vmem>>, vector<1x2x384xf32>
    %269 = vector.shape_cast %268 : vector<1x2x384xf32> to vector<2x384xf32>
    %270 = arith.truncf %263 : vector<2x128xf32> to vector<2x128xbf16>
    %cst_82 = arith.constant dense<0.000000e+00> : vector<2x384xf32>
    %271 = tpu.matmul %270, %13, %cst_82 {dimension_numbers = #tpu.dot_dimension_numbers<[1], [0], [0], [1], [0, 0, 1, 1], [], []>} : vector<2x128xbf16>, vector<128x384xbf16>, vector<2x384xf32> -> vector<2x384xf32>
    %272 = vector.extract_strided_slice %269 {offsets = [0, 0], sizes = [2, 256], strides = [1, 1]} : vector<2x384xf32> to vector<2x256xf32>
    %273 = vector.extract_strided_slice %271 {offsets = [0, 0], sizes = [2, 256], strides = [1, 1]} : vector<2x384xf32> to vector<2x256xf32>
    %274 = arith.addf %272, %273 : vector<2x256xf32>
    %275 = arith.negf %274 : vector<2x256xf32>
    %276 = math.exp %275 : vector<2x256xf32>
    %cst_83 = arith.constant 1.000000e+00 : f32
    %277 = vector.broadcast %cst_83 : f32 to vector<2x256xf32>
    %278 = arith.addf %277, %276 : vector<2x256xf32>
    %279 = arith.divf %277, %278 : vector<2x256xf32>
    %280 = vector.extract_strided_slice %269 {offsets = [0, 256], sizes = [2, 128], strides = [1, 1]} : vector<2x384xf32> to vector<2x128xf32>
    %281 = vector.extract_strided_slice %279 {offsets = [0, 0], sizes = [2, 128], strides = [1, 1]} : vector<2x256xf32> to vector<2x128xf32>
    %282 = vector.extract_strided_slice %271 {offsets = [0, 256], sizes = [2, 128], strides = [1, 1]} : vector<2x384xf32> to vector<2x128xf32>
    %283 = vector.broadcast %14 : vector<1x128xf32> to vector<2x128xf32>
    %284 = arith.addf %282, %283 : vector<2x128xf32>
    %285 = arith.mulf %281, %284 : vector<2x128xf32>
    %286 = arith.addf %280, %285 : vector<2x128xf32>
    %287 = math.tanh %286 : vector<2x128xf32>
    %288 = vector.extract_strided_slice %279 {offsets = [0, 128], sizes = [2, 128], strides = [1, 1]} : vector<2x256xf32> to vector<2x128xf32>
    %289 = arith.subf %263, %287 : vector<2x128xf32>
    %290 = arith.mulf %288, %289 : vector<2x128xf32>
    %291 = arith.addf %287, %290 : vector<2x128xf32>
    %292 = arith.truncf %291 : vector<2x128xf32> to vector<2x128xbf16>
    %c9_84 = arith.constant 9 : index
    %c0_85 = arith.constant 0 : index
    %c0_86 = arith.constant 0 : index
    %293 = vector.load %arg7[%c9_84, %c0_85, %c0_86] : memref<16x2x128xbf16, #tpu.memory_space<vmem>>, vector<1x2x128xbf16>
    %294 = vector.shape_cast %293 : vector<1x2x128xbf16> to vector<2x128xbf16>
    %295 = vector.shape_cast %292 : vector<2x128xbf16> to vector<1x2x128xbf16>
    tpu.vector_store %arg7[%c9_84, %c0_85, %c0_86], %295 {strides = array<i32>} : memref<16x2x128xbf16, #tpu.memory_space<vmem>>, vector<1x2x128xbf16>,
    %c10 = arith.constant 10 : index
    %c0_87 = arith.constant 0 : index
    %c0_88 = arith.constant 0 : index
    %296 = vector.load %arg9[%c10, %c0_87, %c0_88] : memref<16x2x384xf32, #tpu.memory_space<vmem>>, vector<1x2x384xf32>
    %297 = vector.shape_cast %296 : vector<1x2x384xf32> to vector<2x384xf32>
    %298 = arith.truncf %291 : vector<2x128xf32> to vector<2x128xbf16>
    %cst_89 = arith.constant dense<0.000000e+00> : vector<2x384xf32>
    %299 = tpu.matmul %298, %13, %cst_89 {dimension_numbers = #tpu.dot_dimension_numbers<[1], [0], [0], [1], [0, 0, 1, 1], [], []>} : vector<2x128xbf16>, vector<128x384xbf16>, vector<2x384xf32> -> vector<2x384xf32>
    %300 = vector.extract_strided_slice %297 {offsets = [0, 0], sizes = [2, 256], strides = [1, 1]} : vector<2x384xf32> to vector<2x256xf32>
    %301 = vector.extract_strided_slice %299 {offsets = [0, 0], sizes = [2, 256], strides = [1, 1]} : vector<2x384xf32> to vector<2x256xf32>
    %302 = arith.addf %300, %301 : vector<2x256xf32>
    %303 = arith.negf %302 : vector<2x256xf32>
    %304 = math.exp %303 : vector<2x256xf32>
    %cst_90 = arith.constant 1.000000e+00 : f32
    %305 = vector.broadcast %cst_90 : f32 to vector<2x256xf32>
    %306 = arith.addf %305, %304 : vector<2x256xf32>
    %307 = arith.divf %305, %306 : vector<2x256xf32>
    %308 = vector.extract_strided_slice %297 {offsets = [0, 256], sizes = [2, 128], strides = [1, 1]} : vector<2x384xf32> to vector<2x128xf32>
    %309 = vector.extract_strided_slice %307 {offsets = [0, 0], sizes = [2, 128], strides = [1, 1]} : vector<2x256xf32> to vector<2x128xf32>
    %310 = vector.extract_strided_slice %299 {offsets = [0, 256], sizes = [2, 128], strides = [1, 1]} : vector<2x384xf32> to vector<2x128xf32>
    %311 = vector.broadcast %14 : vector<1x128xf32> to vector<2x128xf32>
    %312 = arith.addf %310, %311 : vector<2x128xf32>
    %313 = arith.mulf %309, %312 : vector<2x128xf32>
    %314 = arith.addf %308, %313 : vector<2x128xf32>
    %315 = math.tanh %314 : vector<2x128xf32>
    %316 = vector.extract_strided_slice %307 {offsets = [0, 128], sizes = [2, 128], strides = [1, 1]} : vector<2x256xf32> to vector<2x128xf32>
    %317 = arith.subf %291, %315 : vector<2x128xf32>
    %318 = arith.mulf %316, %317 : vector<2x128xf32>
    %319 = arith.addf %315, %318 : vector<2x128xf32>
    %320 = arith.truncf %319 : vector<2x128xf32> to vector<2x128xbf16>
    %c10_91 = arith.constant 10 : index
    %c0_92 = arith.constant 0 : index
    %c0_93 = arith.constant 0 : index
    %321 = vector.load %arg7[%c10_91, %c0_92, %c0_93] : memref<16x2x128xbf16, #tpu.memory_space<vmem>>, vector<1x2x128xbf16>
    %322 = vector.shape_cast %321 : vector<1x2x128xbf16> to vector<2x128xbf16>
    %323 = vector.shape_cast %320 : vector<2x128xbf16> to vector<1x2x128xbf16>
    tpu.vector_store %arg7[%c10_91, %c0_92, %c0_93], %323 {strides = array<i32>} : memref<16x2x128xbf16, #tpu.memory_space<vmem>>, vector<1x2x128xbf16>,
    %c11 = arith.constant 11 : index
    %c0_94 = arith.constant 0 : index
    %c0_95 = arith.constant 0 : index
    %324 = vector.load %arg9[%c11, %c0_94, %c0_95] : memref<16x2x384xf32, #tpu.memory_space<vmem>>, vector<1x2x384xf32>
    %325 = vector.shape_cast %324 : vector<1x2x384xf32> to vector<2x384xf32>
    %326 = arith.truncf %319 : vector<2x128xf32> to vector<2x128xbf16>
    %cst_96 = arith.constant dense<0.000000e+00> : vector<2x384xf32>
    %327 = tpu.matmul %326, %13, %cst_96 {dimension_numbers = #tpu.dot_dimension_numbers<[1], [0], [0], [1], [0, 0, 1, 1], [], []>} : vector<2x128xbf16>, vector<128x384xbf16>, vector<2x384xf32> -> vector<2x384xf32>
    %328 = vector.extract_strided_slice %325 {offsets = [0, 0], sizes = [2, 256], strides = [1, 1]} : vector<2x384xf32> to vector<2x256xf32>
    %329 = vector.extract_strided_slice %327 {offsets = [0, 0], sizes = [2, 256], strides = [1, 1]} : vector<2x384xf32> to vector<2x256xf32>
    %330 = arith.addf %328, %329 : vector<2x256xf32>
    %331 = arith.negf %330 : vector<2x256xf32>
    %332 = math.exp %331 : vector<2x256xf32>
    %cst_97 = arith.constant 1.000000e+00 : f32
    %333 = vector.broadcast %cst_97 : f32 to vector<2x256xf32>
    %334 = arith.addf %333, %332 : vector<2x256xf32>
    %335 = arith.divf %333, %334 : vector<2x256xf32>
    %336 = vector.extract_strided_slice %325 {offsets = [0, 256], sizes = [2, 128], strides = [1, 1]} : vector<2x384xf32> to vector<2x128xf32>
    %337 = vector.extract_strided_slice %335 {offsets = [0, 0], sizes = [2, 128], strides = [1, 1]} : vector<2x256xf32> to vector<2x128xf32>
    %338 = vector.extract_strided_slice %327 {offsets = [0, 256], sizes = [2, 128], strides = [1, 1]} : vector<2x384xf32> to vector<2x128xf32>
    %339 = vector.broadcast %14 : vector<1x128xf32> to vector<2x128xf32>
    %340 = arith.addf %338, %339 : vector<2x128xf32>
    %341 = arith.mulf %337, %340 : vector<2x128xf32>
    %342 = arith.addf %336, %341 : vector<2x128xf32>
    %343 = math.tanh %342 : vector<2x128xf32>
    %344 = vector.extract_strided_slice %335 {offsets = [0, 128], sizes = [2, 128], strides = [1, 1]} : vector<2x256xf32> to vector<2x128xf32>
    %345 = arith.subf %319, %343 : vector<2x128xf32>
    %346 = arith.mulf %344, %345 : vector<2x128xf32>
    %347 = arith.addf %343, %346 : vector<2x128xf32>
    %348 = arith.truncf %347 : vector<2x128xf32> to vector<2x128xbf16>
    %c11_98 = arith.constant 11 : index
    %c0_99 = arith.constant 0 : index
    %c0_100 = arith.constant 0 : index
    %349 = vector.load %arg7[%c11_98, %c0_99, %c0_100] : memref<16x2x128xbf16, #tpu.memory_space<vmem>>, vector<1x2x128xbf16>
    %350 = vector.shape_cast %349 : vector<1x2x128xbf16> to vector<2x128xbf16>
    %351 = vector.shape_cast %348 : vector<2x128xbf16> to vector<1x2x128xbf16>
    tpu.vector_store %arg7[%c11_98, %c0_99, %c0_100], %351 {strides = array<i32>} : memref<16x2x128xbf16, #tpu.memory_space<vmem>>, vector<1x2x128xbf16>,
    %c12 = arith.constant 12 : index
    %c0_101 = arith.constant 0 : index
    %c0_102 = arith.constant 0 : index
    %352 = vector.load %arg9[%c12, %c0_101, %c0_102] : memref<16x2x384xf32, #tpu.memory_space<vmem>>, vector<1x2x384xf32>
    %353 = vector.shape_cast %352 : vector<1x2x384xf32> to vector<2x384xf32>
    %354 = arith.truncf %347 : vector<2x128xf32> to vector<2x128xbf16>
    %cst_103 = arith.constant dense<0.000000e+00> : vector<2x384xf32>
    %355 = tpu.matmul %354, %13, %cst_103 {dimension_numbers = #tpu.dot_dimension_numbers<[1], [0], [0], [1], [0, 0, 1, 1], [], []>} : vector<2x128xbf16>, vector<128x384xbf16>, vector<2x384xf32> -> vector<2x384xf32>
    %356 = vector.extract_strided_slice %353 {offsets = [0, 0], sizes = [2, 256], strides = [1, 1]} : vector<2x384xf32> to vector<2x256xf32>
    %357 = vector.extract_strided_slice %355 {offsets = [0, 0], sizes = [2, 256], strides = [1, 1]} : vector<2x384xf32> to vector<2x256xf32>
    %358 = arith.addf %356, %357 : vector<2x256xf32>
    %359 = arith.negf %358 : vector<2x256xf32>
    %360 = math.exp %359 : vector<2x256xf32>
    %cst_104 = arith.constant 1.000000e+00 : f32
    %361 = vector.broadcast %cst_104 : f32 to vector<2x256xf32>
    %362 = arith.addf %361, %360 : vector<2x256xf32>
    %363 = arith.divf %361, %362 : vector<2x256xf32>
    %364 = vector.extract_strided_slice %353 {offsets = [0, 256], sizes = [2, 128], strides = [1, 1]} : vector<2x384xf32> to vector<2x128xf32>
    %365 = vector.extract_strided_slice %363 {offsets = [0, 0], sizes = [2, 128], strides = [1, 1]} : vector<2x256xf32> to vector<2x128xf32>
    %366 = vector.extract_strided_slice %355 {offsets = [0, 256], sizes = [2, 128], strides = [1, 1]} : vector<2x384xf32> to vector<2x128xf32>
    %367 = vector.broadcast %14 : vector<1x128xf32> to vector<2x128xf32>
    %368 = arith.addf %366, %367 : vector<2x128xf32>
    %369 = arith.mulf %365, %368 : vector<2x128xf32>
    %370 = arith.addf %364, %369 : vector<2x128xf32>
    %371 = math.tanh %370 : vector<2x128xf32>
    %372 = vector.extract_strided_slice %363 {offsets = [0, 128], sizes = [2, 128], strides = [1, 1]} : vector<2x256xf32> to vector<2x128xf32>
    %373 = arith.subf %347, %371 : vector<2x128xf32>
    %374 = arith.mulf %372, %373 : vector<2x128xf32>
    %375 = arith.addf %371, %374 : vector<2x128xf32>
    %376 = arith.truncf %375 : vector<2x128xf32> to vector<2x128xbf16>
    %c12_105 = arith.constant 12 : index
    %c0_106 = arith.constant 0 : index
    %c0_107 = arith.constant 0 : index
    %377 = vector.load %arg7[%c12_105, %c0_106, %c0_107] : memref<16x2x128xbf16, #tpu.memory_space<vmem>>, vector<1x2x128xbf16>
    %378 = vector.shape_cast %377 : vector<1x2x128xbf16> to vector<2x128xbf16>
    %379 = vector.shape_cast %376 : vector<2x128xbf16> to vector<1x2x128xbf16>
    tpu.vector_store %arg7[%c12_105, %c0_106, %c0_107], %379 {strides = array<i32>} : memref<16x2x128xbf16, #tpu.memory_space<vmem>>, vector<1x2x128xbf16>,
    %c13 = arith.constant 13 : index
    %c0_108 = arith.constant 0 : index
    %c0_109 = arith.constant 0 : index
    %380 = vector.load %arg9[%c13, %c0_108, %c0_109] : memref<16x2x384xf32, #tpu.memory_space<vmem>>, vector<1x2x384xf32>
    %381 = vector.shape_cast %380 : vector<1x2x384xf32> to vector<2x384xf32>
    %382 = arith.truncf %375 : vector<2x128xf32> to vector<2x128xbf16>
    %cst_110 = arith.constant dense<0.000000e+00> : vector<2x384xf32>
    %383 = tpu.matmul %382, %13, %cst_110 {dimension_numbers = #tpu.dot_dimension_numbers<[1], [0], [0], [1], [0, 0, 1, 1], [], []>} : vector<2x128xbf16>, vector<128x384xbf16>, vector<2x384xf32> -> vector<2x384xf32>
    %384 = vector.extract_strided_slice %381 {offsets = [0, 0], sizes = [2, 256], strides = [1, 1]} : vector<2x384xf32> to vector<2x256xf32>
    %385 = vector.extract_strided_slice %383 {offsets = [0, 0], sizes = [2, 256], strides = [1, 1]} : vector<2x384xf32> to vector<2x256xf32>
    %386 = arith.addf %384, %385 : vector<2x256xf32>
    %387 = arith.negf %386 : vector<2x256xf32>
    %388 = math.exp %387 : vector<2x256xf32>
    %cst_111 = arith.constant 1.000000e+00 : f32
    %389 = vector.broadcast %cst_111 : f32 to vector<2x256xf32>
    %390 = arith.addf %389, %388 : vector<2x256xf32>
    %391 = arith.divf %389, %390 : vector<2x256xf32>
    %392 = vector.extract_strided_slice %381 {offsets = [0, 256], sizes = [2, 128], strides = [1, 1]} : vector<2x384xf32> to vector<2x128xf32>
    %393 = vector.extract_strided_slice %391 {offsets = [0, 0], sizes = [2, 128], strides = [1, 1]} : vector<2x256xf32> to vector<2x128xf32>
    %394 = vector.extract_strided_slice %383 {offsets = [0, 256], sizes = [2, 128], strides = [1, 1]} : vector<2x384xf32> to vector<2x128xf32>
    %395 = vector.broadcast %14 : vector<1x128xf32> to vector<2x128xf32>
    %396 = arith.addf %394, %395 : vector<2x128xf32>
    %397 = arith.mulf %393, %396 : vector<2x128xf32>
    %398 = arith.addf %392, %397 : vector<2x128xf32>
    %399 = math.tanh %398 : vector<2x128xf32>
    %400 = vector.extract_strided_slice %391 {offsets = [0, 128], sizes = [2, 128], strides = [1, 1]} : vector<2x256xf32> to vector<2x128xf32>
    %401 = arith.subf %375, %399 : vector<2x128xf32>
    %402 = arith.mulf %400, %401 : vector<2x128xf32>
    %403 = arith.addf %399, %402 : vector<2x128xf32>
    %404 = arith.truncf %403 : vector<2x128xf32> to vector<2x128xbf16>
    %c13_112 = arith.constant 13 : index
    %c0_113 = arith.constant 0 : index
    %c0_114 = arith.constant 0 : index
    %405 = vector.load %arg7[%c13_112, %c0_113, %c0_114] : memref<16x2x128xbf16, #tpu.memory_space<vmem>>, vector<1x2x128xbf16>
    %406 = vector.shape_cast %405 : vector<1x2x128xbf16> to vector<2x128xbf16>
    %407 = vector.shape_cast %404 : vector<2x128xbf16> to vector<1x2x128xbf16>
    tpu.vector_store %arg7[%c13_112, %c0_113, %c0_114], %407 {strides = array<i32>} : memref<16x2x128xbf16, #tpu.memory_space<vmem>>, vector<1x2x128xbf16>,
    %c14 = arith.constant 14 : index
    %c0_115 = arith.constant 0 : index
    %c0_116 = arith.constant 0 : index
    %408 = vector.load %arg9[%c14, %c0_115, %c0_116] : memref<16x2x384xf32, #tpu.memory_space<vmem>>, vector<1x2x384xf32>
    %409 = vector.shape_cast %408 : vector<1x2x384xf32> to vector<2x384xf32>
    %410 = arith.truncf %403 : vector<2x128xf32> to vector<2x128xbf16>
    %cst_117 = arith.constant dense<0.000000e+00> : vector<2x384xf32>
    %411 = tpu.matmul %410, %13, %cst_117 {dimension_numbers = #tpu.dot_dimension_numbers<[1], [0], [0], [1], [0, 0, 1, 1], [], []>} : vector<2x128xbf16>, vector<128x384xbf16>, vector<2x384xf32> -> vector<2x384xf32>
    %412 = vector.extract_strided_slice %409 {offsets = [0, 0], sizes = [2, 256], strides = [1, 1]} : vector<2x384xf32> to vector<2x256xf32>
    %413 = vector.extract_strided_slice %411 {offsets = [0, 0], sizes = [2, 256], strides = [1, 1]} : vector<2x384xf32> to vector<2x256xf32>
    %414 = arith.addf %412, %413 : vector<2x256xf32>
    %415 = arith.negf %414 : vector<2x256xf32>
    %416 = math.exp %415 : vector<2x256xf32>
    %cst_118 = arith.constant 1.000000e+00 : f32
    %417 = vector.broadcast %cst_118 : f32 to vector<2x256xf32>
    %418 = arith.addf %417, %416 : vector<2x256xf32>
    %419 = arith.divf %417, %418 : vector<2x256xf32>
    %420 = vector.extract_strided_slice %409 {offsets = [0, 256], sizes = [2, 128], strides = [1, 1]} : vector<2x384xf32> to vector<2x128xf32>
    %421 = vector.extract_strided_slice %419 {offsets = [0, 0], sizes = [2, 128], strides = [1, 1]} : vector<2x256xf32> to vector<2x128xf32>
    %422 = vector.extract_strided_slice %411 {offsets = [0, 256], sizes = [2, 128], strides = [1, 1]} : vector<2x384xf32> to vector<2x128xf32>
    %423 = vector.broadcast %14 : vector<1x128xf32> to vector<2x128xf32>
    %424 = arith.addf %422, %423 : vector<2x128xf32>
    %425 = arith.mulf %421, %424 : vector<2x128xf32>
    %426 = arith.addf %420, %425 : vector<2x128xf32>
    %427 = math.tanh %426 : vector<2x128xf32>
    %428 = vector.extract_strided_slice %419 {offsets = [0, 128], sizes = [2, 128], strides = [1, 1]} : vector<2x256xf32> to vector<2x128xf32>
    %429 = arith.subf %403, %427 : vector<2x128xf32>
    %430 = arith.mulf %428, %429 : vector<2x128xf32>
    %431 = arith.addf %427, %430 : vector<2x128xf32>
    %432 = arith.truncf %431 : vector<2x128xf32> to vector<2x128xbf16>
    %c14_119 = arith.constant 14 : index
    %c0_120 = arith.constant 0 : index
    %c0_121 = arith.constant 0 : index
    %433 = vector.load %arg7[%c14_119, %c0_120, %c0_121] : memref<16x2x128xbf16, #tpu.memory_space<vmem>>, vector<1x2x128xbf16>
    %434 = vector.shape_cast %433 : vector<1x2x128xbf16> to vector<2x128xbf16>
    %435 = vector.shape_cast %432 : vector<2x128xbf16> to vector<1x2x128xbf16>
    tpu.vector_store %arg7[%c14_119, %c0_120, %c0_121], %435 {strides = array<i32>} : memref<16x2x128xbf16, #tpu.memory_space<vmem>>, vector<1x2x128xbf16>,
    %c15 = arith.constant 15 : index
    %c0_122 = arith.constant 0 : index
    %c0_123 = arith.constant 0 : index
    %436 = vector.load %arg9[%c15, %c0_122, %c0_123] : memref<16x2x384xf32, #tpu.memory_space<vmem>>, vector<1x2x384xf32>
    %437 = vector.shape_cast %436 : vector<1x2x384xf32> to vector<2x384xf32>
    %438 = arith.truncf %431 : vector<2x128xf32> to vector<2x128xbf16>
    %cst_124 = arith.constant dense<0.000000e+00> : vector<2x384xf32>
    %439 = tpu.matmul %438, %13, %cst_124 {dimension_numbers = #tpu.dot_dimension_numbers<[1], [0], [0], [1], [0, 0, 1, 1], [], []>} : vector<2x128xbf16>, vector<128x384xbf16>, vector<2x384xf32> -> vector<2x384xf32>
    %440 = vector.extract_strided_slice %437 {offsets = [0, 0], sizes = [2, 256], strides = [1, 1]} : vector<2x384xf32> to vector<2x256xf32>
    %441 = vector.extract_strided_slice %439 {offsets = [0, 0], sizes = [2, 256], strides = [1, 1]} : vector<2x384xf32> to vector<2x256xf32>
    %442 = arith.addf %440, %441 : vector<2x256xf32>
    %443 = arith.negf %442 : vector<2x256xf32>
    %444 = math.exp %443 : vector<2x256xf32>
    %cst_125 = arith.constant 1.000000e+00 : f32
    %445 = vector.broadcast %cst_125 : f32 to vector<2x256xf32>
    %446 = arith.addf %445, %444 : vector<2x256xf32>
    %447 = arith.divf %445, %446 : vector<2x256xf32>
    %448 = vector.extract_strided_slice %437 {offsets = [0, 256], sizes = [2, 128], strides = [1, 1]} : vector<2x384xf32> to vector<2x128xf32>
    %449 = vector.extract_strided_slice %447 {offsets = [0, 0], sizes = [2, 128], strides = [1, 1]} : vector<2x256xf32> to vector<2x128xf32>
    %450 = vector.extract_strided_slice %439 {offsets = [0, 256], sizes = [2, 128], strides = [1, 1]} : vector<2x384xf32> to vector<2x128xf32>
    %451 = vector.broadcast %14 : vector<1x128xf32> to vector<2x128xf32>
    %452 = arith.addf %450, %451 : vector<2x128xf32>
    %453 = arith.mulf %449, %452 : vector<2x128xf32>
    %454 = arith.addf %448, %453 : vector<2x128xf32>
    %455 = math.tanh %454 : vector<2x128xf32>
    %456 = vector.extract_strided_slice %447 {offsets = [0, 128], sizes = [2, 128], strides = [1, 1]} : vector<2x256xf32> to vector<2x128xf32>
    %457 = arith.subf %431, %455 : vector<2x128xf32>
    %458 = arith.mulf %456, %457 : vector<2x128xf32>
    %459 = arith.addf %455, %458 : vector<2x128xf32>
    %460 = arith.truncf %459 : vector<2x128xf32> to vector<2x128xbf16>
    %c15_126 = arith.constant 15 : index
    %c0_127 = arith.constant 0 : index
    %c0_128 = arith.constant 0 : index
    %461 = vector.load %arg7[%c15_126, %c0_127, %c0_128] : memref<16x2x128xbf16, #tpu.memory_space<vmem>>, vector<1x2x128xbf16>
    %462 = vector.shape_cast %461 : vector<1x2x128xbf16> to vector<2x128xbf16>
    %463 = vector.shape_cast %460 : vector<2x128xbf16> to vector<1x2x128xbf16>
    tpu.vector_store %arg7[%c15_126, %c0_127, %c0_128], %463 {strides = array<i32>} : memref<16x2x128xbf16, #tpu.memory_space<vmem>>, vector<1x2x128xbf16>,
    %c0_129 = arith.constant 0 : index
    %c0_130 = arith.constant 0 : index
    %464 = vector.load %arg8[%c0_129, %c0_130] : memref<2x128xf32, #tpu.memory_space<vmem>>, vector<2x128xf32>
    tpu.vector_store %arg8[%c0_129, %c0_130], %459 {strides = array<i32>} : memref<2x128xf32, #tpu.memory_space<vmem>>, vector<2x128xf32>,
    return
  }
  func.func @transform_0(%arg0: i32, %arg1: i32) -> (i32, i32, i32) {
    %c0_i32 = arith.constant 0 : i32
    %c0_i32_0 = arith.constant 0 : i32
    return %arg1, %arg0, %c0_i32 : i32, i32, i32
  }
  func.func @transform_1(%arg0: i32, %arg1: i32) -> (i32, i32) {
    %c0_i32 = arith.constant 0 : i32
    %c0_i32_0 = arith.constant 0 : i32
    %c0_i32_1 = arith.constant 0 : i32
    return %c0_i32, %c0_i32_0 : i32, i32
  }
  func.func @transform_2(%arg0: i32, %arg1: i32) -> (i32, i32) {
    %c0_i32 = arith.constant 0 : i32
    %c0_i32_0 = arith.constant 0 : i32
    %c0_i32_1 = arith.constant 0 : i32
    return %c0_i32, %c0_i32_0 : i32, i32
  }
  func.func @transform_3(%arg0: i32, %arg1: i32) -> (i32, i32) {
    %c0_i32 = arith.constant 0 : i32
    %c0_i32_0 = arith.constant 0 : i32
    %c0_i32_1 = arith.constant 0 : i32
    return %c0_i32, %c0_i32_0 : i32, i32
  }
  func.func @transform_4(%arg0: i32, %arg1: i32) -> (i32, i32) {
    %c0_i32 = arith.constant 0 : i32
    %c0_i32_0 = arith.constant 0 : i32
    %c0_i32_1 = arith.constant 0 : i32
    return %c0_i32, %c0_i32_0 : i32, i32
  }
  func.func @transform_5(%arg0: i32, %arg1: i32) -> (i32, i32, i32) {
    %c0_i32 = arith.constant 0 : i32
    %c0_i32_0 = arith.constant 0 : i32
    return %arg1, %arg0, %c0_i32 : i32, i32, i32
  }
  func.func @transform_6(%arg0: i32, %arg1: i32) -> (i32, i32) {
    %c0_i32 = arith.constant 0 : i32
    %c0_i32_0 = arith.constant 0 : i32
    return %arg0, %c0_i32 : i32, i32
  }
}

</mosaic_0001>

<llo_original>
// kernel: tpu_custom_call.1
$region0: #{tpu_custom_call.1}
  #allocation0 [shape = 'u32[]', space=smem, size = 0x4, offset = 0x4, fixed_abs, tag = 'smem constant byte address 0x4 - core index']
  #allocation1 [shape = 'u32[72,128]{1,0:T(1,128)}', space=vmem, size = 0x9000, scoped, tag = 'internal scratch']
  #allocation2 [shape = 'f32[16,2,384]{2,1,0:T(2,128)}', space=vmem, size = 0xc000, scoped, tag = 'scratch operand']
  %s0 = inlined_call_operand.hbm [shape: f32[16,2,16], index: 0, kind: input, shape index: {}]
  %s1 = inlined_call_operand.hbm [shape: bf16[16,384], index: 1, kind: input, shape index: {}]
  %s2 = inlined_call_operand.hbm [shape: bf16[128,384], index: 2, kind: input, shape index: {}]
  %s3 = inlined_call_operand.hbm [shape: f32[1,384], index: 3, kind: input, shape index: {}]
  %s4 = inlined_call_operand.vmem [shape: f32[1,128], index: 4, kind: input, shape index: {}]
  %s5 = inlined_call_operand.hbm [shape: bf16[16,2,128], index: 5, kind: output, shape index: {0}]
  %s6 = inlined_call_operand.hbm [shape: f32[2,128], index: 6, kind: output, shape index: {1}]
  %7 = xla_tuple %s5, %s6
  %s8 = sld [smem:[#allocation0]]
  $region58: #{tpu_custom_call.1} parent=0
    _
  %s10 = ssub.s32 1, %s8
  %s11 = scalar_select 0, %s10, %s8
  $region1: #{tpu_custom_call.1} parent=0
    #allocation3 [shape = 'u8[16384]{0}', space=vmem, size = 0x4000, scoped, tag = 'input window, operand 0, single buffered']
    #allocation4 [shape = 's32[1]{0}', space=sflag, size = 0x4, scoped, tag = 'scoped memory for tpu_custom_call.1']
    #allocation5 [shape = 's32[1]{0}', space=sflag, size = 0x4, scoped, tag = 'scoped memory for tpu_custom_call.1']
    #allocation6 [shape = 'u8[12288]{0}', space=vmem, size = 0x3000, scoped, tag = 'input window, operand 1, single buffered']
    #allocation7 [shape = 's32[1]{0}', space=sflag, size = 0x4, scoped, tag = 'scoped memory for tpu_custom_call.1']
    #allocation8 [shape = 'u8[98304]{0}', space=vmem, size = 0x18000, scoped, tag = 'input window, operand 2, single buffered']
    #allocation9 [shape = 'u8[1536]{0}', space=vmem, size = 0x800, scoped, tag = 'input window, operand 3, single buffered']
    #allocation10 [shape = 's32[1]{0}', space=sflag, size = 0x4, scoped, tag = 'scoped memory for tpu_custom_call.1']
    #allocation11 [shape = 'u8[8192]{0}', space=vmem, size = 0x2000, scoped, tag = 'output window, operand 0, single buffered']
    #allocation12 [shape = 'u8[1024]{0}', space=vmem, size = 0x400, scoped, tag = 'output window, operand 1, single buffered']
    #allocation13 [shape = 's32[1]{0}', space=sflag, size = 0x4, scoped, tag = 'scoped memory for tpu_custom_call.1']
    %12 = vsyncpa [#allocation4], 0
    %13 = vsyncpa [#allocation7], 0
    %14 = vsyncpa [#allocation10], 0
    %15 = vsyncpa [#allocation5], 0
    %16 = vsyncpa [#allocation13], 0
    // Predicated region
    $region2: #{tpu_custom_call.1} parent=1 // pred_check
      _
    $region3: #{tpu_custom_call.1} parent=1 // pred_check_branch
      %18 = sbr.rel (0) target = $region5
    $region4: #{tpu_custom_call.1} parent=1 // pred_region
      %20 = vsyncadd [#allocation4], 0
      %s21 = sshll.u32 %s0, 4
      %s22 = int_to_ptr.hbm [resolvable:$true] %s21
      %s23 = sshll.u32 [#allocation3], 4
      %s24 = int_to_ptr.vmem [resolvable:$true] %s23
      %29 = dma.hbm_to_vmem [thread:$0]  %s22, 512, %s24, [#allocation4], 32, 32, 2
    $region5: #{tpu_custom_call.1} parent=1 // pred_fallthru
      _
    // Predicated region
    $region6: #{tpu_custom_call.1} parent=1 // pred_check
      _
    $region7: #{tpu_custom_call.1} parent=1 // pred_check_branch
      %31 = sbr.rel (0) target = $region9
    $region8: #{tpu_custom_call.1} parent=1 // pred_region
      %33 = vsyncadd [#allocation7], 0
      %s34 = sshll.u32 %s1, 4
      %s35 = int_to_ptr.hbm [resolvable:$true] %s34
      %s36 = sshll.u32 [#allocation6], 4
      %s37 = int_to_ptr.vmem [resolvable:$true] %s36
      %42 = dma.hbm_to_vmem [thread:$0]  %s35, 384, %s37, [#allocation7], 192, 192, 12
    $region9: #{tpu_custom_call.1} parent=1 // pred_fallthru
      _
    // Predicated region
    $region10: #{tpu_custom_call.1} parent=1 // pred_check
      _
    $region11: #{tpu_custom_call.1} parent=1 // pred_check_branch
      %44 = sbr.rel (0) target = $region13
    $region12: #{tpu_custom_call.1} parent=1 // pred_region
      %46 = vsyncadd [#allocation7], 0
      %s47 = sshll.u32 %s2, 4
      %s48 = int_to_ptr.hbm [resolvable:$true] %s47
      %s49 = sshll.u32 [#allocation8], 4
      %s50 = int_to_ptr.vmem [resolvable:$true] %s49
      %55 = dma.hbm_to_vmem [thread:$0]  %s48, 3072, %s50, [#allocation7], 192, 192, 12
    $region13: #{tpu_custom_call.1} parent=1 // pred_fallthru
      _
    // Predicated region
    $region14: #{tpu_custom_call.1} parent=1 // pred_check
      _
    $region15: #{tpu_custom_call.1} parent=1 // pred_check_branch
      %57 = sbr.rel (0) target = $region17
    $region16: #{tpu_custom_call.1} parent=1 // pred_region
      %59 = vsyncadd [#allocation10], 0
      %s61 = sshll.u32 %s3, 4
      %s62 = int_to_ptr.hbm [resolvable:$true] %s61
      %s63 = sshll.u32 [#allocation9], 4
      %s64 = int_to_ptr.vmem [resolvable:$true] %s63
      %66 = dma.hbm_to_vmem [thread:$0]  %s62, 48, %s64, [#allocation10]
    $region17: #{tpu_custom_call.1} parent=1 // pred_fallthru
      _
    // Predicated region
    $region18: #{tpu_custom_call.1} parent=1 // pred_check
      _
    $region19: #{tpu_custom_call.1} parent=1 // pred_check_branch
      %68 = sbr.rel (0) target = $region21
    $region20: #{tpu_custom_call.1} parent=1 // pred_region
      _
    $region21: #{tpu_custom_call.1} parent=1 // pred_fallthru
      _
    // Predicated region
    $region22: #{tpu_custom_call.1} parent=1 // pred_check
      _
    $region23: #{tpu_custom_call.1} parent=1 // pred_check_branch
      %70 = sbr.rel (0) target = $region25
    $region24: #{tpu_custom_call.1} parent=1 // pred_region
      %72 = dma.done [#allocation4], 512
    $region25: #{tpu_custom_call.1} parent=1 // pred_fallthru
      _
    // Predicated region
    $region26: #{tpu_custom_call.1} parent=1 // pred_check
      _
    $region27: #{tpu_custom_call.1} parent=1 // pred_check_branch
      %74 = sbr.rel (0) target = $region29
    $region28: #{tpu_custom_call.1} parent=1 // pred_region
      %76 = dma.done [#allocation7], 384
    $region29: #{tpu_custom_call.1} parent=1 // pred_fallthru
      _
    // Predicated region
    $region30: #{tpu_custom_call.1} parent=1 // pred_check
      _
    $region31: #{tpu_custom_call.1} parent=1 // pred_check_branch
      %78 = sbr.rel (0) target = $region33
    $region32: #{tpu_custom_call.1} parent=1 // pred_region
      %80 = dma.done [#allocation7], 3072
    $region33: #{tpu_custom_call.1} parent=1 // pred_fallthru
      _
    // Predicated region
    $region34: #{tpu_custom_call.1} parent=1 // pred_check
      _
    $region35: #{tpu_custom_call.1} parent=1 // pred_check_branch
      %82 = sbr.rel (0) target = $region37
    $region36: #{tpu_custom_call.1} parent=1 // pred_region
      %84 = dma.done [#allocation10], 48
    $region37: #{tpu_custom_call.1} parent=1 // pred_fallthru
      _
    %p86 = scmp.eq.s32.totalorder 0, 0
    // Predicated region
    $region38: #{tpu_custom_call.1} parent=1 // pred_check
      %p87 = pneg %p86
    $region39: #{tpu_custom_call.1} parent=1 // pred_check_branch
      %89 = sbr.rel (%p87) target = $region41
    $region40: #{tpu_custom_call.1} parent=1 // pred_region
      %90 = vst [vmem:[#allocation12] sm:$0x3] 0.0
    $region41: #{tpu_custom_call.1} parent=1 // pred_fallthru
      _
    %v91 = vld [vmem:[#allocation6] sm:$0xff]
    %v92 = vld [vmem:[#allocation6 + $0x8] sm:$0xf]
    %v93 = vld [vmem:[#allocation6 + $0xc] sm:$0xff]
    %v94 = vld [vmem:[#allocation6 + $0x14] sm:$0xf]
    %v95 = vld [vmem:[#allocation3] sm:$0x3]
    %v96 = vld [vmem:[#allocation3 + $0x2] sm:$0x3]
    %v97 = vld [vmem:[#allocation3 + $0x4] sm:$0x3]
    %v98 = vld [vmem:[#allocation3 + $0x6] sm:$0x3]
    %v99 = vld [vmem:[#allocation3 + $0x8] sm:$0x3]
    %v100 = vld [vmem:[#allocation3 + $0xa] sm:$0x3]
    %v101 = vld [vmem:[#allocation3 + $0xc] sm:$0x3]
    %v102 = vld [vmem:[#allocation3 + $0xe] sm:$0x3]
    %v103 = vld [vmem:[#allocation3 + $0x10] sm:$0x3]
    %v104 = vld [vmem:[#allocation3 + $0x12] sm:$0x3]
    %v105 = vld [vmem:[#allocation3 + $0x14] sm:$0x3]
    %v106 = vld [vmem:[#allocation3 + $0x16] sm:$0x3]
    %v107 = vld [vmem:[#allocation3 + $0x18] sm:$0x3]
    %v108 = vld [vmem:[#allocation3 + $0x1a] sm:$0x3]
    %v109 = vld [vmem:[#allocation3 + $0x1c] sm:$0x3]
    %v110 = vld [vmem:[#allocation3 + $0x1e] sm:$0x3]
    %127 = vst [vmem:[#allocation1] ss:$4 sm:$0xff] %v95
    %s128 = scalar_lea.vmem [#allocation1], 1
    %129 = vst [vmem:[%s128] ss:$4 sm:$0xff] %v96
    %s130 = scalar_lea.vmem [#allocation1], 2
    %131 = vst [vmem:[%s130] ss:$4 sm:$0xff] %v97
    %s132 = scalar_lea.vmem [#allocation1], 3
    %133 = vst [vmem:[%s132] ss:$4 sm:$0xff] %v98
    %s134 = scalar_lea.vmem [#allocation1], 32
    %135 = vst [vmem:[%s134] ss:$4 sm:$0xff] %v99
    %s136 = scalar_lea.vmem [#allocation1], 33
    %137 = vst [vmem:[%s136] ss:$4 sm:$0xff] %v100
    %s138 = scalar_lea.vmem [#allocation1], 34
    %139 = vst [vmem:[%s138] ss:$4 sm:$0xff] %v101
    %s140 = scalar_lea.vmem [#allocation1], 35
    %141 = vst [vmem:[%s140] ss:$4 sm:$0xff] %v102
    %v142 = vld.sshfl [vmem:[#allocation1] sm:$0xff pattern:$0x73625140]
    %v143 = vld.sshfl [vmem:[#allocation1 + $0x20] sm:$0xff pattern:$0x73625140]
    %144 = vst [vmem:[#allocation1] ss:$4 sm:$0xff] %v103
    %145 = vst [vmem:[%s128] ss:$4 sm:$0xff] %v104
    %146 = vst [vmem:[%s130] ss:$4 sm:$0xff] %v105
    %147 = vst [vmem:[%s132] ss:$4 sm:$0xff] %v106
    %148 = vst [vmem:[%s134] ss:$4 sm:$0xff] %v107
    %149 = vst [vmem:[%s136] ss:$4 sm:$0xff] %v108
    %150 = vst [vmem:[%s138] ss:$4 sm:$0xff] %v109
    %151 = vst [vmem:[%s140] ss:$4 sm:$0xff] %v110
    %v152 = vld.sshfl [vmem:[#allocation1] sm:$0xff pattern:$0x73625140]
    %v153 = vld.sshfl [vmem:[#allocation1 + $0x20] sm:$0xff pattern:$0x73625140]
    %v158 = vpack.c.bf16 %v143, %v142
    %v159 = vpack.c.bf16 %v153, %v152
    %v160 = vld [vmem:[#allocation9] sm:$0x7]
    %v162 = vperm.slane %v160, 0
    %v163 = vperm.slane %v160, 1
    %v164 = vperm.slane %v160, 2
    %v172 = vunpack.c.l.b16 %v91
    %v173 = vunpack.c.h.b16 %v91
    %v174 = vunpack.c.l.b16 %v92
    %v175 = vunpack.c.l.b16 %v93
    %v176 = vunpack.c.h.b16 %v93
    %v177 = vunpack.c.l.b16 %v94
    %v178 = vpack.c.b16 %v175, %v172
    %v179 = vpack.c.b16 %v176, %v173
    %v180 = vpack.c.b16 %v177, %v174
    %vm184 = vcmask 130048
    %v186 = vsel %vm184, %v158, 0
    %v189 = vsel %vm184, %v159, 0
    %191 = vmatpush.bf16.msra.mxu0 0
    %192 = vmatpush.bf16.msra.mxu0 0
    %193 = vmatpush.bf16.msra.mxu0 0
    %194 = vmatpush.bf16.msra.mxu0 0
    %195 = vmatpush.bf16.msra.mxu0 0
    %196 = vmatpush.bf16.msra.mxu0 0
    %197 = vmatpush.bf16.msra.mxu0 0
    %198 = vmatpush.bf16.msra.mxu0 %v178
    %199 = vmatmul.bf16.gmra.mxu0 %v186
    %v200 = vpop.f32.mrf.mxu0
    %v201 = vadd.f32 %v162, %v200
    %v202 = vpop.f32.mrf.mxu0
    %v203 = vadd.f32 %v162, %v202
    %204 = vmatmul.bf16.gmra.mxu0 %v189
    %v205 = vpop.f32.mrf.mxu0
    %v206 = vadd.f32 %v162, %v205
    %v207 = vpop.f32.mrf.mxu0
    %v208 = vadd.f32 %v162, %v207
    %209 = vdwg.mxu0
    %210 = vmatpush.bf16.msra.mxu0 0
    %211 = vmatpush.bf16.msra.mxu0 0
    %212 = vmatpush.bf16.msra.mxu0 0
    %213 = vmatpush.bf16.msra.mxu0 0
    %214 = vmatpush.bf16.msra.mxu0 0
    %215 = vmatpush.bf16.msra.mxu0 0
    %216 = vmatpush.bf16.msra.mxu0 0
    %217 = vmatpush.bf16.msra.mxu0 %v179
    %218 = vmatmul.bf16.gmra.mxu0 %v186
    %v219 = vpop.f32.mrf.mxu0
    %v220 = vadd.f32 %v163, %v219
    %v221 = vpop.f32.mrf.mxu0
    %v222 = vadd.f32 %v163, %v221
    %223 = vmatmul.bf16.gmra.mxu0 %v189
    %v224 = vpop.f32.mrf.mxu0
    %v225 = vadd.f32 %v163, %v224
    %v226 = vpop.f32.mrf.mxu0
    %v227 = vadd.f32 %v163, %v226
    %228 = vdwg.mxu0
    %229 = vmatpush.bf16.msra.mxu0 0
    %230 = vmatpush.bf16.msra.mxu0 0
    %231 = vmatpush.bf16.msra.mxu0 0
    %232 = vmatpush.bf16.msra.mxu0 0
    %233 = vmatpush.bf16.msra.mxu0 0
    %234 = vmatpush.bf16.msra.mxu0 0
    %235 = vmatpush.bf16.msra.mxu0 0
    %236 = vmatpush.bf16.msra.mxu0 %v180
    %237 = vmatmul.bf16.gmra.mxu0 %v186
    %v238 = vpop.f32.mrf.mxu0
    %v239 = vadd.f32 %v164, %v238
    %v240 = vpop.f32.mrf.mxu0
    %v241 = vadd.f32 %v164, %v240
    %242 = vmatmul.bf16.gmra.mxu0 %v189
    %v243 = vpop.f32.mrf.mxu0
    %v244 = vadd.f32 %v164, %v243
    %v245 = vpop.f32.mrf.mxu0
    %v246 = vadd.f32 %v164, %v245
    %247 = vdwg.mxu0
    %v260 = vrot.slane %v220, 6
    %v261 = vrot.slane %v239, 4
    %v262 = vrot.slane %v222, 6
    %v263 = vrot.slane %v241, 4
    %v264 = vrot.slane %v225, 6
    %v265 = vrot.slane %v244, 4
    %v266 = vrot.slane %v227, 6
    %v267 = vrot.slane %v246, 4
    %vm268 = vcmask 1041408
    %v269 = vsel %vm268, %v201, %v260
    %vm270 = vcmask 1043456
    %v271 = vsel %vm270, %v269, %v261
    %vm272 = vcmask 1043458
    %v273 = vsel %vm272, %v201, %v260
    %vm274 = vcmask 1045506
    %v275 = vsel %vm274, %v273, %v261
    %v276 = vrot.slane %v275, 2
    %vm277 = vcmask 1045508
    %v278 = vsel %vm277, %v201, %v260
    %v279 = vsel %vm270, %v261, %v278
    %v280 = vrot.slane %v279, 4
    %vm281 = vcmask 1045504
    %v282 = vsel %vm281, %v260, %v201
    %v283 = vsel %vm274, %v261, %v282
    %v284 = vrot.slane %v283, 6
    %v285 = vsel %vm268, %v203, %v262
    %v286 = vsel %vm270, %v285, %v263
    %v287 = vsel %vm272, %v203, %v262
    %v288 = vsel %vm274, %v287, %v263
    %v289 = vrot.slane %v288, 2
    %v290 = vsel %vm277, %v203, %v262
    %v291 = vsel %vm270, %v263, %v290
    %v292 = vrot.slane %v291, 4
    %v293 = vsel %vm281, %v262, %v203
    %v294 = vsel %vm274, %v263, %v293
    %v295 = vrot.slane %v294, 6
    %v296 = vsel %vm268, %v206, %v264
    %v297 = vsel %vm270, %v296, %v265
    %v298 = vsel %vm272, %v206, %v264
    %v299 = vsel %vm274, %v298, %v265
    %v300 = vrot.slane %v299, 2
    %v301 = vsel %vm277, %v206, %v264
    %v302 = vsel %vm270, %v265, %v301
    %v303 = vrot.slane %v302, 4
    %v304 = vsel %vm281, %v264, %v206
    %v305 = vsel %vm274, %v265, %v304
    %v306 = vrot.slane %v305, 6
    %v307 = vsel %vm268, %v208, %v266
    %v308 = vsel %vm270, %v307, %v267
    %v309 = vsel %vm272, %v208, %v266
    %v310 = vsel %vm274, %v309, %v267
    %v311 = vrot.slane %v310, 2
    %v312 = vsel %vm277, %v208, %v266
    %v313 = vsel %vm270, %v267, %v312
    %v314 = vrot.slane %v313, 4
    %v315 = vsel %vm281, %v266, %v208
    %v316 = vsel %vm274, %v267, %v315
    %v317 = vrot.slane %v316, 6
    %334 = vst [vmem:[#allocation2] sm:$0x3f] %v271
    %335 = vst [vmem:[#allocation2 + $0x6] sm:$0x3f] %v276
    %336 = vst [vmem:[#allocation2 + $0xc] sm:$0x3f] %v280
    %337 = vst [vmem:[#allocation2 + $0x12] sm:$0x3f] %v284
    %338 = vst [vmem:[#allocation2 + $0x18] sm:$0x3f] %v286
    %339 = vst [vmem:[#allocation2 + $0x1e] sm:$0x3f] %v289
    %340 = vst [vmem:[#allocation2 + $0x24] sm:$0x3f] %v292
    %341 = vst [vmem:[#allocation2 + $0x2a] sm:$0x3f] %v295
    %342 = vst [vmem:[#allocation2 + $0x30] sm:$0x3f] %v297
    %343 = vst [vmem:[#allocation2 + $0x36] sm:$0x3f] %v300
    %344 = vst [vmem:[#allocation2 + $0x3c] sm:$0x3f] %v303
    %345 = vst [vmem:[#allocation2 + $0x42] sm:$0x3f] %v306
    %346 = vst [vmem:[#allocation2 + $0x48] sm:$0x3f] %v308
    %347 = vst [vmem:[#allocation2 + $0x4e] sm:$0x3f] %v311
    %348 = vst [vmem:[#allocation2 + $0x54] sm:$0x3f] %v314
    %349 = vst [vmem:[#allocation2 + $0x5a] sm:$0x3f] %v317
    %v350 = vld [vmem:[#allocation8] sm:$0xff]
    %v351 = vld [vmem:[#allocation8 + $0x8] sm:$0xf]
    %v352 = vld [vmem:[#allocation8 + $0xc] sm:$0xff]
    %v353 = vld [vmem:[#allocation8 + $0x14] sm:$0xf]
    %v354 = vld [vmem:[#allocation8 + $0x18] sm:$0xff]
    %v355 = vld [vmem:[#allocation8 + $0x20] sm:$0xf]
    %v356 = vld [vmem:[#allocation8 + $0x24] sm:$0xff]
    %v357 = vld [vmem:[#allocation8 + $0x2c] sm:$0xf]
    %v358 = vld [vmem:[#allocation8 + $0x30] sm:$0xff]
    %v359 = vld [vmem:[#allocation8 + $0x38] sm:$0xf]
    %v360 = vld [vmem:[#allocation8 + $0x3c] sm:$0xff]
    %v361 = vld [vmem:[#allocation8 + $0x44] sm:$0xf]
    %v362 = vld [vmem:[#allocation8 + $0x48] sm:$0xff]
    %v363 = vld [vmem:[#allocation8 + $0x50] sm:$0xf]
    %v364 = vld [vmem:[#allocation8 + $0x54] sm:$0xff]
    %v365 = vld [vmem:[#allocation8 + $0x5c] sm:$0xf]
    %v366 = vld [vmem:[#allocation8 + $0x60] sm:$0xff]
    %v367 = vld [vmem:[#allocation8 + $0x68] sm:$0xf]
    %v368 = vld [vmem:[#allocation8 + $0x6c] sm:$0xff]
    %v369 = vld [vmem:[#allocation8 + $0x74] sm:$0xf]
    %v370 = vld [vmem:[#allocation8 + $0x78] sm:$0xff]
    %v371 = vld [vmem:[#allocation8 + $0x80] sm:$0xf]
    %v372 = vld [vmem:[#allocation8 + $0x84] sm:$0xff]
    %v373 = vld [vmem:[#allocation8 + $0x8c] sm:$0xf]
    %v374 = vld [vmem:[#allocation8 + $0x90] sm:$0xff]
    %v375 = vld [vmem:[#allocation8 + $0x98] sm:$0xf]
    %v376 = vld [vmem:[#allocation8 + $0x9c] sm:$0xff]
    %v377 = vld [vmem:[#allocation8 + $0xa4] sm:$0xf]
    %v378 = vld [vmem:[#allocation8 + $0xa8] sm:$0xff]
    %v379 = vld [vmem:[#allocation8 + $0xb0] sm:$0xf]
    %v380 = vld [vmem:[#allocation8 + $0xb4] sm:$0xff]
    %v381 = vld [vmem:[#allocation8 + $0xbc] sm:$0xf]
    %v382 = vld [vmem:[%s4] sm:$0x1]
    %v383 = vld [vmem:[#allocation12] sm:$0x3]
    %v384 = vld [vmem:[#allocation2] sm:$0x3f]
    %v385 = vpack.c.bf16 %v383, %v383
    %v418 = vunpack.c.l.b16 %v350
    %v419 = vunpack.c.h.b16 %v350
    %v420 = vunpack.c.l.b16 %v351
    %v421 = vunpack.c.l.b16 %v352
    %v422 = vunpack.c.h.b16 %v352
    %v423 = vunpack.c.l.b16 %v353
    %v424 = vunpack.c.l.b16 %v354
    %v425 = vunpack.c.h.b16 %v354
    %v426 = vunpack.c.l.b16 %v355
    %v427 = vunpack.c.l.b16 %v356
    %v428 = vunpack.c.h.b16 %v356
    %v429 = vunpack.c.l.b16 %v357
    %v430 = vunpack.c.l.b16 %v358
    %v431 = vunpack.c.h.b16 %v358
    %v432 = vunpack.c.l.b16 %v359
    %v433 = vunpack.c.l.b16 %v360
    %v434 = vunpack.c.h.b16 %v360
    %v435 = vunpack.c.l.b16 %v361
    %v436 = vunpack.c.l.b16 %v362
    %v437 = vunpack.c.h.b16 %v362
    %v438 = vunpack.c.l.b16 %v363
    %v439 = vunpack.c.l.b16 %v364
    %v440 = vunpack.c.h.b16 %v364
    %v441 = vunpack.c.l.b16 %v365
    %v442 = vunpack.c.l.b16 %v366
    %v443 = vunpack.c.h.b16 %v366
    %v444 = vunpack.c.l.b16 %v367
    %v445 = vunpack.c.l.b16 %v368
    %v446 = vunpack.c.h.b16 %v368
    %v447 = vunpack.c.l.b16 %v369
    %v448 = vunpack.c.l.b16 %v370
    %v449 = vunpack.c.h.b16 %v370
    %v450 = vunpack.c.l.b16 %v371
    %v451 = vunpack.c.l.b16 %v372
    %v452 = vunpack.c.h.b16 %v372
    %v453 = vunpack.c.l.b16 %v373
    %v454 = vunpack.c.l.b16 %v374
    %v455 = vunpack.c.h.b16 %v374
    %v456 = vunpack.c.l.b16 %v375
    %v457 = vunpack.c.l.b16 %v376
    %v458 = vunpack.c.h.b16 %v376
    %v459 = vunpack.c.l.b16 %v377
    %v460 = vunpack.c.l.b16 %v378
    %v461 = vunpack.c.h.b16 %v378
    %v462 = vunpack.c.l.b16 %v379
    %v463 = vunpack.c.l.b16 %v380
    %v464 = vunpack.c.h.b16 %v380
    %v465 = vunpack.c.l.b16 %v381
    %v466 = vpack.c.b16 %v421, %v418
    %v467 = vpack.c.b16 %v422, %v419
    %v468 = vpack.c.b16 %v423, %v420
    %v469 = vpack.c.b16 %v427, %v424
    %v470 = vpack.c.b16 %v428, %v425
    %v471 = vpack.c.b16 %v429, %v426
    %v472 = vpack.c.b16 %v433, %v430
    %v473 = vpack.c.b16 %v434, %v431
    %v474 = vpack.c.b16 %v435, %v432
    %v475 = vpack.c.b16 %v439, %v436
    %v476 = vpack.c.b16 %v440, %v437
    %v477 = vpack.c.b16 %v441, %v438
    %v478 = vpack.c.b16 %v445, %v442
    %v479 = vpack.c.b16 %v446, %v443
    %v480 = vpack.c.b16 %v447, %v444
    %v481 = vpack.c.b16 %v451, %v448
    %v482 = vpack.c.b16 %v452, %v449
    %v483 = vpack.c.b16 %v453, %v450
    %v484 = vpack.c.b16 %v457, %v454
    %v485 = vpack.c.b16 %v458, %v455
    %v486 = vpack.c.b16 %v459, %v456
    %v487 = vpack.c.b16 %v463, %v460
    %v488 = vpack.c.b16 %v464, %v461
    %v489 = vpack.c.b16 %v465, %v462
    %514 = vmatpush.bf16.msra.mxu0 %v487
    %515 = vmatpush.bf16.msra.mxu0 %v484
    %516 = vmatpush.bf16.msra.mxu0 %v481
    %517 = vmatpush.bf16.msra.mxu0 %v478
    %518 = vmatpush.bf16.msra.mxu0 %v475
    %519 = vmatpush.bf16.msra.mxu0 %v472
    %520 = vmatpush.bf16.msra.mxu0 %v469
    %521 = vmatpush.bf16.msra.mxu0 %v466
    %522 = vmatmul.bf16.gmra.mxu0 %v385
    %v523 = vpop.f32.mrf.mxu0
    %v524 = vadd.f32 0.0, %v523
    %v525 = vpop.f32.mrf.mxu0
    %526 = vdwg.mxu0
    %527 = vmatpush.bf16.msra.mxu0 %v488
    %528 = vmatpush.bf16.msra.mxu0 %v485
    %529 = vmatpush.bf16.msra.mxu0 %v482
    %530 = vmatpush.bf16.msra.mxu0 %v479
    %531 = vmatpush.bf16.msra.mxu0 %v476
    %532 = vmatpush.bf16.msra.mxu0 %v473
    %533 = vmatpush.bf16.msra.mxu0 %v470
    %534 = vmatpush.bf16.msra.mxu0 %v467
    %535 = vmatmul.bf16.gmra.mxu0 %v385
    %v536 = vpop.f32.mrf.mxu0
    %v537 = vadd.f32 0.0, %v536
    %v538 = vpop.f32.mrf.mxu0
    %539 = vdwg.mxu0
    %540 = vmatpush.bf16.msra.mxu0 %v489
    %541 = vmatpush.bf16.msra.mxu0 %v486
    %542 = vmatpush.bf16.msra.mxu0 %v483
    %543 = vmatpush.bf16.msra.mxu0 %v480
    %544 = vmatpush.bf16.msra.mxu0 %v477
    %545 = vmatpush.bf16.msra.mxu0 %v474
    %546 = vmatpush.bf16.msra.mxu0 %v471
    %547 = vmatpush.bf16.msra.mxu0 %v468
    %548 = vmatmul.bf16.gmra.mxu0 %v385
    %v549 = vpop.f32.mrf.mxu0
    %v550 = vadd.f32 0.0, %v549
    %v551 = vpop.f32.mrf.mxu0
    %552 = vdwg.mxu0
    %v555 = vrot.slane %v537, 6
    %v556 = vsel %vm268, %v524, %v555
    %v558 = vadd.f32 %v384, %v556
    %v559 = vxor.u32 %v558, 2147483648
    %v560 = vmul.f32 %v559, 1.442695
    %v561 = vpow.pop %v560
    %v562 = vadd.f32 %v561, 1.0
    %v563 = vrcp.pop %v562
    %v564 = vmul.f32 %v562, %v563
    %v565 = vsub.f32 1.0, %v564
    %v566 = vmul.f32 %v563, %v565
    %v567 = vadd.f32 %v563, %v566
    %vm568 = vweird.f32 %v562
    %vm569 = vweird.f32 %v563
    %vm570 = vmor %vm568, %vm569
    %v571 = vsel %vm570, %v563, %v567
    %v572 = vand.u32 2147483647, %v562
    %vm573 = vcmp.eq.f32.partialorder %v572, 8.507059e+37
    %v574 = vand.u32 %v562, 2147483648
    %v575 = vor.u32 1.1754944e-38, %v574
    %v576 = vsel %vm573, %v575, %v571
    %v577 = vmul.f32 1.0, %v576
    %v579 = vperm.slane %v382, 0
    %v581 = vadd.f32 %v550, %v579
    %v582 = vmul.f32 %v577, %v581
    %v584 = vrot.slane %v384, 4
    %v586 = vadd.f32 %v584, %v582
    %v587 = vtanh.pop %v586
    %v588 = vsub.f32 %v383, %v587
    %v590 = vrot.slane %v577, 2
    %v592 = vmul.f32 %v590, %v588
    %v593 = vadd.f32 %v587, %v592
    %v594 = vpack.c.bf16 %v593, %v593
    %595 = vst [vmem:[#allocation11] sm:$0x1] %v594
    %s596 = scalar_lea.vmem [#allocation2], 6
    %v597 = vld [vmem:[%s596] sm:$0x3f]
    %598 = vmatpush.bf16.msra.mxu0 %v487
    %599 = vmatpush.bf16.msra.mxu0 %v484
    %600 = vmatpush.bf16.msra.mxu0 %v481
    %601 = vmatpush.bf16.msra.mxu0 %v478
    %602 = vmatpush.bf16.msra.mxu0 %v475
    %603 = vmatpush.bf16.msra.mxu0 %v472
    %604 = vmatpush.bf16.msra.mxu0 %v469
    %605 = vmatpush.bf16.msra.mxu0 %v466
    %606 = vmatmul.bf16.gmra.mxu0 %v594
    %v607 = vpop.f32.mrf.mxu0
    %v608 = vadd.f32 0.0, %v607
    %v609 = vpop.f32.mrf.mxu0
    %610 = vdwg.mxu0
    %611 = vmatpush.bf16.msra.mxu0 %v488
    %612 = vmatpush.bf16.msra.mxu0 %v485
    %613 = vmatpush.bf16.msra.mxu0 %v482
    %614 = vmatpush.bf16.msra.mxu0 %v479
    %615 = vmatpush.bf16.msra.mxu0 %v476
    %616 = vmatpush.bf16.msra.mxu0 %v473
    %617 = vmatpush.bf16.msra.mxu0 %v470
    %618 = vmatpush.bf16.msra.mxu0 %v467
    %619 = vmatmul.bf16.gmra.mxu0 %v594
    %v620 = vpop.f32.mrf.mxu0
    %v621 = vadd.f32 0.0, %v620
    %v622 = vpop.f32.mrf.mxu0
    %623 = vdwg.mxu0
    %624 = vmatpush.bf16.msra.mxu0 %v489
    %625 = vmatpush.bf16.msra.mxu0 %v486
    %626 = vmatpush.bf16.msra.mxu0 %v483
    %627 = vmatpush.bf16.msra.mxu0 %v480
    %628 = vmatpush.bf16.msra.mxu0 %v477
    %629 = vmatpush.bf16.msra.mxu0 %v474
    %630 = vmatpush.bf16.msra.mxu0 %v471
    %631 = vmatpush.bf16.msra.mxu0 %v468
    %632 = vmatmul.bf16.gmra.mxu0 %v594
    %v633 = vpop.f32.mrf.mxu0
    %v634 = vadd.f32 0.0, %v633
    %v635 = vpop.f32.mrf.mxu0
    %636 = vdwg.mxu0
    %v639 = vrot.slane %v621, 6
    %v640 = vsel %vm268, %v608, %v639
    %v642 = vadd.f32 %v597, %v640
    %v643 = vxor.u32 %v642, 2147483648
    %v644 = vmul.f32 %v643, 1.442695
    %v645 = vpow.pop %v644
    %v646 = vadd.f32 %v645, 1.0
    %v647 = vrcp.pop %v646
    %v648 = vmul.f32 %v646, %v647
    %v649 = vsub.f32 1.0, %v648
    %v650 = vmul.f32 %v647, %v649
    %v651 = vadd.f32 %v647, %v650
    %vm652 = vweird.f32 %v646
    %vm653 = vweird.f32 %v647
    %vm654 = vmor %vm652, %vm653
    %v655 = vsel %vm654, %v647, %v651
    %v656 = vand.u32 2147483647, %v646
    %vm657 = vcmp.eq.f32.partialorder %v656, 8.507059e+37
    %v658 = vand.u32 %v646, 2147483648
    %v659 = vor.u32 1.1754944e-38, %v658
    %v660 = vsel %vm657, %v659, %v655
    %v661 = vmul.f32 1.0, %v660
    %v662 = vadd.f32 %v634, %v579
    %v663 = vmul.f32 %v661, %v662
    %v665 = vrot.slane %v597, 4
    %v667 = vadd.f32 %v665, %v663
    %v668 = vtanh.pop %v667
    %v669 = vsub.f32 %v593, %v668
    %v671 = vrot.slane %v661, 2
    %v673 = vmul.f32 %v671, %v669
    %v674 = vadd.f32 %v668, %v673
    %v675 = vpack.c.bf16 %v674, %v674
    %s676 = scalar_lea.vmem [#allocation11], 1
    %677 = vst [vmem:[%s676] sm:$0x1] %v675
    %s678 = scalar_lea.vmem [#allocation2], 12
    %v679 = vld [vmem:[%s678] sm:$0x3f]
    %680 = vmatpush.bf16.msra.mxu0 %v487
    %681 = vmatpush.bf16.msra.mxu0 %v484
    %682 = vmatpush.bf16.msra.mxu0 %v481
    %683 = vmatpush.bf16.msra.mxu0 %v478
    %684 = vmatpush.bf16.msra.mxu0 %v475
    %685 = vmatpush.bf16.msra.mxu0 %v472
    %686 = vmatpush.bf16.msra.mxu0 %v469
    %687 = vmatpush.bf16.msra.mxu0 %v466
    %688 = vmatmul.bf16.gmra.mxu0 %v675
    %v689 = vpop.f32.mrf.mxu0
    %v690 = vadd.f32 0.0, %v689
    %v691 = vpop.f32.mrf.mxu0
    %692 = vdwg.mxu0
    %693 = vmatpush.bf16.msra.mxu0 %v488
    %694 = vmatpush.bf16.msra.mxu0 %v485
    %695 = vmatpush.bf16.msra.mxu0 %v482
    %696 = vmatpush.bf16.msra.mxu0 %v479
    %697 = vmatpush.bf16.msra.mxu0 %v476
    %698 = vmatpush.bf16.msra.mxu0 %v473
    %699 = vmatpush.bf16.msra.mxu0 %v470
    %700 = vmatpush.bf16.msra.mxu0 %v467
    %701 = vmatmul.bf16.gmra.mxu0 %v675
    %v702 = vpop.f32.mrf.mxu0
    %v703 = vadd.f32 0.0, %v702
    %v704 = vpop.f32.mrf.mxu0
    %705 = vdwg.mxu0
    %706 = vmatpush.bf16.msra.mxu0 %v489
    %707 = vmatpush.bf16.msra.mxu0 %v486
    %708 = vmatpush.bf16.msra.mxu0 %v483
    %709 = vmatpush.bf16.msra.mxu0 %v480
    %710 = vmatpush.bf16.msra.mxu0 %v477
    %711 = vmatpush.bf16.msra.mxu0 %v474
    %712 = vmatpush.bf16.msra.mxu0 %v471
    %713 = vmatpush.bf16.msra.mxu0 %v468
    %714 = vmatmul.bf16.gmra.mxu0 %v675
    %v715 = vpop.f32.mrf.mxu0
    %v716 = vadd.f32 0.0, %v715
    %v717 = vpop.f32.mrf.mxu0
    %718 = vdwg.mxu0
    %v721 = vrot.slane %v703, 6
    %v722 = vsel %vm268, %v690, %v721
    %v724 = vadd.f32 %v679, %v722
    %v725 = vxor.u32 %v724, 2147483648
    %v726 = vmul.f32 %v725, 1.442695
    %v727 = vpow.pop %v726
    %v728 = vadd.f32 %v727, 1.0
    %v729 = vrcp.pop %v728
    %v730 = vmul.f32 %v728, %v729
    %v731 = vsub.f32 1.0, %v730
    %v732 = vmul.f32 %v729, %v731
    %v733 = vadd.f32 %v729, %v732
    %vm734 = vweird.f32 %v728
    %vm735 = vweird.f32 %v729
    %vm736 = vmor %vm734, %vm735
    %v737 = vsel %vm736, %v729, %v733
    %v738 = vand.u32 2147483647, %v728
    %vm739 = vcmp.eq.f32.partialorder %v738, 8.507059e+37
    %v740 = vand.u32 %v728, 2147483648
    %v741 = vor.u32 1.1754944e-38, %v740
    %v742 = vsel %vm739, %v741, %v737
    %v743 = vmul.f32 1.0, %v742
    %v744 = vadd.f32 %v716, %v579
    %v745 = vmul.f32 %v743, %v744
    %v747 = vrot.slane %v679, 4
    %v749 = vadd.f32 %v747, %v745
    %v750 = vtanh.pop %v749
    %v751 = vsub.f32 %v674, %v750
    %v753 = vrot.slane %v743, 2
    %v755 = vmul.f32 %v753, %v751
    %v756 = vadd.f32 %v750, %v755
    %v757 = vpack.c.bf16 %v756, %v756
    %s758 = scalar_lea.vmem [#allocation11], 2
    %759 = vst [vmem:[%s758] sm:$0x1] %v757
    %s760 = scalar_lea.vmem [#allocation2], 18
    %v761 = vld [vmem:[%s760] sm:$0x3f]
    %762 = vmatpush.bf16.msra.mxu0 %v487
    %763 = vmatpush.bf16.msra.mxu0 %v484
    %764 = vmatpush.bf16.msra.mxu0 %v481
    %765 = vmatpush.bf16.msra.mxu0 %v478
    %766 = vmatpush.bf16.msra.mxu0 %v475
    %767 = vmatpush.bf16.msra.mxu0 %v472
    %768 = vmatpush.bf16.msra.mxu0 %v469
    %769 = vmatpush.bf16.msra.mxu0 %v466
    %770 = vmatmul.bf16.gmra.mxu0 %v757
    %v771 = vpop.f32.mrf.mxu0
    %v772 = vadd.f32 0.0, %v771
    %v773 = vpop.f32.mrf.mxu0
    %774 = vdwg.mxu0
    %775 = vmatpush.bf16.msra.mxu0 %v488
    %776 = vmatpush.bf16.msra.mxu0 %v485
    %777 = vmatpush.bf16.msra.mxu0 %v482
    %778 = vmatpush.bf16.msra.mxu0 %v479
    %779 = vmatpush.bf16.msra.mxu0 %v476
    %780 = vmatpush.bf16.msra.mxu0 %v473
    %781 = vmatpush.bf16.msra.mxu0 %v470
    %782 = vmatpush.bf16.msra.mxu0 %v467
    %783 = vmatmul.bf16.gmra.mxu0 %v757
    %v784 = vpop.f32.mrf.mxu0
    %v785 = vadd.f32 0.0, %v784
    %v786 = vpop.f32.mrf.mxu0
    %787 = vdwg.mxu0
    %788 = vmatpush.bf16.msra.mxu0 %v489
    %789 = vmatpush.bf16.msra.mxu0 %v486
    %790 = vmatpush.bf16.msra.mxu0 %v483
    %791 = vmatpush.bf16.msra.mxu0 %v480
    %792 = vmatpush.bf16.msra.mxu0 %v477
    %793 = vmatpush.bf16.msra.mxu0 %v474
    %794 = vmatpush.bf16.msra.mxu0 %v471
    %795 = vmatpush.bf16.msra.mxu0 %v468
    %796 = vmatmul.bf16.gmra.mxu0 %v757
    %v797 = vpop.f32.mrf.mxu0
    %v798 = vadd.f32 0.0, %v797
    %v799 = vpop.f32.mrf.mxu0
    %800 = vdwg.mxu0
    %v803 = vrot.slane %v785, 6
    %v804 = vsel %vm268, %v772, %v803
    %v806 = vadd.f32 %v761, %v804
    %v807 = vxor.u32 %v806, 2147483648
    %v808 = vmul.f32 %v807, 1.442695
    %v809 = vpow.pop %v808
    %v810 = vadd.f32 %v809, 1.0
    %v811 = vrcp.pop %v810
    %v812 = vmul.f32 %v810, %v811
    %v813 = vsub.f32 1.0, %v812
    %v814 = vmul.f32 %v811, %v813
    %v815 = vadd.f32 %v811, %v814
    %vm816 = vweird.f32 %v810
    %vm817 = vweird.f32 %v811
    %vm818 = vmor %vm816, %vm817
    %v819 = vsel %vm818, %v811, %v815
    %v820 = vand.u32 2147483647, %v810
    %vm821 = vcmp.eq.f32.partialorder %v820, 8.507059e+37
    %v822 = vand.u32 %v810, 2147483648
    %v823 = vor.u32 1.1754944e-38, %v822
    %v824 = vsel %vm821, %v823, %v819
    %v825 = vmul.f32 1.0, %v824
    %v826 = vadd.f32 %v798, %v579
    %v827 = vmul.f32 %v825, %v826
    %v829 = vrot.slane %v761, 4
    %v831 = vadd.f32 %v829, %v827
    %v832 = vtanh.pop %v831
    %v833 = vsub.f32 %v756, %v832
    %v835 = vrot.slane %v825, 2
    %v837 = vmul.f32 %v835, %v833
    %v838 = vadd.f32 %v832, %v837
    %v839 = vpack.c.bf16 %v838, %v838
    %s840 = scalar_lea.vmem [#allocation11], 3
    %841 = vst [vmem:[%s840] sm:$0x1] %v839
    %s842 = scalar_lea.vmem [#allocation2], 24
    %v843 = vld [vmem:[%s842] sm:$0x3f]
    %844 = vmatpush.bf16.msra.mxu0 %v487
    %845 = vmatpush.bf16.msra.mxu0 %v484
    %846 = vmatpush.bf16.msra.mxu0 %v481
    %847 = vmatpush.bf16.msra.mxu0 %v478
    %848 = vmatpush.bf16.msra.mxu0 %v475
    %849 = vmatpush.bf16.msra.mxu0 %v472
    %850 = vmatpush.bf16.msra.mxu0 %v469
    %851 = vmatpush.bf16.msra.mxu0 %v466
    %852 = vmatmul.bf16.gmra.mxu0 %v839
    %v853 = vpop.f32.mrf.mxu0
    %v854 = vadd.f32 0.0, %v853
    %v855 = vpop.f32.mrf.mxu0
    %856 = vdwg.mxu0
    %857 = vmatpush.bf16.msra.mxu0 %v488
    %858 = vmatpush.bf16.msra.mxu0 %v485
    %859 = vmatpush.bf16.msra.mxu0 %v482
    %860 = vmatpush.bf16.msra.mxu0 %v479
    %861 = vmatpush.bf16.msra.mxu0 %v476
    %862 = vmatpush.bf16.msra.mxu0 %v473
    %863 = vmatpush.bf16.msra.mxu0 %v470
    %864 = vmatpush.bf16.msra.mxu0 %v467
    %865 = vmatmul.bf16.gmra.mxu0 %v839
    %v866 = vpop.f32.mrf.mxu0
    %v867 = vadd.f32 0.0, %v866
    %v868 = vpop.f32.mrf.mxu0
    %869 = vdwg.mxu0
    %870 = vmatpush.bf16.msra.mxu0 %v489
    %871 = vmatpush.bf16.msra.mxu0 %v486
    %872 = vmatpush.bf16.msra.mxu0 %v483
    %873 = vmatpush.bf16.msra.mxu0 %v480
    %874 = vmatpush.bf16.msra.mxu0 %v477
    %875 = vmatpush.bf16.msra.mxu0 %v474
    %876 = vmatpush.bf16.msra.mxu0 %v471
    %877 = vmatpush.bf16.msra.mxu0 %v468
    %878 = vmatmul.bf16.gmra.mxu0 %v839
    %v879 = vpop.f32.mrf.mxu0
    %v880 = vadd.f32 0.0, %v879
    %v881 = vpop.f32.mrf.mxu0
    %882 = vdwg.mxu0
    %v885 = vrot.slane %v867, 6
    %v886 = vsel %vm268, %v854, %v885
    %v888 = vadd.f32 %v843, %v886
    %v889 = vxor.u32 %v888, 2147483648
    %v890 = vmul.f32 %v889, 1.442695
    %v891 = vpow.pop %v890
    %v892 = vadd.f32 %v891, 1.0
    %v893 = vrcp.pop %v892
    %v894 = vmul.f32 %v892, %v893
    %v895 = vsub.f32 1.0, %v894
    %v896 = vmul.f32 %v893, %v895
    %v897 = vadd.f32 %v893, %v896
    %vm898 = vweird.f32 %v892
    %vm899 = vweird.f32 %v893
    %vm900 = vmor %vm898, %vm899
    %v901 = vsel %vm900, %v893, %v897
    %v902 = vand.u32 2147483647, %v892
    %vm903 = vcmp.eq.f32.partialorder %v902, 8.507059e+37
    %v904 = vand.u32 %v892, 2147483648
    %v905 = vor.u32 1.1754944e-38, %v904
    %v906 = vsel %vm903, %v905, %v901
    %v907 = vmul.f32 1.0, %v906
    %v908 = vadd.f32 %v880, %v579
    %v909 = vmul.f32 %v907, %v908
    %v911 = vrot.slane %v843, 4
    %v913 = vadd.f32 %v911, %v909
    %v914 = vtanh.pop %v913
    %v915 = vsub.f32 %v838, %v914
    %v917 = vrot.slane %v907, 2
    %v919 = vmul.f32 %v917, %v915
    %v920 = vadd.f32 %v914, %v919
    %v921 = vpack.c.bf16 %v920, %v920
    %s922 = scalar_lea.vmem [#allocation11], 4
    %923 = vst [vmem:[%s922] sm:$0x1] %v921
    %s924 = scalar_lea.vmem [#allocation2], 30
    %v925 = vld [vmem:[%s924] sm:$0x3f]
    %926 = vmatpush.bf16.msra.mxu0 %v487
    %927 = vmatpush.bf16.msra.mxu0 %v484
    %928 = vmatpush.bf16.msra.mxu0 %v481
    %929 = vmatpush.bf16.msra.mxu0 %v478
    %930 = vmatpush.bf16.msra.mxu0 %v475
    %931 = vmatpush.bf16.msra.mxu0 %v472
    %932 = vmatpush.bf16.msra.mxu0 %v469
    %933 = vmatpush.bf16.msra.mxu0 %v466
    %934 = vmatmul.bf16.gmra.mxu0 %v921
    %v935 = vpop.f32.mrf.mxu0
    %v936 = vadd.f32 0.0, %v935
    %v937 = vpop.f32.mrf.mxu0
    %938 = vdwg.mxu0
    %939 = vmatpush.bf16.msra.mxu0 %v488
    %940 = vmatpush.bf16.msra.mxu0 %v485
    %941 = vmatpush.bf16.msra.mxu0 %v482
    %942 = vmatpush.bf16.msra.mxu0 %v479
    %943 = vmatpush.bf16.msra.mxu0 %v476
    %944 = vmatpush.bf16.msra.mxu0 %v473
    %945 = vmatpush.bf16.msra.mxu0 %v470
    %946 = vmatpush.bf16.msra.mxu0 %v467
    %947 = vmatmul.bf16.gmra.mxu0 %v921
    %v948 = vpop.f32.mrf.mxu0
    %v949 = vadd.f32 0.0, %v948
    %v950 = vpop.f32.mrf.mxu0
    %951 = vdwg.mxu0
    %952 = vmatpush.bf16.msra.mxu0 %v489
    %953 = vmatpush.bf16.msra.mxu0 %v486
    %954 = vmatpush.bf16.msra.mxu0 %v483
    %955 = vmatpush.bf16.msra.mxu0 %v480
    %956 = vmatpush.bf16.msra.mxu0 %v477
    %957 = vmatpush.bf16.msra.mxu0 %v474
    %958 = vmatpush.bf16.msra.mxu0 %v471
    %959 = vmatpush.bf16.msra.mxu0 %v468
    %960 = vmatmul.bf16.gmra.mxu0 %v921
    %v961 = vpop.f32.mrf.mxu0
    %v962 = vadd.f32 0.0, %v961
    %v963 = vpop.f32.mrf.mxu0
    %964 = vdwg.mxu0
    %v967 = vrot.slane %v949, 6
    %v968 = vsel %vm268, %v936, %v967
    %v970 = vadd.f32 %v925, %v968
    %v971 = vxor.u32 %v970, 2147483648
    %v972 = vmul.f32 %v971, 1.442695
    %v973 = vpow.pop %v972
    %v974 = vadd.f32 %v973, 1.0
    %v975 = vrcp.pop %v974
    %v976 = vmul.f32 %v974, %v975
    %v977 = vsub.f32 1.0, %v976
    %v978 = vmul.f32 %v975, %v977
    %v979 = vadd.f32 %v975, %v978
    %vm980 = vweird.f32 %v974
    %vm981 = vweird.f32 %v975
    %vm982 = vmor %vm980, %vm981
    %v983 = vsel %vm982, %v975, %v979
    %v984 = vand.u32 2147483647, %v974
    %vm985 = vcmp.eq.f32.partialorder %v984, 8.507059e+37
    %v986 = vand.u32 %v974, 2147483648
    %v987 = vor.u32 1.1754944e-38, %v986
    %v988 = vsel %vm985, %v987, %v983
    %v989 = vmul.f32 1.0, %v988
    %v990 = vadd.f32 %v962, %v579
    %v991 = vmul.f32 %v989, %v990
    %v993 = vrot.slane %v925, 4
    %v995 = vadd.f32 %v993, %v991
    %v996 = vtanh.pop %v995
    %v997 = vsub.f32 %v920, %v996
    %v999 = vrot.slane %v989, 2
    %v1001 = vmul.f32 %v999, %v997
    %v1002 = vadd.f32 %v996, %v1001
    %v1003 = vpack.c.bf16 %v1002, %v1002
    %s1004 = scalar_lea.vmem [#allocation11], 5
    %1005 = vst [vmem:[%s1004] sm:$0x1] %v1003
    %s1006 = scalar_lea.vmem [#allocation2], 36
    %v1007 = vld [vmem:[%s1006] sm:$0x3f]
    %1008 = vmatpush.bf16.msra.mxu0 %v487
    %1009 = vmatpush.bf16.msra.mxu0 %v484
    %1010 = vmatpush.bf16.msra.mxu0 %v481
    %1011 = vmatpush.bf16.msra.mxu0 %v478
    %1012 = vmatpush.bf16.msra.mxu0 %v475
    %1013 = vmatpush.bf16.msra.mxu0 %v472
    %1014 = vmatpush.bf16.msra.mxu0 %v469
    %1015 = vmatpush.bf16.msra.mxu0 %v466
    %1016 = vmatmul.bf16.gmra.mxu0 %v1003
    %v1017 = vpop.f32.mrf.mxu0
    %v1018 = vadd.f32 0.0, %v1017
    %v1019 = vpop.f32.mrf.mxu0
    %1020 = vdwg.mxu0
    %1021 = vmatpush.bf16.msra.mxu0 %v488
    %1022 = vmatpush.bf16.msra.mxu0 %v485
    %1023 = vmatpush.bf16.msra.mxu0 %v482
    %1024 = vmatpush.bf16.msra.mxu0 %v479
    %1025 = vmatpush.bf16.msra.mxu0 %v476
    %1026 = vmatpush.bf16.msra.mxu0 %v473
    %1027 = vmatpush.bf16.msra.mxu0 %v470
    %1028 = vmatpush.bf16.msra.mxu0 %v467
    %1029 = vmatmul.bf16.gmra.mxu0 %v1003
    %v1030 = vpop.f32.mrf.mxu0
    %v1031 = vadd.f32 0.0, %v1030
    %v1032 = vpop.f32.mrf.mxu0
    %1033 = vdwg.mxu0
    %1034 = vmatpush.bf16.msra.mxu0 %v489
    %1035 = vmatpush.bf16.msra.mxu0 %v486
    %1036 = vmatpush.bf16.msra.mxu0 %v483
    %1037 = vmatpush.bf16.msra.mxu0 %v480
    %1038 = vmatpush.bf16.msra.mxu0 %v477
    %1039 = vmatpush.bf16.msra.mxu0 %v474
    %1040 = vmatpush.bf16.msra.mxu0 %v471
    %1041 = vmatpush.bf16.msra.mxu0 %v468
    %1042 = vmatmul.bf16.gmra.mxu0 %v1003
    %v1043 = vpop.f32.mrf.mxu0
    %v1044 = vadd.f32 0.0, %v1043
    %v1045 = vpop.f32.mrf.mxu0
    %1046 = vdwg.mxu0
    %v1049 = vrot.slane %v1031, 6
    %v1050 = vsel %vm268, %v1018, %v1049
    %v1052 = vadd.f32 %v1007, %v1050
    %v1053 = vxor.u32 %v1052, 2147483648
    %v1054 = vmul.f32 %v1053, 1.442695
    %v1055 = vpow.pop %v1054
    %v1056 = vadd.f32 %v1055, 1.0
    %v1057 = vrcp.pop %v1056
    %v1058 = vmul.f32 %v1056, %v1057
    %v1059 = vsub.f32 1.0, %v1058
    %v1060 = vmul.f32 %v1057, %v1059
    %v1061 = vadd.f32 %v1057, %v1060
    %vm1062 = vweird.f32 %v1056
    %vm1063 = vweird.f32 %v1057
    %vm1064 = vmor %vm1062, %vm1063
    %v1065 = vsel %vm1064, %v1057, %v1061
    %v1066 = vand.u32 2147483647, %v1056
    %vm1067 = vcmp.eq.f32.partialorder %v1066, 8.507059e+37
    %v1068 = vand.u32 %v1056, 2147483648
    %v1069 = vor.u32 1.1754944e-38, %v1068
    %v1070 = vsel %vm1067, %v1069, %v1065
    %v1071 = vmul.f32 1.0, %v1070
    %v1072 = vadd.f32 %v1044, %v579
    %v1073 = vmul.f32 %v1071, %v1072
    %v1075 = vrot.slane %v1007, 4
    %v1077 = vadd.f32 %v1075, %v1073
    %v1078 = vtanh.pop %v1077
    %v1079 = vsub.f32 %v1002, %v1078
    %v1081 = vrot.slane %v1071, 2
    %v1083 = vmul.f32 %v1081, %v1079
    %v1084 = vadd.f32 %v1078, %v1083
    %v1085 = vpack.c.bf16 %v1084, %v1084
    %s1086 = scalar_lea.vmem [#allocation11], 6
    %1087 = vst [vmem:[%s1086] sm:$0x1] %v1085
    %s1088 = scalar_lea.vmem [#allocation2], 42
    %v1089 = vld [vmem:[%s1088] sm:$0x3f]
    %1090 = vmatpush.bf16.msra.mxu0 %v487
    %1091 = vmatpush.bf16.msra.mxu0 %v484
    %1092 = vmatpush.bf16.msra.mxu0 %v481
    %1093 = vmatpush.bf16.msra.mxu0 %v478
    %1094 = vmatpush.bf16.msra.mxu0 %v475
    %1095 = vmatpush.bf16.msra.mxu0 %v472
    %1096 = vmatpush.bf16.msra.mxu0 %v469
    %1097 = vmatpush.bf16.msra.mxu0 %v466
    %1098 = vmatmul.bf16.gmra.mxu0 %v1085
    %v1099 = vpop.f32.mrf.mxu0
    %v1100 = vadd.f32 0.0, %v1099
    %v1101 = vpop.f32.mrf.mxu0
    %1102 = vdwg.mxu0
    %1103 = vmatpush.bf16.msra.mxu0 %v488
    %1104 = vmatpush.bf16.msra.mxu0 %v485
    %1105 = vmatpush.bf16.msra.mxu0 %v482
    %1106 = vmatpush.bf16.msra.mxu0 %v479
    %1107 = vmatpush.bf16.msra.mxu0 %v476
    %1108 = vmatpush.bf16.msra.mxu0 %v473
    %1109 = vmatpush.bf16.msra.mxu0 %v470
    %1110 = vmatpush.bf16.msra.mxu0 %v467
    %1111 = vmatmul.bf16.gmra.mxu0 %v1085
    %v1112 = vpop.f32.mrf.mxu0
    %v1113 = vadd.f32 0.0, %v1112
    %v1114 = vpop.f32.mrf.mxu0
    %1115 = vdwg.mxu0
    %1116 = vmatpush.bf16.msra.mxu0 %v489
    %1117 = vmatpush.bf16.msra.mxu0 %v486
    %1118 = vmatpush.bf16.msra.mxu0 %v483
    %1119 = vmatpush.bf16.msra.mxu0 %v480
    %1120 = vmatpush.bf16.msra.mxu0 %v477
    %1121 = vmatpush.bf16.msra.mxu0 %v474
    %1122 = vmatpush.bf16.msra.mxu0 %v471
    %1123 = vmatpush.bf16.msra.mxu0 %v468
    %1124 = vmatmul.bf16.gmra.mxu0 %v1085
    %v1125 = vpop.f32.mrf.mxu0
    %v1126 = vadd.f32 0.0, %v1125
    %v1127 = vpop.f32.mrf.mxu0
    %1128 = vdwg.mxu0
    %v1131 = vrot.slane %v1113, 6
    %v1132 = vsel %vm268, %v1100, %v1131
    %v1134 = vadd.f32 %v1089, %v1132
    %v1135 = vxor.u32 %v1134, 2147483648
    %v1136 = vmul.f32 %v1135, 1.442695
    %v1137 = vpow.pop %v1136
    %v1138 = vadd.f32 %v1137, 1.0
    %v1139 = vrcp.pop %v1138
    %v1140 = vmul.f32 %v1138, %v1139
    %v1141 = vsub.f32 1.0, %v1140
    %v1142 = vmul.f32 %v1139, %v1141
    %v1143 = vadd.f32 %v1139, %v1142
    %vm1144 = vweird.f32 %v1138
    %vm1145 = vweird.f32 %v1139
    %vm1146 = vmor %vm1144, %vm1145
    %v1147 = vsel %vm1146, %v1139, %v1143
    %v1148 = vand.u32 2147483647, %v1138
    %vm1149 = vcmp.eq.f32.partialorder %v1148, 8.507059e+37
    %v1150 = vand.u32 %v1138, 2147483648
    %v1151 = vor.u32 1.1754944e-38, %v1150
    %v1152 = vsel %vm1149, %v1151, %v1147
    %v1153 = vmul.f32 1.0, %v1152
    %v1154 = vadd.f32 %v1126, %v579
    %v1155 = vmul.f32 %v1153, %v1154
    %v1157 = vrot.slane %v1089, 4
    %v1159 = vadd.f32 %v1157, %v1155
    %v1160 = vtanh.pop %v1159
    %v1161 = vsub.f32 %v1084, %v1160
    %v1163 = vrot.slane %v1153, 2
    %v1165 = vmul.f32 %v1163, %v1161
    %v1166 = vadd.f32 %v1160, %v1165
    %v1167 = vpack.c.bf16 %v1166, %v1166
    %s1168 = scalar_lea.vmem [#allocation11], 7
    %1169 = vst [vmem:[%s1168] sm:$0x1] %v1167
    %s1170 = scalar_lea.vmem [#allocation2], 48
    %v1171 = vld [vmem:[%s1170] sm:$0x3f]
    %1172 = vmatpush.bf16.msra.mxu0 %v487
    %1173 = vmatpush.bf16.msra.mxu0 %v484
    %1174 = vmatpush.bf16.msra.mxu0 %v481
    %1175 = vmatpush.bf16.msra.mxu0 %v478
    %1176 = vmatpush.bf16.msra.mxu0 %v475
    %1177 = vmatpush.bf16.msra.mxu0 %v472
    %1178 = vmatpush.bf16.msra.mxu0 %v469
    %1179 = vmatpush.bf16.msra.mxu0 %v466
    %1180 = vmatmul.bf16.gmra.mxu0 %v1167
    %v1181 = vpop.f32.mrf.mxu0
    %v1182 = vadd.f32 0.0, %v1181
    %v1183 = vpop.f32.mrf.mxu0
    %1184 = vdwg.mxu0
    %1185 = vmatpush.bf16.msra.mxu0 %v488
    %1186 = vmatpush.bf16.msra.mxu0 %v485
    %1187 = vmatpush.bf16.msra.mxu0 %v482
    %1188 = vmatpush.bf16.msra.mxu0 %v479
    %1189 = vmatpush.bf16.msra.mxu0 %v476
    %1190 = vmatpush.bf16.msra.mxu0 %v473
    %1191 = vmatpush.bf16.msra.mxu0 %v470
    %1192 = vmatpush.bf16.msra.mxu0 %v467
    %1193 = vmatmul.bf16.gmra.mxu0 %v1167
    %v1194 = vpop.f32.mrf.mxu0
    %v1195 = vadd.f32 0.0, %v1194
    %v1196 = vpop.f32.mrf.mxu0
    %1197 = vdwg.mxu0
    %1198 = vmatpush.bf16.msra.mxu0 %v489
    %1199 = vmatpush.bf16.msra.mxu0 %v486
    %1200 = vmatpush.bf16.msra.mxu0 %v483
    %1201 = vmatpush.bf16.msra.mxu0 %v480
    %1202 = vmatpush.bf16.msra.mxu0 %v477
    %1203 = vmatpush.bf16.msra.mxu0 %v474
    %1204 = vmatpush.bf16.msra.mxu0 %v471
    %1205 = vmatpush.bf16.msra.mxu0 %v468
    %1206 = vmatmul.bf16.gmra.mxu0 %v1167
    %v1207 = vpop.f32.mrf.mxu0
    %v1208 = vadd.f32 0.0, %v1207
    %v1209 = vpop.f32.mrf.mxu0
    %1210 = vdwg.mxu0
    %v1213 = vrot.slane %v1195, 6
    %v1214 = vsel %vm268, %v1182, %v1213
    %v1216 = vadd.f32 %v1171, %v1214
    %v1217 = vxor.u32 %v1216, 2147483648
    %v1218 = vmul.f32 %v1217, 1.442695
    %v1219 = vpow.pop %v1218
    %v1220 = vadd.f32 %v1219, 1.0
    %v1221 = vrcp.pop %v1220
    %v1222 = vmul.f32 %v1220, %v1221
    %v1223 = vsub.f32 1.0, %v1222
    %v1224 = vmul.f32 %v1221, %v1223
    %v1225 = vadd.f32 %v1221, %v1224
    %vm1226 = vweird.f32 %v1220
    %vm1227 = vweird.f32 %v1221
    %vm1228 = vmor %vm1226, %vm1227
    %v1229 = vsel %vm1228, %v1221, %v1225
    %v1230 = vand.u32 2147483647, %v1220
    %vm1231 = vcmp.eq.f32.partialorder %v1230, 8.507059e+37
    %v1232 = vand.u32 %v1220, 2147483648
    %v1233 = vor.u32 1.1754944e-38, %v1232
    %v1234 = vsel %vm1231, %v1233, %v1229
    %v1235 = vmul.f32 1.0, %v1234
    %v1236 = vadd.f32 %v1208, %v579
    %v1237 = vmul.f32 %v1235, %v1236
    %v1239 = vrot.slane %v1171, 4
    %v1241 = vadd.f32 %v1239, %v1237
    %v1242 = vtanh.pop %v1241
    %v1243 = vsub.f32 %v1166, %v1242
    %v1245 = vrot.slane %v1235, 2
    %v1247 = vmul.f32 %v1245, %v1243
    %v1248 = vadd.f32 %v1242, %v1247
    %v1249 = vpack.c.bf16 %v1248, %v1248
    %s1250 = scalar_lea.vmem [#allocation11], 8
    %1251 = vst [vmem:[%s1250] sm:$0x1] %v1249
    %s1252 = scalar_lea.vmem [#allocation2], 54
    %v1253 = vld [vmem:[%s1252] sm:$0x3f]
    %1254 = vmatpush.bf16.msra.mxu0 %v487
    %1255 = vmatpush.bf16.msra.mxu0 %v484
    %1256 = vmatpush.bf16.msra.mxu0 %v481
    %1257 = vmatpush.bf16.msra.mxu0 %v478
    %1258 = vmatpush.bf16.msra.mxu0 %v475
    %1259 = vmatpush.bf16.msra.mxu0 %v472
    %1260 = vmatpush.bf16.msra.mxu0 %v469
    %1261 = vmatpush.bf16.msra.mxu0 %v466
    %1262 = vmatmul.bf16.gmra.mxu0 %v1249
    %v1263 = vpop.f32.mrf.mxu0
    %v1264 = vadd.f32 0.0, %v1263
    %v1265 = vpop.f32.mrf.mxu0
    %1266 = vdwg.mxu0
    %1267 = vmatpush.bf16.msra.mxu0 %v488
    %1268 = vmatpush.bf16.msra.mxu0 %v485
    %1269 = vmatpush.bf16.msra.mxu0 %v482
    %1270 = vmatpush.bf16.msra.mxu0 %v479
    %1271 = vmatpush.bf16.msra.mxu0 %v476
    %1272 = vmatpush.bf16.msra.mxu0 %v473
    %1273 = vmatpush.bf16.msra.mxu0 %v470
    %1274 = vmatpush.bf16.msra.mxu0 %v467
    %1275 = vmatmul.bf16.gmra.mxu0 %v1249
    %v1276 = vpop.f32.mrf.mxu0
    %v1277 = vadd.f32 0.0, %v1276
    %v1278 = vpop.f32.mrf.mxu0
    %1279 = vdwg.mxu0
    %1280 = vmatpush.bf16.msra.mxu0 %v489
    %1281 = vmatpush.bf16.msra.mxu0 %v486
    %1282 = vmatpush.bf16.msra.mxu0 %v483
    %1283 = vmatpush.bf16.msra.mxu0 %v480
    %1284 = vmatpush.bf16.msra.mxu0 %v477
    %1285 = vmatpush.bf16.msra.mxu0 %v474
    %1286 = vmatpush.bf16.msra.mxu0 %v471
    %1287 = vmatpush.bf16.msra.mxu0 %v468
    %1288 = vmatmul.bf16.gmra.mxu0 %v1249
    %v1289 = vpop.f32.mrf.mxu0
    %v1290 = vadd.f32 0.0, %v1289
    %v1291 = vpop.f32.mrf.mxu0
    %1292 = vdwg.mxu0
    %v1295 = vrot.slane %v1277, 6
    %v1296 = vsel %vm268, %v1264, %v1295
    %v1298 = vadd.f32 %v1253, %v1296
    %v1299 = vxor.u32 %v1298, 2147483648
    %v1300 = vmul.f32 %v1299, 1.442695
    %v1301 = vpow.pop %v1300
    %v1302 = vadd.f32 %v1301, 1.0
    %v1303 = vrcp.pop %v1302
    %v1304 = vmul.f32 %v1302, %v1303
    %v1305 = vsub.f32 1.0, %v1304
    %v1306 = vmul.f32 %v1303, %v1305
    %v1307 = vadd.f32 %v1303, %v1306
    %vm1308 = vweird.f32 %v1302
    %vm1309 = vweird.f32 %v1303
    %vm1310 = vmor %vm1308, %vm1309
    %v1311 = vsel %vm1310, %v1303, %v1307
    %v1312 = vand.u32 2147483647, %v1302
    %vm1313 = vcmp.eq.f32.partialorder %v1312, 8.507059e+37
    %v1314 = vand.u32 %v1302, 2147483648
    %v1315 = vor.u32 1.1754944e-38, %v1314
    %v1316 = vsel %vm1313, %v1315, %v1311
    %v1317 = vmul.f32 1.0, %v1316
    %v1318 = vadd.f32 %v1290, %v579
    %v1319 = vmul.f32 %v1317, %v1318
    %v1321 = vrot.slane %v1253, 4
    %v1323 = vadd.f32 %v1321, %v1319
    %v1324 = vtanh.pop %v1323
    %v1325 = vsub.f32 %v1248, %v1324
    %v1327 = vrot.slane %v1317, 2
    %v1329 = vmul.f32 %v1327, %v1325
    %v1330 = vadd.f32 %v1324, %v1329
    %v1331 = vpack.c.bf16 %v1330, %v1330
    %s1332 = scalar_lea.vmem [#allocation11], 9
    %1333 = vst [vmem:[%s1332] sm:$0x1] %v1331
    %s1334 = scalar_lea.vmem [#allocation2], 60
    %v1335 = vld [vmem:[%s1334] sm:$0x3f]
    %1336 = vmatpush.bf16.msra.mxu0 %v487
    %1337 = vmatpush.bf16.msra.mxu0 %v484
    %1338 = vmatpush.bf16.msra.mxu0 %v481
    %1339 = vmatpush.bf16.msra.mxu0 %v478
    %1340 = vmatpush.bf16.msra.mxu0 %v475
    %1341 = vmatpush.bf16.msra.mxu0 %v472
    %1342 = vmatpush.bf16.msra.mxu0 %v469
    %1343 = vmatpush.bf16.msra.mxu0 %v466
    %1344 = vmatmul.bf16.gmra.mxu0 %v1331
    %v1345 = vpop.f32.mrf.mxu0
    %v1346 = vadd.f32 0.0, %v1345
    %v1347 = vpop.f32.mrf.mxu0
    %1348 = vdwg.mxu0
    %1349 = vmatpush.bf16.msra.mxu0 %v488
    %1350 = vmatpush.bf16.msra.mxu0 %v485
    %1351 = vmatpush.bf16.msra.mxu0 %v482
    %1352 = vmatpush.bf16.msra.mxu0 %v479
    %1353 = vmatpush.bf16.msra.mxu0 %v476
    %1354 = vmatpush.bf16.msra.mxu0 %v473
    %1355 = vmatpush.bf16.msra.mxu0 %v470
    %1356 = vmatpush.bf16.msra.mxu0 %v467
    %1357 = vmatmul.bf16.gmra.mxu0 %v1331
    %v1358 = vpop.f32.mrf.mxu0
    %v1359 = vadd.f32 0.0, %v1358
    %v1360 = vpop.f32.mrf.mxu0
    %1361 = vdwg.mxu0
    %1362 = vmatpush.bf16.msra.mxu0 %v489
    %1363 = vmatpush.bf16.msra.mxu0 %v486
    %1364 = vmatpush.bf16.msra.mxu0 %v483
    %1365 = vmatpush.bf16.msra.mxu0 %v480
    %1366 = vmatpush.bf16.msra.mxu0 %v477
    %1367 = vmatpush.bf16.msra.mxu0 %v474
    %1368 = vmatpush.bf16.msra.mxu0 %v471
    %1369 = vmatpush.bf16.msra.mxu0 %v468
    %1370 = vmatmul.bf16.gmra.mxu0 %v1331
    %v1371 = vpop.f32.mrf.mxu0
    %v1372 = vadd.f32 0.0, %v1371
    %v1373 = vpop.f32.mrf.mxu0
    %1374 = vdwg.mxu0
    %v1377 = vrot.slane %v1359, 6
    %v1378 = vsel %vm268, %v1346, %v1377
    %v1380 = vadd.f32 %v1335, %v1378
    %v1381 = vxor.u32 %v1380, 2147483648
    %v1382 = vmul.f32 %v1381, 1.442695
    %v1383 = vpow.pop %v1382
    %v1384 = vadd.f32 %v1383, 1.0
    %v1385 = vrcp.pop %v1384
    %v1386 = vmul.f32 %v1384, %v1385
    %v1387 = vsub.f32 1.0, %v1386
    %v1388 = vmul.f32 %v1385, %v1387
    %v1389 = vadd.f32 %v1385, %v1388
    %vm1390 = vweird.f32 %v1384
    %vm1391 = vweird.f32 %v1385
    %vm1392 = vmor %vm1390, %vm1391
    %v1393 = vsel %vm1392, %v1385, %v1389
    %v1394 = vand.u32 2147483647, %v1384
    %vm1395 = vcmp.eq.f32.partialorder %v1394, 8.507059e+37
    %v1396 = vand.u32 %v1384, 2147483648
    %v1397 = vor.u32 1.1754944e-38, %v1396
    %v1398 = vsel %vm1395, %v1397, %v1393
    %v1399 = vmul.f32 1.0, %v1398
    %v1400 = vadd.f32 %v1372, %v579
    %v1401 = vmul.f32 %v1399, %v1400
    %v1403 = vrot.slane %v1335, 4
    %v1405 = vadd.f32 %v1403, %v1401
    %v1406 = vtanh.pop %v1405
    %v1407 = vsub.f32 %v1330, %v1406
    %v1409 = vrot.slane %v1399, 2
    %v1411 = vmul.f32 %v1409, %v1407
    %v1412 = vadd.f32 %v1406, %v1411
    %v1413 = vpack.c.bf16 %v1412, %v1412
    %s1414 = scalar_lea.vmem [#allocation11], 10
    %1415 = vst [vmem:[%s1414] sm:$0x1] %v1413
    %s1416 = scalar_lea.vmem [#allocation2], 66
    %v1417 = vld [vmem:[%s1416] sm:$0x3f]
    %1418 = vmatpush.bf16.msra.mxu0 %v487
    %1419 = vmatpush.bf16.msra.mxu0 %v484
    %1420 = vmatpush.bf16.msra.mxu0 %v481
    %1421 = vmatpush.bf16.msra.mxu0 %v478
    %1422 = vmatpush.bf16.msra.mxu0 %v475
    %1423 = vmatpush.bf16.msra.mxu0 %v472
    %1424 = vmatpush.bf16.msra.mxu0 %v469
    %1425 = vmatpush.bf16.msra.mxu0 %v466
    %1426 = vmatmul.bf16.gmra.mxu0 %v1413
    %v1427 = vpop.f32.mrf.mxu0
    %v1428 = vadd.f32 0.0, %v1427
    %v1429 = vpop.f32.mrf.mxu0
    %1430 = vdwg.mxu0
    %1431 = vmatpush.bf16.msra.mxu0 %v488
    %1432 = vmatpush.bf16.msra.mxu0 %v485
    %1433 = vmatpush.bf16.msra.mxu0 %v482
    %1434 = vmatpush.bf16.msra.mxu0 %v479
    %1435 = vmatpush.bf16.msra.mxu0 %v476
    %1436 = vmatpush.bf16.msra.mxu0 %v473
    %1437 = vmatpush.bf16.msra.mxu0 %v470
    %1438 = vmatpush.bf16.msra.mxu0 %v467
    %1439 = vmatmul.bf16.gmra.mxu0 %v1413
    %v1440 = vpop.f32.mrf.mxu0
    %v1441 = vadd.f32 0.0, %v1440
    %v1442 = vpop.f32.mrf.mxu0
    %1443 = vdwg.mxu0
    %1444 = vmatpush.bf16.msra.mxu0 %v489
    %1445 = vmatpush.bf16.msra.mxu0 %v486
    %1446 = vmatpush.bf16.msra.mxu0 %v483
    %1447 = vmatpush.bf16.msra.mxu0 %v480
    %1448 = vmatpush.bf16.msra.mxu0 %v477
    %1449 = vmatpush.bf16.msra.mxu0 %v474
    %1450 = vmatpush.bf16.msra.mxu0 %v471
    %1451 = vmatpush.bf16.msra.mxu0 %v468
    %1452 = vmatmul.bf16.gmra.mxu0 %v1413
    %v1453 = vpop.f32.mrf.mxu0
    %v1454 = vadd.f32 0.0, %v1453
    %v1455 = vpop.f32.mrf.mxu0
    %1456 = vdwg.mxu0
    %v1459 = vrot.slane %v1441, 6
    %v1460 = vsel %vm268, %v1428, %v1459
    %v1462 = vadd.f32 %v1417, %v1460
    %v1463 = vxor.u32 %v1462, 2147483648
    %v1464 = vmul.f32 %v1463, 1.442695
    %v1465 = vpow.pop %v1464
    %v1466 = vadd.f32 %v1465, 1.0
    %v1467 = vrcp.pop %v1466
    %v1468 = vmul.f32 %v1466, %v1467
    %v1469 = vsub.f32 1.0, %v1468
    %v1470 = vmul.f32 %v1467, %v1469
    %v1471 = vadd.f32 %v1467, %v1470
    %vm1472 = vweird.f32 %v1466
    %vm1473 = vweird.f32 %v1467
    %vm1474 = vmor %vm1472, %vm1473
    %v1475 = vsel %vm1474, %v1467, %v1471
    %v1476 = vand.u32 2147483647, %v1466
    %vm1477 = vcmp.eq.f32.partialorder %v1476, 8.507059e+37
    %v1478 = vand.u32 %v1466, 2147483648
    %v1479 = vor.u32 1.1754944e-38, %v1478
    %v1480 = vsel %vm1477, %v1479, %v1475
    %v1481 = vmul.f32 1.0, %v1480
    %v1482 = vadd.f32 %v1454, %v579
    %v1483 = vmul.f32 %v1481, %v1482
    %v1485 = vrot.slane %v1417, 4
    %v1487 = vadd.f32 %v1485, %v1483
    %v1488 = vtanh.pop %v1487
    %v1489 = vsub.f32 %v1412, %v1488
    %v1491 = vrot.slane %v1481, 2
    %v1493 = vmul.f32 %v1491, %v1489
    %v1494 = vadd.f32 %v1488, %v1493
    %v1495 = vpack.c.bf16 %v1494, %v1494
    %s1496 = scalar_lea.vmem [#allocation11], 11
    %1497 = vst [vmem:[%s1496] sm:$0x1] %v1495
    %s1498 = scalar_lea.vmem [#allocation2], 72
    %v1499 = vld [vmem:[%s1498] sm:$0x3f]
    %1500 = vmatpush.bf16.msra.mxu0 %v487
    %1501 = vmatpush.bf16.msra.mxu0 %v484
    %1502 = vmatpush.bf16.msra.mxu0 %v481
    %1503 = vmatpush.bf16.msra.mxu0 %v478
    %1504 = vmatpush.bf16.msra.mxu0 %v475
    %1505 = vmatpush.bf16.msra.mxu0 %v472
    %1506 = vmatpush.bf16.msra.mxu0 %v469
    %1507 = vmatpush.bf16.msra.mxu0 %v466
    %1508 = vmatmul.bf16.gmra.mxu0 %v1495
    %v1509 = vpop.f32.mrf.mxu0
    %v1510 = vadd.f32 0.0, %v1509
    %v1511 = vpop.f32.mrf.mxu0
    %1512 = vdwg.mxu0
    %1513 = vmatpush.bf16.msra.mxu0 %v488
    %1514 = vmatpush.bf16.msra.mxu0 %v485
    %1515 = vmatpush.bf16.msra.mxu0 %v482
    %1516 = vmatpush.bf16.msra.mxu0 %v479
    %1517 = vmatpush.bf16.msra.mxu0 %v476
    %1518 = vmatpush.bf16.msra.mxu0 %v473
    %1519 = vmatpush.bf16.msra.mxu0 %v470
    %1520 = vmatpush.bf16.msra.mxu0 %v467
    %1521 = vmatmul.bf16.gmra.mxu0 %v1495
    %v1522 = vpop.f32.mrf.mxu0
    %v1523 = vadd.f32 0.0, %v1522
    %v1524 = vpop.f32.mrf.mxu0
    %1525 = vdwg.mxu0
    %1526 = vmatpush.bf16.msra.mxu0 %v489
    %1527 = vmatpush.bf16.msra.mxu0 %v486
    %1528 = vmatpush.bf16.msra.mxu0 %v483
    %1529 = vmatpush.bf16.msra.mxu0 %v480
    %1530 = vmatpush.bf16.msra.mxu0 %v477
    %1531 = vmatpush.bf16.msra.mxu0 %v474
    %1532 = vmatpush.bf16.msra.mxu0 %v471
    %1533 = vmatpush.bf16.msra.mxu0 %v468
    %1534 = vmatmul.bf16.gmra.mxu0 %v1495
    %v1535 = vpop.f32.mrf.mxu0
    %v1536 = vadd.f32 0.0, %v1535
    %v1537 = vpop.f32.mrf.mxu0
    %1538 = vdwg.mxu0
    %v1541 = vrot.slane %v1523, 6
    %v1542 = vsel %vm268, %v1510, %v1541
    %v1544 = vadd.f32 %v1499, %v1542
    %v1545 = vxor.u32 %v1544, 2147483648
    %v1546 = vmul.f32 %v1545, 1.442695
    %v1547 = vpow.pop %v1546
    %v1548 = vadd.f32 %v1547, 1.0
    %v1549 = vrcp.pop %v1548
    %v1550 = vmul.f32 %v1548, %v1549
    %v1551 = vsub.f32 1.0, %v1550
    %v1552 = vmul.f32 %v1549, %v1551
    %v1553 = vadd.f32 %v1549, %v1552
    %vm1554 = vweird.f32 %v1548
    %vm1555 = vweird.f32 %v1549
    %vm1556 = vmor %vm1554, %vm1555
    %v1557 = vsel %vm1556, %v1549, %v1553
    %v1558 = vand.u32 2147483647, %v1548
    %vm1559 = vcmp.eq.f32.partialorder %v1558, 8.507059e+37
    %v1560 = vand.u32 %v1548, 2147483648
    %v1561 = vor.u32 1.1754944e-38, %v1560
    %v1562 = vsel %vm1559, %v1561, %v1557
    %v1563 = vmul.f32 1.0, %v1562
    %v1564 = vadd.f32 %v1536, %v579
    %v1565 = vmul.f32 %v1563, %v1564
    %v1567 = vrot.slane %v1499, 4
    %v1569 = vadd.f32 %v1567, %v1565
    %v1570 = vtanh.pop %v1569
    %v1571 = vsub.f32 %v1494, %v1570
    %v1573 = vrot.slane %v1563, 2
    %v1575 = vmul.f32 %v1573, %v1571
    %v1576 = vadd.f32 %v1570, %v1575
    %v1577 = vpack.c.bf16 %v1576, %v1576
    %s1578 = scalar_lea.vmem [#allocation11], 12
    %1579 = vst [vmem:[%s1578] sm:$0x1] %v1577
    %s1580 = scalar_lea.vmem [#allocation2], 78
    %v1581 = vld [vmem:[%s1580] sm:$0x3f]
    %1582 = vmatpush.bf16.msra.mxu0 %v487
    %1583 = vmatpush.bf16.msra.mxu0 %v484
    %1584 = vmatpush.bf16.msra.mxu0 %v481
    %1585 = vmatpush.bf16.msra.mxu0 %v478
    %1586 = vmatpush.bf16.msra.mxu0 %v475
    %1587 = vmatpush.bf16.msra.mxu0 %v472
    %1588 = vmatpush.bf16.msra.mxu0 %v469
    %1589 = vmatpush.bf16.msra.mxu0 %v466
    %1590 = vmatmul.bf16.gmra.mxu0 %v1577
    %v1591 = vpop.f32.mrf.mxu0
    %v1592 = vadd.f32 0.0, %v1591
    %v1593 = vpop.f32.mrf.mxu0
    %1594 = vdwg.mxu0
    %1595 = vmatpush.bf16.msra.mxu0 %v488
    %1596 = vmatpush.bf16.msra.mxu0 %v485
    %1597 = vmatpush.bf16.msra.mxu0 %v482
    %1598 = vmatpush.bf16.msra.mxu0 %v479
    %1599 = vmatpush.bf16.msra.mxu0 %v476
    %1600 = vmatpush.bf16.msra.mxu0 %v473
    %1601 = vmatpush.bf16.msra.mxu0 %v470
    %1602 = vmatpush.bf16.msra.mxu0 %v467
    %1603 = vmatmul.bf16.gmra.mxu0 %v1577
    %v1604 = vpop.f32.mrf.mxu0
    %v1605 = vadd.f32 0.0, %v1604
    %v1606 = vpop.f32.mrf.mxu0
    %1607 = vdwg.mxu0
    %1608 = vmatpush.bf16.msra.mxu0 %v489
    %1609 = vmatpush.bf16.msra.mxu0 %v486
    %1610 = vmatpush.bf16.msra.mxu0 %v483
    %1611 = vmatpush.bf16.msra.mxu0 %v480
    %1612 = vmatpush.bf16.msra.mxu0 %v477
    %1613 = vmatpush.bf16.msra.mxu0 %v474
    %1614 = vmatpush.bf16.msra.mxu0 %v471
    %1615 = vmatpush.bf16.msra.mxu0 %v468
    %1616 = vmatmul.bf16.gmra.mxu0 %v1577
    %v1617 = vpop.f32.mrf.mxu0
    %v1618 = vadd.f32 0.0, %v1617
    %v1619 = vpop.f32.mrf.mxu0
    %1620 = vdwg.mxu0
    %v1623 = vrot.slane %v1605, 6
    %v1624 = vsel %vm268, %v1592, %v1623
    %v1626 = vadd.f32 %v1581, %v1624
    %v1627 = vxor.u32 %v1626, 2147483648
    %v1628 = vmul.f32 %v1627, 1.442695
    %v1629 = vpow.pop %v1628
    %v1630 = vadd.f32 %v1629, 1.0
    %v1631 = vrcp.pop %v1630
    %v1632 = vmul.f32 %v1630, %v1631
    %v1633 = vsub.f32 1.0, %v1632
    %v1634 = vmul.f32 %v1631, %v1633
    %v1635 = vadd.f32 %v1631, %v1634
    %vm1636 = vweird.f32 %v1630
    %vm1637 = vweird.f32 %v1631
    %vm1638 = vmor %vm1636, %vm1637
    %v1639 = vsel %vm1638, %v1631, %v1635
    %v1640 = vand.u32 2147483647, %v1630
    %vm1641 = vcmp.eq.f32.partialorder %v1640, 8.507059e+37
    %v1642 = vand.u32 %v1630, 2147483648
    %v1643 = vor.u32 1.1754944e-38, %v1642
    %v1644 = vsel %vm1641, %v1643, %v1639
    %v1645 = vmul.f32 1.0, %v1644
    %v1646 = vadd.f32 %v1618, %v579
    %v1647 = vmul.f32 %v1645, %v1646
    %v1649 = vrot.slane %v1581, 4
    %v1651 = vadd.f32 %v1649, %v1647
    %v1652 = vtanh.pop %v1651
    %v1653 = vsub.f32 %v1576, %v1652
    %v1655 = vrot.slane %v1645, 2
    %v1657 = vmul.f32 %v1655, %v1653
    %v1658 = vadd.f32 %v1652, %v1657
    %v1659 = vpack.c.bf16 %v1658, %v1658
    %s1660 = scalar_lea.vmem [#allocation11], 13
    %1661 = vst [vmem:[%s1660] sm:$0x1] %v1659
    %s1662 = scalar_lea.vmem [#allocation2], 84
    %v1663 = vld [vmem:[%s1662] sm:$0x3f]
    %1664 = vmatpush.bf16.msra.mxu0 %v487
    %1665 = vmatpush.bf16.msra.mxu0 %v484
    %1666 = vmatpush.bf16.msra.mxu0 %v481
    %1667 = vmatpush.bf16.msra.mxu0 %v478
    %1668 = vmatpush.bf16.msra.mxu0 %v475
    %1669 = vmatpush.bf16.msra.mxu0 %v472
    %1670 = vmatpush.bf16.msra.mxu0 %v469
    %1671 = vmatpush.bf16.msra.mxu0 %v466
    %1672 = vmatmul.bf16.gmra.mxu0 %v1659
    %v1673 = vpop.f32.mrf.mxu0
    %v1674 = vadd.f32 0.0, %v1673
    %v1675 = vpop.f32.mrf.mxu0
    %1676 = vdwg.mxu0
    %1677 = vmatpush.bf16.msra.mxu0 %v488
    %1678 = vmatpush.bf16.msra.mxu0 %v485
    %1679 = vmatpush.bf16.msra.mxu0 %v482
    %1680 = vmatpush.bf16.msra.mxu0 %v479
    %1681 = vmatpush.bf16.msra.mxu0 %v476
    %1682 = vmatpush.bf16.msra.mxu0 %v473
    %1683 = vmatpush.bf16.msra.mxu0 %v470
    %1684 = vmatpush.bf16.msra.mxu0 %v467
    %1685 = vmatmul.bf16.gmra.mxu0 %v1659
    %v1686 = vpop.f32.mrf.mxu0
    %v1687 = vadd.f32 0.0, %v1686
    %v1688 = vpop.f32.mrf.mxu0
    %1689 = vdwg.mxu0
    %1690 = vmatpush.bf16.msra.mxu0 %v489
    %1691 = vmatpush.bf16.msra.mxu0 %v486
    %1692 = vmatpush.bf16.msra.mxu0 %v483
    %1693 = vmatpush.bf16.msra.mxu0 %v480
    %1694 = vmatpush.bf16.msra.mxu0 %v477
    %1695 = vmatpush.bf16.msra.mxu0 %v474
    %1696 = vmatpush.bf16.msra.mxu0 %v471
    %1697 = vmatpush.bf16.msra.mxu0 %v468
    %1698 = vmatmul.bf16.gmra.mxu0 %v1659
    %v1699 = vpop.f32.mrf.mxu0
    %v1700 = vadd.f32 0.0, %v1699
    %v1701 = vpop.f32.mrf.mxu0
    %1702 = vdwg.mxu0
    %v1705 = vrot.slane %v1687, 6
    %v1706 = vsel %vm268, %v1674, %v1705
    %v1708 = vadd.f32 %v1663, %v1706
    %v1709 = vxor.u32 %v1708, 2147483648
    %v1710 = vmul.f32 %v1709, 1.442695
    %v1711 = vpow.pop %v1710
    %v1712 = vadd.f32 %v1711, 1.0
    %v1713 = vrcp.pop %v1712
    %v1714 = vmul.f32 %v1712, %v1713
    %v1715 = vsub.f32 1.0, %v1714
    %v1716 = vmul.f32 %v1713, %v1715
    %v1717 = vadd.f32 %v1713, %v1716
    %vm1718 = vweird.f32 %v1712
    %vm1719 = vweird.f32 %v1713
    %vm1720 = vmor %vm1718, %vm1719
    %v1721 = vsel %vm1720, %v1713, %v1717
    %v1722 = vand.u32 2147483647, %v1712
    %vm1723 = vcmp.eq.f32.partialorder %v1722, 8.507059e+37
    %v1724 = vand.u32 %v1712, 2147483648
    %v1725 = vor.u32 1.1754944e-38, %v1724
    %v1726 = vsel %vm1723, %v1725, %v1721
    %v1727 = vmul.f32 1.0, %v1726
    %v1728 = vadd.f32 %v1700, %v579
    %v1729 = vmul.f32 %v1727, %v1728
    %v1731 = vrot.slane %v1663, 4
    %v1733 = vadd.f32 %v1731, %v1729
    %v1734 = vtanh.pop %v1733
    %v1735 = vsub.f32 %v1658, %v1734
    %v1737 = vrot.slane %v1727, 2
    %v1739 = vmul.f32 %v1737, %v1735
    %v1740 = vadd.f32 %v1734, %v1739
    %v1741 = vpack.c.bf16 %v1740, %v1740
    %s1742 = scalar_lea.vmem [#allocation11], 14
    %1743 = vst [vmem:[%s1742] sm:$0x1] %v1741
    %s1744 = scalar_lea.vmem [#allocation2], 90
    %v1745 = vld [vmem:[%s1744] sm:$0x3f]
    %1746 = vmatpush.bf16.msra.mxu0 %v487
    %1747 = vmatpush.bf16.msra.mxu0 %v484
    %1748 = vmatpush.bf16.msra.mxu0 %v481
    %1749 = vmatpush.bf16.msra.mxu0 %v478
    %1750 = vmatpush.bf16.msra.mxu0 %v475
    %1751 = vmatpush.bf16.msra.mxu0 %v472
    %1752 = vmatpush.bf16.msra.mxu0 %v469
    %1753 = vmatpush.bf16.msra.mxu0 %v466
    %1754 = vmatmul.bf16.gmra.mxu0 %v1741
    %v1755 = vpop.f32.mrf.mxu0
    %v1756 = vadd.f32 0.0, %v1755
    %v1757 = vpop.f32.mrf.mxu0
    %1758 = vdwg.mxu0
    %1759 = vmatpush.bf16.msra.mxu0 %v488
    %1760 = vmatpush.bf16.msra.mxu0 %v485
    %1761 = vmatpush.bf16.msra.mxu0 %v482
    %1762 = vmatpush.bf16.msra.mxu0 %v479
    %1763 = vmatpush.bf16.msra.mxu0 %v476
    %1764 = vmatpush.bf16.msra.mxu0 %v473
    %1765 = vmatpush.bf16.msra.mxu0 %v470
    %1766 = vmatpush.bf16.msra.mxu0 %v467
    %1767 = vmatmul.bf16.gmra.mxu0 %v1741
    %v1768 = vpop.f32.mrf.mxu0
    %v1769 = vadd.f32 0.0, %v1768
    %v1770 = vpop.f32.mrf.mxu0
    %1771 = vdwg.mxu0
    %1772 = vmatpush.bf16.msra.mxu0 %v489
    %1773 = vmatpush.bf16.msra.mxu0 %v486
    %1774 = vmatpush.bf16.msra.mxu0 %v483
    %1775 = vmatpush.bf16.msra.mxu0 %v480
    %1776 = vmatpush.bf16.msra.mxu0 %v477
    %1777 = vmatpush.bf16.msra.mxu0 %v474
    %1778 = vmatpush.bf16.msra.mxu0 %v471
    %1779 = vmatpush.bf16.msra.mxu0 %v468
    %1780 = vmatmul.bf16.gmra.mxu0 %v1741
    %v1781 = vpop.f32.mrf.mxu0
    %v1782 = vadd.f32 0.0, %v1781
    %v1783 = vpop.f32.mrf.mxu0
    %1784 = vdwg.mxu0
    %v1787 = vrot.slane %v1769, 6
    %v1788 = vsel %vm268, %v1756, %v1787
    %v1790 = vadd.f32 %v1745, %v1788
    %v1791 = vxor.u32 %v1790, 2147483648
    %v1792 = vmul.f32 %v1791, 1.442695
    %v1793 = vpow.pop %v1792
    %v1794 = vadd.f32 %v1793, 1.0
    %v1795 = vrcp.pop %v1794
    %v1796 = vmul.f32 %v1794, %v1795
    %v1797 = vsub.f32 1.0, %v1796
    %v1798 = vmul.f32 %v1795, %v1797
    %v1799 = vadd.f32 %v1795, %v1798
    %vm1800 = vweird.f32 %v1794
    %vm1801 = vweird.f32 %v1795
    %vm1802 = vmor %vm1800, %vm1801
    %v1803 = vsel %vm1802, %v1795, %v1799
    %v1804 = vand.u32 2147483647, %v1794
    %vm1805 = vcmp.eq.f32.partialorder %v1804, 8.507059e+37
    %v1806 = vand.u32 %v1794, 2147483648
    %v1807 = vor.u32 1.1754944e-38, %v1806
    %v1808 = vsel %vm1805, %v1807, %v1803
    %v1809 = vmul.f32 1.0, %v1808
    %v1810 = vadd.f32 %v1782, %v579
    %v1811 = vmul.f32 %v1809, %v1810
    %v1813 = vrot.slane %v1745, 4
    %v1815 = vadd.f32 %v1813, %v1811
    %v1816 = vtanh.pop %v1815
    %v1817 = vsub.f32 %v1740, %v1816
    %v1819 = vrot.slane %v1809, 2
    %v1821 = vmul.f32 %v1819, %v1817
    %v1822 = vadd.f32 %v1816, %v1821
    %v1823 = vpack.c.bf16 %v1822, %v1822
    %s1824 = scalar_lea.vmem [#allocation11], 15
    %1825 = vst [vmem:[%s1824] sm:$0x1] %v1823
    %1826 = vst [vmem:[#allocation12] sm:$0x3] %v1822
    // Predicated region
    $region42: #{tpu_custom_call.1} parent=1 // pred_check
      _
    $region43: #{tpu_custom_call.1} parent=1 // pred_check_branch
      %1828 = sbr.rel (0) target = $region45
    $region44: #{tpu_custom_call.1} parent=1 // pred_region
      %1830 = vsyncadd [#allocation5], 0
      %s1831 = sshll.u32 [#allocation11], 4
      %s1832 = int_to_ptr.vmem [resolvable:$true] %s1831
      %s1833 = sshll.u32 %s5, 4
      %s1834 = int_to_ptr.hbm [resolvable:$true] %s1833
      %1839 = dma.vmem_to_hbm [thread:$0]  %s1832, 256, %s1834, [#allocation5], 16, 16, 1
    $region45: #{tpu_custom_call.1} parent=1 // pred_fallthru
      _
    // Predicated region
    $region46: #{tpu_custom_call.1} parent=1 // pred_check
      _
    $region47: #{tpu_custom_call.1} parent=1 // pred_check_branch
      %1841 = sbr.rel (0) target = $region49
    $region48: #{tpu_custom_call.1} parent=1 // pred_region
      %1843 = vsyncadd [#allocation13], 0
      %s1845 = sshll.u32 [#allocation12], 4
      %s1846 = int_to_ptr.vmem [resolvable:$true] %s1845
      %s1847 = sshll.u32 %s6, 4
      %s1848 = int_to_ptr.hbm [resolvable:$true] %s1847
      %1850 = dma.vmem_to_hbm [thread:$0]  %s1846, 32, %s1848, [#allocation13]
    $region49: #{tpu_custom_call.1} parent=1 // pred_fallthru
      _
    // Predicated region
    $region50: #{tpu_custom_call.1} parent=1 // pred_check
      _
    $region51: #{tpu_custom_call.1} parent=1 // pred_check_branch
      %1852 = sbr.rel (0) target = $region53
    $region52: #{tpu_custom_call.1} parent=1 // pred_region
      %1854 = dma.done [#allocation5], 256
    $region53: #{tpu_custom_call.1} parent=1 // pred_fallthru
      _
    // Predicated region
    $region54: #{tpu_custom_call.1} parent=1 // pred_check
      _
    $region55: #{tpu_custom_call.1} parent=1 // pred_check_branch
      %1856 = sbr.rel (0) target = $region57
    $region56: #{tpu_custom_call.1} parent=1 // pred_region
      %1858 = dma.done [#allocation13], 32
    $region57: #{tpu_custom_call.1} parent=1 // pred_fallthru
      _
    %1859 = vsyncpa [#allocation4], 1
    %1860 = vsyncpa [#allocation7], 1
    %1861 = vsyncpa [#allocation10], 1
    %1862 = vsyncpa [#allocation5], 1
    %1863 = vsyncpa [#allocation13], 1

// kernel: tpu_custom_call.1
$region0: #{tpu_custom_call.1}
  #allocation0 [shape = 'u32[]', space=smem, size = 0x4, offset = 0x4, fixed_abs, tag = 'smem constant byte address 0x4 - core index']
  #allocation1 [shape = 'u32[72,128]{1,0:T(1,128)}', space=vmem, size = 0x9000, scoped, tag = 'internal scratch']
  #allocation2 [shape = 'f32[16,2,384]{2,1,0:T(2,128)}', space=vmem, size = 0xc000, scoped, tag = 'scratch operand']
  %s0 = inlined_call_operand.hbm [shape: f32[16,2,16], index: 0, kind: input, shape index: {}]
  %s1 = inlined_call_operand.hbm [shape: bf16[16,384], index: 1, kind: input, shape index: {}]
  %s2 = inlined_call_operand.hbm [shape: bf16[128,384], index: 2, kind: input, shape index: {}]
  %s3 = inlined_call_operand.hbm [shape: f32[1,384], index: 3, kind: input, shape index: {}]
  %s4 = inlined_call_operand.vmem [shape: f32[1,128], index: 4, kind: input, shape index: {}]
  %s5 = inlined_call_operand.hbm [shape: bf16[16,2,128], index: 5, kind: output, shape index: {0}]
  %s6 = inlined_call_operand.hbm [shape: f32[2,128], index: 6, kind: output, shape index: {1}]
  %7 = xla_tuple %s5, %s6
  %s8 = sld [smem:[#allocation0]]
  $region58: #{tpu_custom_call.1} parent=0
    _
  %s10 = ssub.s32 1, %s8
  %s11 = scalar_select 0, %s10, %s8
  $region1: #{tpu_custom_call.1} parent=0
    #allocation3 [shape = 'u8[16384]{0}', space=vmem, size = 0x4000, scoped, tag = 'input window, operand 0, single buffered']
    #allocation4 [shape = 's32[1]{0}', space=sflag, size = 0x4, scoped, tag = 'scoped memory for tpu_custom_call.1']
    #allocation5 [shape = 's32[1]{0}', space=sflag, size = 0x4, scoped, tag = 'scoped memory for tpu_custom_call.1']
    #allocation6 [shape = 'u8[12288]{0}', space=vmem, size = 0x3000, scoped, tag = 'input window, operand 1, single buffered']
    #allocation7 [shape = 's32[1]{0}', space=sflag, size = 0x4, scoped, tag = 'scoped memory for tpu_custom_call.1']
    #allocation8 [shape = 'u8[98304]{0}', space=vmem, size = 0x18000, scoped, tag = 'input window, operand 2, single buffered']
    #allocation9 [shape = 'u8[1536]{0}', space=vmem, size = 0x800, scoped, tag = 'input window, operand 3, single buffered']
    #allocation10 [shape = 's32[1]{0}', space=sflag, size = 0x4, scoped, tag = 'scoped memory for tpu_custom_call.1']
    #allocation11 [shape = 'u8[8192]{0}', space=vmem, size = 0x2000, scoped, tag = 'output window, operand 0, single buffered']
    #allocation12 [shape = 'u8[1024]{0}', space=vmem, size = 0x400, scoped, tag = 'output window, operand 1, single buffered']
    #allocation13 [shape = 's32[1]{0}', space=sflag, size = 0x4, scoped, tag = 'scoped memory for tpu_custom_call.1']
    %12 = vsyncpa [#allocation4], 0
    %13 = vsyncpa [#allocation7], 0
    %14 = vsyncpa [#allocation10], 0
    %15 = vsyncpa [#allocation5], 0
    %16 = vsyncpa [#allocation13], 0
    // Predicated region
    $region2: #{tpu_custom_call.1} parent=1 // pred_check
      _
    $region3: #{tpu_custom_call.1} parent=1 // pred_check_branch
      %18 = sbr.rel (0) target = $region5
    $region4: #{tpu_custom_call.1} parent=1 // pred_region
      %20 = vsyncadd [#allocation4], 0
      %s21 = sshll.u32 %s0, 4
      %s22 = int_to_ptr.hbm [resolvable:$true] %s21
      %s23 = sshll.u32 [#allocation3], 4
      %s24 = int_to_ptr.vmem [resolvable:$true] %s23
      %29 = dma.hbm_to_vmem [thread:$0]  %s22, 512, %s24, [#allocation4], 32, 32, 2
    $region5: #{tpu_custom_call.1} parent=1 // pred_fallthru
      _
    // Predicated region
    $region6: #{tpu_custom_call.1} parent=1 // pred_check
      _
    $region7: #{tpu_custom_call.1} parent=1 // pred_check_branch
      %31 = sbr.rel (0) target = $region9
    $region8: #{tpu_custom_call.1} parent=1 // pred_region
      %33 = vsyncadd [#allocation7], 0
      %s34 = sshll.u32 %s1, 4
      %s35 = int_to_ptr.hbm [resolvable:$true] %s34
      %s36 = sshll.u32 [#allocation6], 4
      %s37 = int_to_ptr.vmem [resolvable:$true] %s36
      %42 = dma.hbm_to_vmem [thread:$0]  %s35, 384, %s37, [#allocation7], 192, 192, 12
    $region9: #{tpu_custom_call.1} parent=1 // pred_fallthru
      _
    // Predicated region
    $region10: #{tpu_custom_call.1} parent=1 // pred_check
      _
    $region11: #{tpu_custom_call.1} parent=1 // pred_check_branch
      %44 = sbr.rel (0) target = $region13
    $region12: #{tpu_custom_call.1} parent=1 // pred_region
      %46 = vsyncadd [#allocation7], 0
      %s47 = sshll.u32 %s2, 4
      %s48 = int_to_ptr.hbm [resolvable:$true] %s47
      %s49 = sshll.u32 [#allocation8], 4
      %s50 = int_to_ptr.vmem [resolvable:$true] %s49
      %55 = dma.hbm_to_vmem [thread:$0]  %s48, 3072, %s50, [#allocation7], 192, 192, 12
    $region13: #{tpu_custom_call.1} parent=1 // pred_fallthru
      _
    // Predicated region
    $region14: #{tpu_custom_call.1} parent=1 // pred_check
      _
    $region15: #{tpu_custom_call.1} parent=1 // pred_check_branch
      %57 = sbr.rel (0) target = $region17
    $region16: #{tpu_custom_call.1} parent=1 // pred_region
      %59 = vsyncadd [#allocation10], 0
      %s61 = sshll.u32 %s3, 4
      %s62 = int_to_ptr.hbm [resolvable:$true] %s61
      %s63 = sshll.u32 [#allocation9], 4
      %s64 = int_to_ptr.vmem [resolvable:$true] %s63
      %66 = dma.hbm_to_vmem [thread:$0]  %s62, 48, %s64, [#allocation10]
    $region17: #{tpu_custom_call.1} parent=1 // pred_fallthru
      _
    // Predicated region
    $region18: #{tpu_custom_call.1} parent=1 // pred_check
      _
    $region19: #{tpu_custom_call.1} parent=1 // pred_check_branch
      %68 = sbr.rel (0) target = $region21
    $region20: #{tpu_custom_call.1} parent=1 // pred_region
      _
    $region21: #{tpu_custom_call.1} parent=1 // pred_fallthru
      _
    // Predicated region
    $region22: #{tpu_custom_call.1} parent=1 // pred_check
      _
    $region23: #{tpu_custom_call.1} parent=1 // pred_check_branch
      %70 = sbr.rel (0) target = $region25
    $region24: #{tpu_custom_call.1} parent=1 // pred_region
      %72 = dma.done [#allocation4], 512
    $region25: #{tpu_custom_call.1} parent=1 // pred_fallthru
      _
    // Predicated region
    $region26: #{tpu_custom_call.1} parent=1 // pred_check
      _
    $region27: #{tpu_custom_call.1} parent=1 // pred_check_branch
      %74 = sbr.rel (0) target = $region29
    $region28: #{tpu_custom_call.1} parent=1 // pred_region
      %76 = dma.done [#allocation7], 384
    $region29: #{tpu_custom_call.1} parent=1 // pred_fallthru
      _
    // Predicated region
    $region30: #{tpu_custom_call.1} parent=1 // pred_check
      _
    $region31: #{tpu_custom_call.1} parent=1 // pred_check_branch
      %78 = sbr.rel (0) target = $region33
    $region32: #{tpu_custom_call.1} parent=1 // pred_region
      %80 = dma.done [#allocation7], 3072
    $region33: #{tpu_custom_call.1} parent=1 // pred_fallthru
      _
    // Predicated region
    $region34: #{tpu_custom_call.1} parent=1 // pred_check
      _
    $region35: #{tpu_custom_call.1} parent=1 // pred_check_branch
      %82 = sbr.rel (0) target = $region37
    $region36: #{tpu_custom_call.1} parent=1 // pred_region
      %84 = dma.done [#allocation10], 48
    $region37: #{tpu_custom_call.1} parent=1 // pred_fallthru
      _
    %p86 = scmp.eq.s32.totalorder 0, 0
    // Predicated region
    $region38: #{tpu_custom_call.1} parent=1 // pred_check
      %p87 = pneg %p86
    $region39: #{tpu_custom_call.1} parent=1 // pred_check_branch
      %89 = sbr.rel (%p87) target = $region41
    $region40: #{tpu_custom_call.1} parent=1 // pred_region
      %90 = vst [vmem:[#allocation12] sm:$0x3] 0.0
    $region41: #{tpu_custom_call.1} parent=1 // pred_fallthru
      _
    %v91 = vld [vmem:[#allocation6] sm:$0xff]
    %v92 = vld [vmem:[#allocation6 + $0x8] sm:$0xf]
    %v93 = vld [vmem:[#allocation6 + $0xc] sm:$0xff]
    %v94 = vld [vmem:[#allocation6 + $0x14] sm:$0xf]
    %v95 = vld [vmem:[#allocation3] sm:$0x3]
    %v96 = vld [vmem:[#allocation3 + $0x2] sm:$0x3]
    %v97 = vld [vmem:[#allocation3 + $0x4] sm:$0x3]
    %v98 = vld [vmem:[#allocation3 + $0x6] sm:$0x3]
    %v99 = vld [vmem:[#allocation3 + $0x8] sm:$0x3]
    %v100 = vld [vmem:[#allocation3 + $0xa] sm:$0x3]
    %v101 = vld [vmem:[#allocation3 + $0xc] sm:$0x3]
    %v102 = vld [vmem:[#allocation3 + $0xe] sm:$0x3]
    %v103 = vld [vmem:[#allocation3 + $0x10] sm:$0x3]
    %v104 = vld [vmem:[#allocation3 + $0x12] sm:$0x3]
    %v105 = vld [vmem:[#allocation3 + $0x14] sm:$0x3]
    %v106 = vld [vmem:[#allocation3 + $0x16] sm:$0x3]
    %v107 = vld [vmem:[#allocation3 + $0x18] sm:$0x3]
    %v108 = vld [vmem:[#allocation3 + $0x1a] sm:$0x3]
    %v109 = vld [vmem:[#allocation3 + $0x1c] sm:$0x3]
    %v110 = vld [vmem:[#allocation3 + $0x1e] sm:$0x3]
    %127 = vst [vmem:[#allocation1] ss:$4 sm:$0xff] %v95
    %s128 = scalar_lea.vmem [#allocation1], 1
    %129 = vst [vmem:[%s128] ss:$4 sm:$0xff] %v96
    %s130 = scalar_lea.vmem [#allocation1], 2
    %131 = vst [vmem:[%s130] ss:$4 sm:$0xff] %v97
    %s132 = scalar_lea.vmem [#allocation1], 3
    %133 = vst [vmem:[%s132] ss:$4 sm:$0xff] %v98
    %s134 = scalar_lea.vmem [#allocation1], 32
    %135 = vst [vmem:[%s134] ss:$4 sm:$0xff] %v99
    %s136 = scalar_lea.vmem [#allocation1], 33
    %137 = vst [vmem:[%s136] ss:$4 sm:$0xff] %v100
    %s138 = scalar_lea.vmem [#allocation1], 34
    %139 = vst [vmem:[%s138] ss:$4 sm:$0xff] %v101
    %s140 = scalar_lea.vmem [#allocation1], 35
    %141 = vst [vmem:[%s140] ss:$4 sm:$0xff] %v102
    %v142 = vld.sshfl [vmem:[#allocation1] sm:$0xff pattern:$0x73625140]
    %v143 = vld.sshfl [vmem:[#allocation1 + $0x20] sm:$0xff pattern:$0x73625140]
    %144 = vst [vmem:[#allocation1] ss:$4 sm:$0xff] %v103
    %145 = vst [vmem:[%s128] ss:$4 sm:$0xff] %v104
    %146 = vst [vmem:[%s130] ss:$4 sm:$0xff] %v105
    %147 = vst [vmem:[%s132] ss:$4 sm:$0xff] %v106
    %148 = vst [vmem:[%s134] ss:$4 sm:$0xff] %v107
    %149 = vst [vmem:[%s136] ss:$4 sm:$0xff] %v108
    %150 = vst [vmem:[%s138] ss:$4 sm:$0xff] %v109
    %151 = vst [vmem:[%s140] ss:$4 sm:$0xff] %v110
    %v152 = vld.sshfl [vmem:[#allocation1] sm:$0xff pattern:$0x73625140]
    %v153 = vld.sshfl [vmem:[#allocation1 + $0x20] sm:$0xff pattern:$0x73625140]
    %v158 = vpack.c.bf16 %v143, %v142
    %v159 = vpack.c.bf16 %v153, %v152
    %v160 = vld [vmem:[#allocation9] sm:$0x7]
    %v162 = vperm.slane %v160, 0
    %v163 = vperm.slane %v160, 1
    %v164 = vperm.slane %v160, 2
    %v172 = vunpack.c.l.b16 %v91
    %v173 = vunpack.c.h.b16 %v91
    %v174 = vunpack.c.l.b16 %v92
    %v175 = vunpack.c.l.b16 %v93
    %v176 = vunpack.c.h.b16 %v93
    %v177 = vunpack.c.l.b16 %v94
    %v178 = vpack.c.b16 %v175, %v172
    %v179 = vpack.c.b16 %v176, %v173
    %v180 = vpack.c.b16 %v177, %v174
    %vm184 = vcmask 130048
    %v186 = vsel %vm184, %v158, 0
    %v189 = vsel %vm184, %v159, 0
    %191 = vmatpush.bf16.msra.mxu0 0
    %192 = vmatpush.bf16.msra.mxu0 0
    %193 = vmatpush.bf16.msra.mxu0 0
    %194 = vmatpush.bf16.msra.mxu0 0
    %195 = vmatpush.bf16.msra.mxu0 0
    %196 = vmatpush.bf16.msra.mxu0 0
    %197 = vmatpush.bf16.msra.mxu0 0
    %198 = vmatpush.bf16.msra.mxu0 %v178
    %199 = vmatmul.bf16.gmra.mxu0 %v186
    %v200 = vpop.f32.mrf.mxu0
    %v201 = vadd.f32 %v162, %v200
    %v202 = vpop.f32.mrf.mxu0
    %v203 = vadd.f32 %v162, %v202
    %204 = vmatmul.bf16.gmra.mxu0 %v189
    %v205 = vpop.f32.mrf.mxu0
    %v206 = vadd.f32 %v162, %v205
    %v207 = vpop.f32.mrf.mxu0
    %v208 = vadd.f32 %v162, %v207
    %209 = vdwg.mxu0
    %210 = vmatpush.bf16.msra.mxu0 0
    %211 = vmatpush.bf16.msra.mxu0 0
    %212 = vmatpush.bf16.msra.mxu0 0
    %213 = vmatpush.bf16.msra.mxu0 0
    %214 = vmatpush.bf16.msra.mxu0 0
    %215 = vmatpush.bf16.msra.mxu0 0
    %216 = vmatpush.bf16.msra.mxu0 0
    %217 = vmatpush.bf16.msra.mxu0 %v179
    %218 = vmatmul.bf16.gmra.mxu0 %v186
    %v219 = vpop.f32.mrf.mxu0
    %v220 = vadd.f32 %v163, %v219
    %v221 = vpop.f32.mrf.mxu0
    %v222 = vadd.f32 %v163, %v221
    %223 = vmatmul.bf16.gmra.mxu0 %v189
    %v224 = vpop.f32.mrf.mxu0
    %v225 = vadd.f32 %v163, %v224
    %v226 = vpop.f32.mrf.mxu0
    %v227 = vadd.f32 %v163, %v226
    %228 = vdwg.mxu0
    %229 = vmatpush.bf16.msra.mxu0 0
    %230 = vmatpush.bf16.msra.mxu0 0
    %231 = vmatpush.bf16.msra.mxu0 0
    %232 = vmatpush.bf16.msra.mxu0 0
    %233 = vmatpush.bf16.msra.mxu0 0
    %234 = vmatpush.bf16.msra.mxu0 0
    %235 = vmatpush.bf16.msra.mxu0 0
    %236 = vmatpush.bf16.msra.mxu0 %v180
    %237 = vmatmul.bf16.gmra.mxu0 %v186
    %v238 = vpop.f32.mrf.mxu0
    %v239 = vadd.f32 %v164, %v238
    %v240 = vpop.f32.mrf.mxu0
    %v241 = vadd.f32 %v164, %v240
    %242 = vmatmul.bf16.gmra.mxu0 %v189
    %v243 = vpop.f32.mrf.mxu0
    %v244 = vadd.f32 %v164, %v243
    %v245 = vpop.f32.mrf.mxu0
    %v246 = vadd.f32 %v164, %v245
    %247 = vdwg.mxu0
    %v260 = vrot.slane %v220, 6
    %v261 = vrot.slane %v239, 4
    %v262 = vrot.slane %v222, 6
    %v263 = vrot.slane %v241, 4
    %v264 = vrot.slane %v225, 6
    %v265 = vrot.slane %v244, 4
    %v266 = vrot.slane %v227, 6
    %v267 = vrot.slane %v246, 4
    %vm268 = vcmask 1041408
    %v269 = vsel %vm268, %v201, %v260
    %vm270 = vcmask 1043456
    %v271 = vsel %vm270, %v269, %v261
    %vm272 = vcmask 1043458
    %v273 = vsel %vm272, %v201, %v260
    %vm274 = vcmask 1045506
    %v275 = vsel %vm274, %v273, %v261
    %v276 = vrot.slane %v275, 2
    %vm277 = vcmask 1045508
    %v278 = vsel %vm277, %v201, %v260
    %v279 = vsel %vm270, %v261, %v278
    %v280 = vrot.slane %v279, 4
    %vm281 = vcmask 1045504
    %v282 = vsel %vm281, %v260, %v201
    %v283 = vsel %vm274, %v261, %v282
    %v284 = vrot.slane %v283, 6
    %v285 = vsel %vm268, %v203, %v262
    %v286 = vsel %vm270, %v285, %v263
    %v287 = vsel %vm272, %v203, %v262
    %v288 = vsel %vm274, %v287, %v263
    %v289 = vrot.slane %v288, 2
    %v290 = vsel %vm277, %v203, %v262
    %v291 = vsel %vm270, %v263, %v290
    %v292 = vrot.slane %v291, 4
    %v293 = vsel %vm281, %v262, %v203
    %v294 = vsel %vm274, %v263, %v293
    %v295 = vrot.slane %v294, 6
    %v296 = vsel %vm268, %v206, %v264
    %v297 = vsel %vm270, %v296, %v265
    %v298 = vsel %vm272, %v206, %v264
    %v299 = vsel %vm274, %v298, %v265
    %v300 = vrot.slane %v299, 2
    %v301 = vsel %vm277, %v206, %v264
    %v302 = vsel %vm270, %v265, %v301
    %v303 = vrot.slane %v302, 4
    %v304 = vsel %vm281, %v264, %v206
    %v305 = vsel %vm274, %v265, %v304
    %v306 = vrot.slane %v305, 6
    %v307 = vsel %vm268, %v208, %v266
    %v308 = vsel %vm270, %v307, %v267
    %v309 = vsel %vm272, %v208, %v266
    %v310 = vsel %vm274, %v309, %v267
    %v311 = vrot.slane %v310, 2
    %v312 = vsel %vm277, %v208, %v266
    %v313 = vsel %vm270, %v267, %v312
    %v314 = vrot.slane %v313, 4
    %v315 = vsel %vm281, %v266, %v208
    %v316 = vsel %vm274, %v267, %v315
    %v317 = vrot.slane %v316, 6
    %334 = vst [vmem:[#allocation2] sm:$0x3f] %v271
    %335 = vst [vmem:[#allocation2 + $0x6] sm:$0x3f] %v276
    %336 = vst [vmem:[#allocation2 + $0xc] sm:$0x3f] %v280
    %337 = vst [vmem:[#allocation2 + $0x12] sm:$0x3f] %v284
    %338 = vst [vmem:[#allocation2 + $0x18] sm:$0x3f] %v286
    %339 = vst [vmem:[#allocation2 + $0x1e] sm:$0x3f] %v289
    %340 = vst [vmem:[#allocation2 + $0x24] sm:$0x3f] %v292
    %341 = vst [vmem:[#allocation2 + $0x2a] sm:$0x3f] %v295
    %342 = vst [vmem:[#allocation2 + $0x30] sm:$0x3f] %v297
    %343 = vst [vmem:[#allocation2 + $0x36] sm:$0x3f] %v300
    %344 = vst [vmem:[#allocation2 + $0x3c] sm:$0x3f] %v303
    %345 = vst [vmem:[#allocation2 + $0x42] sm:$0x3f] %v306
    %346 = vst [vmem:[#allocation2 + $0x48] sm:$0x3f] %v308
    %347 = vst [vmem:[#allocation2 + $0x4e] sm:$0x3f] %v311
    %348 = vst [vmem:[#allocation2 + $0x54] sm:$0x3f] %v314
    %349 = vst [vmem:[#allocation2 + $0x5a] sm:$0x3f] %v317
    %v350 = vld [vmem:[#allocation8] sm:$0xff]
    %v351 = vld [vmem:[#allocation8 + $0x8] sm:$0xf]
    %v352 = vld [vmem:[#allocation8 + $0xc] sm:$0xff]
    %v353 = vld [vmem:[#allocation8 + $0x14] sm:$0xf]
    %v354 = vld [vmem:[#allocation8 + $0x18] sm:$0xff]
    %v355 = vld [vmem:[#allocation8 + $0x20] sm:$0xf]
    %v356 = vld [vmem:[#allocation8 + $0x24] sm:$0xff]
    %v357 = vld [vmem:[#allocation8 + $0x2c] sm:$0xf]
    %v358 = vld [vmem:[#allocation8 + $0x30] sm:$0xff]
    %v359 = vld [vmem:[#allocation8 + $0x38] sm:$0xf]
    %v360 = vld [vmem:[#allocation8 + $0x3c] sm:$0xff]
    %v361 = vld [vmem:[#allocation8 + $0x44] sm:$0xf]
    %v362 = vld [vmem:[#allocation8 + $0x48] sm:$0xff]
    %v363 = vld [vmem:[#allocation8 + $0x50] sm:$0xf]
    %v364 = vld [vmem:[#allocation8 + $0x54] sm:$0xff]
    %v365 = vld [vmem:[#allocation8 + $0x5c] sm:$0xf]
    %v366 = vld [vmem:[#allocation8 + $0x60] sm:$0xff]
    %v367 = vld [vmem:[#allocation8 + $0x68] sm:$0xf]
    %v368 = vld [vmem:[#allocation8 + $0x6c] sm:$0xff]
    %v369 = vld [vmem:[#allocation8 + $0x74] sm:$0xf]
    %v370 = vld [vmem:[#allocation8 + $0x78] sm:$0xff]
    %v371 = vld [vmem:[#allocation8 + $0x80] sm:$0xf]
    %v372 = vld [vmem:[#allocation8 + $0x84] sm:$0xff]
    %v373 = vld [vmem:[#allocation8 + $0x8c] sm:$0xf]
    %v374 = vld [vmem:[#allocation8 + $0x90] sm:$0xff]
    %v375 = vld [vmem:[#allocation8 + $0x98] sm:$0xf]
    %v376 = vld [vmem:[#allocation8 + $0x9c] sm:$0xff]
    %v377 = vld [vmem:[#allocation8 + $0xa4] sm:$0xf]
    %v378 = vld [vmem:[#allocation8 + $0xa8] sm:$0xff]
    %v379 = vld [vmem:[#allocation8 + $0xb0] sm:$0xf]
    %v380 = vld [vmem:[#allocation8 + $0xb4] sm:$0xff]
    %v381 = vld [vmem:[#allocation8 + $0xbc] sm:$0xf]
    %v382 = vld [vmem:[%s4] sm:$0x1]
    %v383 = vld [vmem:[#allocation12] sm:$0x3]
    %v384 = vld [vmem:[#allocation2] sm:$0x3f]
    %v385 = vpack.c.bf16 %v383, %v383
    %v418 = vunpack.c.l.b16 %v350
    %v419 = vunpack.c.h.b16 %v350
    %v420 = vunpack.c.l.b16 %v351
    %v421 = vunpack.c.l.b16 %v352
    %v422 = vunpack.c.h.b16 %v352
    %v423 = vunpack.c.l.b16 %v353
    %v424 = vunpack.c.l.b16 %v354
    %v425 = vunpack.c.h.b16 %v354
    %v426 = vunpack.c.l.b16 %v355
    %v427 = vunpack.c.l.b16 %v356
    %v428 = vunpack.c.h.b16 %v356
    %v429 = vunpack.c.l.b16 %v357
    %v430 = vunpack.c.l.b16 %v358
    %v431 = vunpack.c.h.b16 %v358
    %v432 = vunpack.c.l.b16 %v359
    %v433 = vunpack.c.l.b16 %v360
    %v434 = vunpack.c.h.b16 %v360
    %v435 = vunpack.c.l.b16 %v361
    %v436 = vunpack.c.l.b16 %v362
    %v437 = vunpack.c.h.b16 %v362
    %v438 = vunpack.c.l.b16 %v363
    %v439 = vunpack.c.l.b16 %v364
    %v440 = vunpack.c.h.b16 %v364
    %v441 = vunpack.c.l.b16 %v365
    %v442 = vunpack.c.l.b16 %v366
    %v443 = vunpack.c.h.b16 %v366
    %v444 = vunpack.c.l.b16 %v367
    %v445 = vunpack.c.l.b16 %v368
    %v446 = vunpack.c.h.b16 %v368
    %v447 = vunpack.c.l.b16 %v369
    %v448 = vunpack.c.l.b16 %v370
    %v449 = vunpack.c.h.b16 %v370
    %v450 = vunpack.c.l.b16 %v371
    %v451 = vunpack.c.l.b16 %v372
    %v452 = vunpack.c.h.b16 %v372
    %v453 = vunpack.c.l.b16 %v373
    %v454 = vunpack.c.l.b16 %v374
    %v455 = vunpack.c.h.b16 %v374
    %v456 = vunpack.c.l.b16 %v375
    %v457 = vunpack.c.l.b16 %v376
    %v458 = vunpack.c.h.b16 %v376
    %v459 = vunpack.c.l.b16 %v377
    %v460 = vunpack.c.l.b16 %v378
    %v461 = vunpack.c.h.b16 %v378
    %v462 = vunpack.c.l.b16 %v379
    %v463 = vunpack.c.l.b16 %v380
    %v464 = vunpack.c.h.b16 %v380
    %v465 = vunpack.c.l.b16 %v381
    %v466 = vpack.c.b16 %v421, %v418
    %v467 = vpack.c.b16 %v422, %v419
    %v468 = vpack.c.b16 %v423, %v420
    %v469 = vpack.c.b16 %v427, %v424
    %v470 = vpack.c.b16 %v428, %v425
    %v471 = vpack.c.b16 %v429, %v426
    %v472 = vpack.c.b16 %v433, %v430
    %v473 = vpack.c.b16 %v434, %v431
    %v474 = vpack.c.b16 %v435, %v432
    %v475 = vpack.c.b16 %v439, %v436
    %v476 = vpack.c.b16 %v440, %v437
    %v477 = vpack.c.b16 %v441, %v438
    %v478 = vpack.c.b16 %v445, %v442
    %v479 = vpack.c.b16 %v446, %v443
    %v480 = vpack.c.b16 %v447, %v444
    %v481 = vpack.c.b16 %v451, %v448
    %v482 = vpack.c.b16 %v452, %v449
    %v483 = vpack.c.b16 %v453, %v450
    %v484 = vpack.c.b16 %v457, %v454
    %v485 = vpack.c.b16 %v458, %v455
    %v486 = vpack.c.b16 %v459, %v456
    %v487 = vpack.c.b16 %v463, %v460
    %v488 = vpack.c.b16 %v464, %v461
    %v489 = vpack.c.b16 %v465, %v462
    %514 = vmatpush.bf16.msra.mxu0 %v487
    %515 = vmatpush.bf16.msra.mxu0 %v484
    %516 = vmatpush.bf16.msra.mxu0 %v481
    %517 = vmatpush.bf16.msra.mxu0 %v478
    %518 = vmatpush.bf16.msra.mxu0 %v475
    %519 = vmatpush.bf16.msra.mxu0 %v472
    %520 = vmatpush.bf16.msra.mxu0 %v469
    %521 = vmatpush.bf16.msra.mxu0 %v466
    %522 = vmatmul.bf16.gmra.mxu0 %v385
    %v523 = vpop.f32.mrf.mxu0
    %v524 = vadd.f32 0.0, %v523
    %v525 = vpop.f32.mrf.mxu0
    %526 = vdwg.mxu0
    %527 = vmatpush.bf16.msra.mxu0 %v488
    %528 = vmatpush.bf16.msra.mxu0 %v485
    %529 = vmatpush.bf16.msra.mxu0 %v482
    %530 = vmatpush.bf16.msra.mxu0 %v479
    %531 = vmatpush.bf16.msra.mxu0 %v476
    %532 = vmatpush.bf16.msra.mxu0 %v473
    %533 = vmatpush.bf16.msra.mxu0 %v470
    %534 = vmatpush.bf16.msra.mxu0 %v467
    %535 = vmatmul.bf16.gmra.mxu0 %v385
    %v536 = vpop.f32.mrf.mxu0
    %v537 = vadd.f32 0.0, %v536
    %v538 = vpop.f32.mrf.mxu0
    %539 = vdwg.mxu0
    %540 = vmatpush.bf16.msra.mxu0 %v489
    %541 = vmatpush.bf16.msra.mxu0 %v486
    %542 = vmatpush.bf16.msra.mxu0 %v483
    %543 = vmatpush.bf16.msra.mxu0 %v480
    %544 = vmatpush.bf16.msra.mxu0 %v477
    %545 = vmatpush.bf16.msra.mxu0 %v474
    %546 = vmatpush.bf16.msra.mxu0 %v471
    %547 = vmatpush.bf16.msra.mxu0 %v468
    %548 = vmatmul.bf16.gmra.mxu0 %v385
    %v549 = vpop.f32.mrf.mxu0
    %v550 = vadd.f32 0.0, %v549
    %v551 = vpop.f32.mrf.mxu0
    %552 = vdwg.mxu0
    %v555 = vrot.slane %v537, 6
    %v556 = vsel %vm268, %v524, %v555
    %v558 = vadd.f32 %v384, %v556
    %v559 = vxor.u32 %v558, 2147483648
    %v560 = vmul.f32 %v559, 1.442695
    %v561 = vpow.pop %v560
    %v562 = vadd.f32 %v561, 1.0
    %v563 = vrcp.pop %v562
    %v564 = vmul.f32 %v562, %v563
    %v565 = vsub.f32 1.0, %v564
    %v566 = vmul.f32 %v563, %v565
    %v567 = vadd.f32 %v563, %v566
    %vm568 = vweird.f32 %v562
    %vm569 = vweird.f32 %v563
    %vm570 = vmor %vm568, %vm569
    %v571 = vsel %vm570, %v563, %v567
    %v572 = vand.u32 2147483647, %v562
    %vm573 = vcmp.eq.f32.partialorder %v572, 8.507059e+37
    %v574 = vand.u32 %v562, 2147483648
    %v575 = vor.u32 1.1754944e-38, %v574
    %v576 = vsel %vm573, %v575, %v571
    %v577 = vmul.f32 1.0, %v576
    %v579 = vperm.slane %v382, 0
    %v581 = vadd.f32 %v550, %v579
    %v582 = vmul.f32 %v577, %v581
    %v584 = vrot.slane %v384, 4
    %v586 = vadd.f32 %v584, %v582
    %v587 = vtanh.pop %v586
    %v588 = vsub.f32 %v383, %v587
    %v590 = vrot.slane %v577, 2
    %v592 = vmul.f32 %v590, %v588
    %v593 = vadd.f32 %v587, %v592
    %v594 = vpack.c.bf16 %v593, %v593
    %595 = vst [vmem:[#allocation11] sm:$0x1] %v594
    %s596 = scalar_lea.vmem [#allocation2], 6
    %v597 = vld [vmem:[%s596] sm:$0x3f]
    %598 = vmatpush.bf16.msra.mxu0 %v487
    %599 = vmatpush.bf16.msra.mxu0 %v484
    %600 = vmatpush.bf16.msra.mxu0 %v481
    %601 = vmatpush.bf16.msra.mxu0 %v478
    %602 = vmatpush.bf16.msra.mxu0 %v475
    %603 = vmatpush.bf16.msra.mxu0 %v472
    %604 = vmatpush.bf16.msra.mxu0 %v469
    %605 = vmatpush.bf16.msra.mxu0 %v466
    %606 = vmatmul.bf16.gmra.mxu0 %v594
    %v607 = vpop.f32.mrf.mxu0
    %v608 = vadd.f32 0.0, %v607
    %v609 = vpop.f32.mrf.mxu0
    %610 = vdwg.mxu0
    %611 = vmatpush.bf16.msra.mxu0 %v488
    %612 = vmatpush.bf16.msra.mxu0 %v485
    %613 = vmatpush.bf16.msra.mxu0 %v482
    %614 = vmatpush.bf16.msra.mxu0 %v479
    %615 = vmatpush.bf16.msra.mxu0 %v476
    %616 = vmatpush.bf16.msra.mxu0 %v473
    %617 = vmatpush.bf16.msra.mxu0 %v470
    %618 = vmatpush.bf16.msra.mxu0 %v467
    %619 = vmatmul.bf16.gmra.mxu0 %v594
    %v620 = vpop.f32.mrf.mxu0
    %v621 = vadd.f32 0.0, %v620
    %v622 = vpop.f32.mrf.mxu0
    %623 = vdwg.mxu0
    %624 = vmatpush.bf16.msra.mxu0 %v489
    %625 = vmatpush.bf16.msra.mxu0 %v486
    %626 = vmatpush.bf16.msra.mxu0 %v483
    %627 = vmatpush.bf16.msra.mxu0 %v480
    %628 = vmatpush.bf16.msra.mxu0 %v477
    %629 = vmatpush.bf16.msra.mxu0 %v474
    %630 = vmatpush.bf16.msra.mxu0 %v471
    %631 = vmatpush.bf16.msra.mxu0 %v468
    %632 = vmatmul.bf16.gmra.mxu0 %v594
    %v633 = vpop.f32.mrf.mxu0
    %v634 = vadd.f32 0.0, %v633
    %v635 = vpop.f32.mrf.mxu0
    %636 = vdwg.mxu0
    %v639 = vrot.slane %v621, 6
    %v640 = vsel %vm268, %v608, %v639
    %v642 = vadd.f32 %v597, %v640
    %v643 = vxor.u32 %v642, 2147483648
    %v644 = vmul.f32 %v643, 1.442695
    %v645 = vpow.pop %v644
    %v646 = vadd.f32 %v645, 1.0
    %v647 = vrcp.pop %v646
    %v648 = vmul.f32 %v646, %v647
    %v649 = vsub.f32 1.0, %v648
    %v650 = vmul.f32 %v647, %v649
    %v651 = vadd.f32 %v647, %v650
    %vm652 = vweird.f32 %v646
    %vm653 = vweird.f32 %v647
    %vm654 = vmor %vm652, %vm653
    %v655 = vsel %vm654, %v647, %v651
    %v656 = vand.u32 2147483647, %v646
    %vm657 = vcmp.eq.f32.partialorder %v656, 8.507059e+37
    %v658 = vand.u32 %v646, 2147483648
    %v659 = vor.u32 1.1754944e-38, %v658
    %v660 = vsel %vm657, %v659, %v655
    %v661 = vmul.f32 1.0, %v660
    %v662 = vadd.f32 %v634, %v579
    %v663 = vmul.f32 %v661, %v662
    %v665 = vrot.slane %v597, 4
    %v667 = vadd.f32 %v665, %v663
    %v668 = vtanh.pop %v667
    %v669 = vsub.f32 %v593, %v668
    %v671 = vrot.slane %v661, 2
    %v673 = vmul.f32 %v671, %v669
    %v674 = vadd.f32 %v668, %v673
    %v675 = vpack.c.bf16 %v674, %v674
    %s676 = scalar_lea.vmem [#allocation11], 1
    %677 = vst [vmem:[%s676] sm:$0x1] %v675
    %s678 = scalar_lea.vmem [#allocation2], 12
    %v679 = vld [vmem:[%s678] sm:$0x3f]
    %680 = vmatpush.bf16.msra.mxu0 %v487
    %681 = vmatpush.bf16.msra.mxu0 %v484
    %682 = vmatpush.bf16.msra.mxu0 %v481
    %683 = vmatpush.bf16.msra.mxu0 %v478
    %684 = vmatpush.bf16.msra.mxu0 %v475
    %685 = vmatpush.bf16.msra.mxu0 %v472
    %686 = vmatpush.bf16.msra.mxu0 %v469
    %687 = vmatpush.bf16.msra.mxu0 %v466
    %688 = vmatmul.bf16.gmra.mxu0 %v675
    %v689 = vpop.f32.mrf.mxu0
    %v690 = vadd.f32 0.0, %v689
    %v691 = vpop.f32.mrf.mxu0
    %692 = vdwg.mxu0
    %693 = vmatpush.bf16.msra.mxu0 %v488
    %694 = vmatpush.bf16.msra.mxu0 %v485
    %695 = vmatpush.bf16.msra.mxu0 %v482
    %696 = vmatpush.bf16.msra.mxu0 %v479
    %697 = vmatpush.bf16.msra.mxu0 %v476
    %698 = vmatpush.bf16.msra.mxu0 %v473
    %699 = vmatpush.bf16.msra.mxu0 %v470
    %700 = vmatpush.bf16.msra.mxu0 %v467
    %701 = vmatmul.bf16.gmra.mxu0 %v675
    %v702 = vpop.f32.mrf.mxu0
    %v703 = vadd.f32 0.0, %v702
    %v704 = vpop.f32.mrf.mxu0
    %705 = vdwg.mxu0
    %706 = vmatpush.bf16.msra.mxu0 %v489
    %707 = vmatpush.bf16.msra.mxu0 %v486
    %708 = vmatpush.bf16.msra.mxu0 %v483
    %709 = vmatpush.bf16.msra.mxu0 %v480
    %710 = vmatpush.bf16.msra.mxu0 %v477
    %711 = vmatpush.bf16.msra.mxu0 %v474
    %712 = vmatpush.bf16.msra.mxu0 %v471
    %713 = vmatpush.bf16.msra.mxu0 %v468
    %714 = vmatmul.bf16.gmra.mxu0 %v675
    %v715 = vpop.f32.mrf.mxu0
    %v716 = vadd.f32 0.0, %v715
    %v717 = vpop.f32.mrf.mxu0
    %718 = vdwg.mxu0
    %v721 = vrot.slane %v703, 6
    %v722 = vsel %vm268, %v690, %v721
    %v724 = vadd.f32 %v679, %v722
    %v725 = vxor.u32 %v724, 2147483648
    %v726 = vmul.f32 %v725, 1.442695
    %v727 = vpow.pop %v726
    %v728 = vadd.f32 %v727, 1.0
    %v729 = vrcp.pop %v728
    %v730 = vmul.f32 %v728, %v729
    %v731 = vsub.f32 1.0, %v730
    %v732 = vmul.f32 %v729, %v731
    %v733 = vadd.f32 %v729, %v732
    %vm734 = vweird.f32 %v728
    %vm735 = vweird.f32 %v729
    %vm736 = vmor %vm734, %vm735
    %v737 = vsel %vm736, %v729, %v733
    %v738 = vand.u32 2147483647, %v728
    %vm739 = vcmp.eq.f32.partialorder %v738, 8.507059e+37
    %v740 = vand.u32 %v728, 2147483648
    %v741 = vor.u32 1.1754944e-38, %v740
    %v742 = vsel %vm739, %v741, %v737
    %v743 = vmul.f32 1.0, %v742
    %v744 = vadd.f32 %v716, %v579
    %v745 = vmul.f32 %v743, %v744
    %v747 = vrot.slane %v679, 4
    %v749 = vadd.f32 %v747, %v745
    %v750 = vtanh.pop %v749
    %v751 = vsub.f32 %v674, %v750
    %v753 = vrot.slane %v743, 2
    %v755 = vmul.f32 %v753, %v751
    %v756 = vadd.f32 %v750, %v755
    %v757 = vpack.c.bf16 %v756, %v756
    %s758 = scalar_lea.vmem [#allocation11], 2
    %759 = vst [vmem:[%s758] sm:$0x1] %v757
    %s760 = scalar_lea.vmem [#allocation2], 18
    %v761 = vld [vmem:[%s760] sm:$0x3f]
    %762 = vmatpush.bf16.msra.mxu0 %v487
    %763 = vmatpush.bf16.msra.mxu0 %v484
    %764 = vmatpush.bf16.msra.mxu0 %v481
    %765 = vmatpush.bf16.msra.mxu0 %v478
    %766 = vmatpush.bf16.msra.mxu0 %v475
    %767 = vmatpush.bf16.msra.mxu0 %v472
    %768 = vmatpush.bf16.msra.mxu0 %v469
    %769 = vmatpush.bf16.msra.mxu0 %v466
    %770 = vmatmul.bf16.gmra.mxu0 %v757
    %v771 = vpop.f32.mrf.mxu0
    %v772 = vadd.f32 0.0, %v771
    %v773 = vpop.f32.mrf.mxu0
    %774 = vdwg.mxu0
    %775 = vmatpush.bf16.msra.mxu0 %v488
    %776 = vmatpush.bf16.msra.mxu0 %v485
    %777 = vmatpush.bf16.msra.mxu0 %v482
    %778 = vmatpush.bf16.msra.mxu0 %v479
    %779 = vmatpush.bf16.msra.mxu0 %v476
    %780 = vmatpush.bf16.msra.mxu0 %v473
    %781 = vmatpush.bf16.msra.mxu0 %v470
    %782 = vmatpush.bf16.msra.mxu0 %v467
    %783 = vmatmul.bf16.gmra.mxu0 %v757
    %v784 = vpop.f32.mrf.mxu0
    %v785 = vadd.f32 0.0, %v784
    %v786 = vpop.f32.mrf.mxu0
    %787 = vdwg.mxu0
    %788 = vmatpush.bf16.msra.mxu0 %v489
    %789 = vmatpush.bf16.msra.mxu0 %v486
    %790 = vmatpush.bf16.msra.mxu0 %v483
    %791 = vmatpush.bf16.msra.mxu0 %v480
    %792 = vmatpush.bf16.msra.mxu0 %v477
    %793 = vmatpush.bf16.msra.mxu0 %v474
    %794 = vmatpush.bf16.msra.mxu0 %v471
    %795 = vmatpush.bf16.msra.mxu0 %v468
    %796 = vmatmul.bf16.gmra.mxu0 %v757
    %v797 = vpop.f32.mrf.mxu0
    %v798 = vadd.f32 0.0, %v797
    %v799 = vpop.f32.mrf.mxu0
    %800 = vdwg.mxu0
    %v803 = vrot.slane %v785, 6
    %v804 = vsel %vm268, %v772, %v803
    %v806 = vadd.f32 %v761, %v804
    %v807 = vxor.u32 %v806, 2147483648
    %v808 = vmul.f32 %v807, 1.442695
    %v809 = vpow.pop %v808
    %v810 = vadd.f32 %v809, 1.0
    %v811 = vrcp.pop %v810
    %v812 = vmul.f32 %v810, %v811
    %v813 = vsub.f32 1.0, %v812
    %v814 = vmul.f32 %v811, %v813
    %v815 = vadd.f32 %v811, %v814
    %vm816 = vweird.f32 %v810
    %vm817 = vweird.f32 %v811
    %vm818 = vmor %vm816, %vm817
    %v819 = vsel %vm818, %v811, %v815
    %v820 = vand.u32 2147483647, %v810
    %vm821 = vcmp.eq.f32.partialorder %v820, 8.507059e+37
    %v822 = vand.u32 %v810, 2147483648
    %v823 = vor.u32 1.1754944e-38, %v822
    %v824 = vsel %vm821, %v823, %v819
    %v825 = vmul.f32 1.0, %v824
    %v826 = vadd.f32 %v798, %v579
    %v827 = vmul.f32 %v825, %v826
    %v829 = vrot.slane %v761, 4
    %v831 = vadd.f32 %v829, %v827
    %v832 = vtanh.pop %v831
    %v833 = vsub.f32 %v756, %v832
    %v835 = vrot.slane %v825, 2
    %v837 = vmul.f32 %v835, %v833
    %v838 = vadd.f32 %v832, %v837
    %v839 = vpack.c.bf16 %v838, %v838
    %s840 = scalar_lea.vmem [#allocation11], 3
    %841 = vst [vmem:[%s840] sm:$0x1] %v839
    %s842 = scalar_lea.vmem [#allocation2], 24
    %v843 = vld [vmem:[%s842] sm:$0x3f]
    %844 = vmatpush.bf16.msra.mxu0 %v487
    %845 = vmatpush.bf16.msra.mxu0 %v484
    %846 = vmatpush.bf16.msra.mxu0 %v481
    %847 = vmatpush.bf16.msra.mxu0 %v478
    %848 = vmatpush.bf16.msra.mxu0 %v475
    %849 = vmatpush.bf16.msra.mxu0 %v472
    %850 = vmatpush.bf16.msra.mxu0 %v469
    %851 = vmatpush.bf16.msra.mxu0 %v466
    %852 = vmatmul.bf16.gmra.mxu0 %v839
    %v853 = vpop.f32.mrf.mxu0
    %v854 = vadd.f32 0.0, %v853
    %v855 = vpop.f32.mrf.mxu0
    %856 = vdwg.mxu0
    %857 = vmatpush.bf16.msra.mxu0 %v488
    %858 = vmatpush.bf16.msra.mxu0 %v485
    %859 = vmatpush.bf16.msra.mxu0 %v482
    %860 = vmatpush.bf16.msra.mxu0 %v479
    %861 = vmatpush.bf16.msra.mxu0 %v476
    %862 = vmatpush.bf16.msra.mxu0 %v473
    %863 = vmatpush.bf16.msra.mxu0 %v470
    %864 = vmatpush.bf16.msra.mxu0 %v467
    %865 = vmatmul.bf16.gmra.mxu0 %v839
    %v866 = vpop.f32.mrf.mxu0
    %v867 = vadd.f32 0.0, %v866
    %v868 = vpop.f32.mrf.mxu0
    %869 = vdwg.mxu0
    %870 = vmatpush.bf16.msra.mxu0 %v489
    %871 = vmatpush.bf16.msra.mxu0 %v486
    %872 = vmatpush.bf16.msra.mxu0 %v483
    %873 = vmatpush.bf16.msra.mxu0 %v480
    %874 = vmatpush.bf16.msra.mxu0 %v477
    %875 = vmatpush.bf16.msra.mxu0 %v474
    %876 = vmatpush.bf16.msra.mxu0 %v471
    %877 = vmatpush.bf16.msra.mxu0 %v468
    %878 = vmatmul.bf16.gmra.mxu0 %v839
    %v879 = vpop.f32.mrf.mxu0
    %v880 = vadd.f32 0.0, %v879
    %v881 = vpop.f32.mrf.mxu0
    %882 = vdwg.mxu0
    %v885 = vrot.slane %v867, 6
    %v886 = vsel %vm268, %v854, %v885
    %v888 = vadd.f32 %v843, %v886
    %v889 = vxor.u32 %v888, 2147483648
    %v890 = vmul.f32 %v889, 1.442695
    %v891 = vpow.pop %v890
    %v892 = vadd.f32 %v891, 1.0
    %v893 = vrcp.pop %v892
    %v894 = vmul.f32 %v892, %v893
    %v895 = vsub.f32 1.0, %v894
    %v896 = vmul.f32 %v893, %v895
    %v897 = vadd.f32 %v893, %v896
    %vm898 = vweird.f32 %v892
    %vm899 = vweird.f32 %v893
    %vm900 = vmor %vm898, %vm899
    %v901 = vsel %vm900, %v893, %v897
    %v902 = vand.u32 2147483647, %v892
    %vm903 = vcmp.eq.f32.partialorder %v902, 8.507059e+37
    %v904 = vand.u32 %v892, 2147483648
    %v905 = vor.u32 1.1754944e-38, %v904
    %v906 = vsel %vm903, %v905, %v901
    %v907 = vmul.f32 1.0, %v906
    %v908 = vadd.f32 %v880, %v579
    %v909 = vmul.f32 %v907, %v908
    %v911 = vrot.slane %v843, 4
    %v913 = vadd.f32 %v911, %v909
    %v914 = vtanh.pop %v913
    %v915 = vsub.f32 %v838, %v914
    %v917 = vrot.slane %v907, 2
    %v919 = vmul.f32 %v917, %v915
    %v920 = vadd.f32 %v914, %v919
    %v921 = vpack.c.bf16 %v920, %v920
    %s922 = scalar_lea.vmem [#allocation11], 4
    %923 = vst [vmem:[%s922] sm:$0x1] %v921
    %s924 = scalar_lea.vmem [#allocation2], 30
    %v925 = vld [vmem:[%s924] sm:$0x3f]
    %926 = vmatpush.bf16.msra.mxu0 %v487
    %927 = vmatpush.bf16.msra.mxu0 %v484
    %928 = vmatpush.bf16.msra.mxu0 %v481
    %929 = vmatpush.bf16.msra.mxu0 %v478
    %930 = vmatpush.bf16.msra.mxu0 %v475
    %931 = vmatpush.bf16.msra.mxu0 %v472
    %932 = vmatpush.bf16.msra.mxu0 %v469
    %933 = vmatpush.bf16.msra.mxu0 %v466
    %934 = vmatmul.bf16.gmra.mxu0 %v921
    %v935 = vpop.f32.mrf.mxu0
    %v936 = vadd.f32 0.0, %v935
    %v937 = vpop.f32.mrf.mxu0
    %938 = vdwg.mxu0
    %939 = vmatpush.bf16.msra.mxu0 %v488
    %940 = vmatpush.bf16.msra.mxu0 %v485
    %941 = vmatpush.bf16.msra.mxu0 %v482
    %942 = vmatpush.bf16.msra.mxu0 %v479
    %943 = vmatpush.bf16.msra.mxu0 %v476
    %944 = vmatpush.bf16.msra.mxu0 %v473
    %945 = vmatpush.bf16.msra.mxu0 %v470
    %946 = vmatpush.bf16.msra.mxu0 %v467
    %947 = vmatmul.bf16.gmra.mxu0 %v921
    %v948 = vpop.f32.mrf.mxu0
    %v949 = vadd.f32 0.0, %v948
    %v950 = vpop.f32.mrf.mxu0
    %951 = vdwg.mxu0
    %952 = vmatpush.bf16.msra.mxu0 %v489
    %953 = vmatpush.bf16.msra.mxu0 %v486
    %954 = vmatpush.bf16.msra.mxu0 %v483
    %955 = vmatpush.bf16.msra.mxu0 %v480
    %956 = vmatpush.bf16.msra.mxu0 %v477
    %957 = vmatpush.bf16.msra.mxu0 %v474
    %958 = vmatpush.bf16.msra.mxu0 %v471
    %959 = vmatpush.bf16.msra.mxu0 %v468
    %960 = vmatmul.bf16.gmra.mxu0 %v921
    %v961 = vpop.f32.mrf.mxu0
    %v962 = vadd.f32 0.0, %v961
    %v963 = vpop.f32.mrf.mxu0
    %964 = vdwg.mxu0
    %v967 = vrot.slane %v949, 6
    %v968 = vsel %vm268, %v936, %v967
    %v970 = vadd.f32 %v925, %v968
    %v971 = vxor.u32 %v970, 2147483648
    %v972 = vmul.f32 %v971, 1.442695
    %v973 = vpow.pop %v972
    %v974 = vadd.f32 %v973, 1.0
    %v975 = vrcp.pop %v974
    %v976 = vmul.f32 %v974, %v975
    %v977 = vsub.f32 1.0, %v976
    %v978 = vmul.f32 %v975, %v977
    %v979 = vadd.f32 %v975, %v978
    %vm980 = vweird.f32 %v974
    %vm981 = vweird.f32 %v975
    %vm982 = vmor %vm980, %vm981
    %v983 = vsel %vm982, %v975, %v979
    %v984 = vand.u32 2147483647, %v974
    %vm985 = vcmp.eq.f32.partialorder %v984, 8.507059e+37
    %v986 = vand.u32 %v974, 2147483648
    %v987 = vor.u32 1.1754944e-38, %v986
    %v988 = vsel %vm985, %v987, %v983
    %v989 = vmul.f32 1.0, %v988
    %v990 = vadd.f32 %v962, %v579
    %v991 = vmul.f32 %v989, %v990
    %v993 = vrot.slane %v925, 4
    %v995 = vadd.f32 %v993, %v991
    %v996 = vtanh.pop %v995
    %v997 = vsub.f32 %v920, %v996
    %v999 = vrot.slane %v989, 2
    %v1001 = vmul.f32 %v999, %v997
    %v1002 = vadd.f32 %v996, %v1001
    %v1003 = vpack.c.bf16 %v1002, %v1002
    %s1004 = scalar_lea.vmem [#allocation11], 5
    %1005 = vst [vmem:[%s1004] sm:$0x1] %v1003
    %s1006 = scalar_lea.vmem [#allocation2], 36
    %v1007 = vld [vmem:[%s1006] sm:$0x3f]
    %1008 = vmatpush.bf16.msra.mxu0 %v487
    %1009 = vmatpush.bf16.msra.mxu0 %v484
    %1010 = vmatpush.bf16.msra.mxu0 %v481
    %1011 = vmatpush.bf16.msra.mxu0 %v478
    %1012 = vmatpush.bf16.msra.mxu0 %v475
    %1013 = vmatpush.bf16.msra.mxu0 %v472
    %1014 = vmatpush.bf16.msra.mxu0 %v469
    %1015 = vmatpush.bf16.msra.mxu0 %v466
    %1016 = vmatmul.bf16.gmra.mxu0 %v1003
    %v1017 = vpop.f32.mrf.mxu0
    %v1018 = vadd.f32 0.0, %v1017
    %v1019 = vpop.f32.mrf.mxu0
    %1020 = vdwg.mxu0
    %1021 = vmatpush.bf16.msra.mxu0 %v488
    %1022 = vmatpush.bf16.msra.mxu0 %v485
    %1023 = vmatpush.bf16.msra.mxu0 %v482
    %1024 = vmatpush.bf16.msra.mxu0 %v479
    %1025 = vmatpush.bf16.msra.mxu0 %v476
    %1026 = vmatpush.bf16.msra.mxu0 %v473
    %1027 = vmatpush.bf16.msra.mxu0 %v470
    %1028 = vmatpush.bf16.msra.mxu0 %v467
    %1029 = vmatmul.bf16.gmra.mxu0 %v1003
    %v1030 = vpop.f32.mrf.mxu0
    %v1031 = vadd.f32 0.0, %v1030
    %v1032 = vpop.f32.mrf.mxu0
    %1033 = vdwg.mxu0
    %1034 = vmatpush.bf16.msra.mxu0 %v489
    %1035 = vmatpush.bf16.msra.mxu0 %v486
    %1036 = vmatpush.bf16.msra.mxu0 %v483
    %1037 = vmatpush.bf16.msra.mxu0 %v480
    %1038 = vmatpush.bf16.msra.mxu0 %v477
    %1039 = vmatpush.bf16.msra.mxu0 %v474
    %1040 = vmatpush.bf16.msra.mxu0 %v471
    %1041 = vmatpush.bf16.msra.mxu0 %v468
    %1042 = vmatmul.bf16.gmra.mxu0 %v1003
    %v1043 = vpop.f32.mrf.mxu0
    %v1044 = vadd.f32 0.0, %v1043
    %v1045 = vpop.f32.mrf.mxu0
    %1046 = vdwg.mxu0
    %v1049 = vrot.slane %v1031, 6
    %v1050 = vsel %vm268, %v1018, %v1049
    %v1052 = vadd.f32 %v1007, %v1050
    %v1053 = vxor.u32 %v1052, 2147483648
    %v1054 = vmul.f32 %v1053, 1.442695
    %v1055 = vpow.pop %v1054
    %v1056 = vadd.f32 %v1055, 1.0
    %v1057 = vrcp.pop %v1056
    %v1058 = vmul.f32 %v1056, %v1057
    %v1059 = vsub.f32 1.0, %v1058
    %v1060 = vmul.f32 %v1057, %v1059
    %v1061 = vadd.f32 %v1057, %v1060
    %vm1062 = vweird.f32 %v1056
    %vm1063 = vweird.f32 %v1057
    %vm1064 = vmor %vm1062, %vm1063
    %v1065 = vsel %vm1064, %v1057, %v1061
    %v1066 = vand.u32 2147483647, %v1056
    %vm1067 = vcmp.eq.f32.partialorder %v1066, 8.507059e+37
    %v1068 = vand.u32 %v1056, 2147483648
    %v1069 = vor.u32 1.1754944e-38, %v1068
    %v1070 = vsel %vm1067, %v1069, %v1065
    %v1071 = vmul.f32 1.0, %v1070
    %v1072 = vadd.f32 %v1044, %v579
    %v1073 = vmul.f32 %v1071, %v1072
    %v1075 = vrot.slane %v1007, 4
    %v1077 = vadd.f32 %v1075, %v1073
    %v1078 = vtanh.pop %v1077
    %v1079 = vsub.f32 %v1002, %v1078
    %v1081 = vrot.slane %v1071, 2
    %v1083 = vmul.f32 %v1081, %v1079
    %v1084 = vadd.f32 %v1078, %v1083
    %v1085 = vpack.c.bf16 %v1084, %v1084
    %s1086 = scalar_lea.vmem [#allocation11], 6
    %1087 = vst [vmem:[%s1086] sm:$0x1] %v1085
    %s1088 = scalar_lea.vmem [#allocation2], 42
    %v1089 = vld [vmem:[%s1088] sm:$0x3f]
    %1090 = vmatpush.bf16.msra.mxu0 %v487
    %1091 = vmatpush.bf16.msra.mxu0 %v484
    %1092 = vmatpush.bf16.msra.mxu0 %v481
    %1093 = vmatpush.bf16.msra.mxu0 %v478
    %1094 = vmatpush.bf16.msra.mxu0 %v475
    %1095 = vmatpush.bf16.msra.mxu0 %v472
    %1096 = vmatpush.bf16.msra.mxu0 %v469
    %1097 = vmatpush.bf16.msra.mxu0 %v466
    %1098 = vmatmul.bf16.gmra.mxu0 %v1085
    %v1099 = vpop.f32.mrf.mxu0
    %v1100 = vadd.f32 0.0, %v1099
    %v1101 = vpop.f32.mrf.mxu0
    %1102 = vdwg.mxu0
    %1103 = vmatpush.bf16.msra.mxu0 %v488
    %1104 = vmatpush.bf16.msra.mxu0 %v485
    %1105 = vmatpush.bf16.msra.mxu0 %v482
    %1106 = vmatpush.bf16.msra.mxu0 %v479
    %1107 = vmatpush.bf16.msra.mxu0 %v476
    %1108 = vmatpush.bf16.msra.mxu0 %v473
    %1109 = vmatpush.bf16.msra.mxu0 %v470
    %1110 = vmatpush.bf16.msra.mxu0 %v467
    %1111 = vmatmul.bf16.gmra.mxu0 %v1085
    %v1112 = vpop.f32.mrf.mxu0
    %v1113 = vadd.f32 0.0, %v1112
    %v1114 = vpop.f32.mrf.mxu0
    %1115 = vdwg.mxu0
    %1116 = vmatpush.bf16.msra.mxu0 %v489
    %1117 = vmatpush.bf16.msra.mxu0 %v486
    %1118 = vmatpush.bf16.msra.mxu0 %v483
    %1119 = vmatpush.bf16.msra.mxu0 %v480
    %1120 = vmatpush.bf16.msra.mxu0 %v477
    %1121 = vmatpush.bf16.msra.mxu0 %v474
    %1122 = vmatpush.bf16.msra.mxu0 %v471
    %1123 = vmatpush.bf16.msra.mxu0 %v468
    %1124 = vmatmul.bf16.gmra.mxu0 %v1085
    %v1125 = vpop.f32.mrf.mxu0
    %v1126 = vadd.f32 0.0, %v1125
    %v1127 = vpop.f32.mrf.mxu0
    %1128 = vdwg.mxu0
    %v1131 = vrot.slane %v1113, 6
    %v1132 = vsel %vm268, %v1100, %v1131
    %v1134 = vadd.f32 %v1089, %v1132
    %v1135 = vxor.u32 %v1134, 2147483648
    %v1136 = vmul.f32 %v1135, 1.442695
    %v1137 = vpow.pop %v1136
    %v1138 = vadd.f32 %v1137, 1.0
    %v1139 = vrcp.pop %v1138
    %v1140 = vmul.f32 %v1138, %v1139
    %v1141 = vsub.f32 1.0, %v1140
    %v1142 = vmul.f32 %v1139, %v1141
    %v1143 = vadd.f32 %v1139, %v1142
    %vm1144 = vweird.f32 %v1138
    %vm1145 = vweird.f32 %v1139
    %vm1146 = vmor %vm1144, %vm1145
    %v1147 = vsel %vm1146, %v1139, %v1143
    %v1148 = vand.u32 2147483647, %v1138
    %vm1149 = vcmp.eq.f32.partialorder %v1148, 8.507059e+37
    %v1150 = vand.u32 %v1138, 2147483648
    %v1151 = vor.u32 1.1754944e-38, %v1150
    %v1152 = vsel %vm1149, %v1151, %v1147
    %v1153 = vmul.f32 1.0, %v1152
    %v1154 = vadd.f32 %v1126, %v579
    %v1155 = vmul.f32 %v1153, %v1154
    %v1157 = vrot.slane %v1089, 4
    %v1159 = vadd.f32 %v1157, %v1155
    %v1160 = vtanh.pop %v1159
    %v1161 = vsub.f32 %v1084, %v1160
    %v1163 = vrot.slane %v1153, 2
    %v1165 = vmul.f32 %v1163, %v1161
    %v1166 = vadd.f32 %v1160, %v1165
    %v1167 = vpack.c.bf16 %v1166, %v1166
    %s1168 = scalar_lea.vmem [#allocation11], 7
    %1169 = vst [vmem:[%s1168] sm:$0x1] %v1167
    %s1170 = scalar_lea.vmem [#allocation2], 48
    %v1171 = vld [vmem:[%s1170] sm:$0x3f]
    %1172 = vmatpush.bf16.msra.mxu0 %v487
    %1173 = vmatpush.bf16.msra.mxu0 %v484
    %1174 = vmatpush.bf16.msra.mxu0 %v481
    %1175 = vmatpush.bf16.msra.mxu0 %v478
    %1176 = vmatpush.bf16.msra.mxu0 %v475
    %1177 = vmatpush.bf16.msra.mxu0 %v472
    %1178 = vmatpush.bf16.msra.mxu0 %v469
    %1179 = vmatpush.bf16.msra.mxu0 %v466
    %1180 = vmatmul.bf16.gmra.mxu0 %v1167
    %v1181 = vpop.f32.mrf.mxu0
    %v1182 = vadd.f32 0.0, %v1181
    %v1183 = vpop.f32.mrf.mxu0
    %1184 = vdwg.mxu0
    %1185 = vmatpush.bf16.msra.mxu0 %v488
    %1186 = vmatpush.bf16.msra.mxu0 %v485
    %1187 = vmatpush.bf16.msra.mxu0 %v482
    %1188 = vmatpush.bf16.msra.mxu0 %v479
    %1189 = vmatpush.bf16.msra.mxu0 %v476
    %1190 = vmatpush.bf16.msra.mxu0 %v473
    %1191 = vmatpush.bf16.msra.mxu0 %v470
    %1192 = vmatpush.bf16.msra.mxu0 %v467
    %1193 = vmatmul.bf16.gmra.mxu0 %v1167
    %v1194 = vpop.f32.mrf.mxu0
    %v1195 = vadd.f32 0.0, %v1194
    %v1196 = vpop.f32.mrf.mxu0
    %1197 = vdwg.mxu0
    %1198 = vmatpush.bf16.msra.mxu0 %v489
    %1199 = vmatpush.bf16.msra.mxu0 %v486
    %1200 = vmatpush.bf16.msra.mxu0 %v483
    %1201 = vmatpush.bf16.msra.mxu0 %v480
    %1202 = vmatpush.bf16.msra.mxu0 %v477
    %1203 = vmatpush.bf16.msra.mxu0 %v474
    %1204 = vmatpush.bf16.msra.mxu0 %v471
    %1205 = vmatpush.bf16.msra.mxu0 %v468
    %1206 = vmatmul.bf16.gmra.mxu0 %v1167
    %v1207 = vpop.f32.mrf.mxu0
    %v1208 = vadd.f32 0.0, %v1207
    %v1209 = vpop.f32.mrf.mxu0
    %1210 = vdwg.mxu0
    %v1213 = vrot.slane %v1195, 6
    %v1214 = vsel %vm268, %v1182, %v1213
    %v1216 = vadd.f32 %v1171, %v1214
    %v1217 = vxor.u32 %v1216, 2147483648
    %v1218 = vmul.f32 %v1217, 1.442695
    %v1219 = vpow.pop %v1218
    %v1220 = vadd.f32 %v1219, 1.0
    %v1221 = vrcp.pop %v1220
    %v1222 = vmul.f32 %v1220, %v1221
    %v1223 = vsub.f32 1.0, %v1222
    %v1224 = vmul.f32 %v1221, %v1223
    %v1225 = vadd.f32 %v1221, %v1224
    %vm1226 = vweird.f32 %v1220
    %vm1227 = vweird.f32 %v1221
    %vm1228 = vmor %vm1226, %vm1227
    %v1229 = vsel %vm1228, %v1221, %v1225
    %v1230 = vand.u32 2147483647, %v1220
    %vm1231 = vcmp.eq.f32.partialorder %v1230, 8.507059e+37
    %v1232 = vand.u32 %v1220, 2147483648
    %v1233 = vor.u32 1.1754944e-38, %v1232
    %v1234 = vsel %vm1231, %v1233, %v1229
    %v1235 = vmul.f32 1.0, %v1234
    %v1236 = vadd.f32 %v1208, %v579
    %v1237 = vmul.f32 %v1235, %v1236
    %v1239 = vrot.slane %v1171, 4
    %v1241 = vadd.f32 %v1239, %v1237
    %v1242 = vtanh.pop %v1241
    %v1243 = vsub.f32 %v1166, %v1242
    %v1245 = vrot.slane %v1235, 2
    %v1247 = vmul.f32 %v1245, %v1243
    %v1248 = vadd.f32 %v1242, %v1247
    %v1249 = vpack.c.bf16 %v1248, %v1248
    %s1250 = scalar_lea.vmem [#allocation11], 8
    %1251 = vst [vmem:[%s1250] sm:$0x1] %v1249
    %s1252 = scalar_lea.vmem [#allocation2], 54
    %v1253 = vld [vmem:[%s1252] sm:$0x3f]
    %1254 = vmatpush.bf16.msra.mxu0 %v487
    %1255 = vmatpush.bf16.msra.mxu0 %v484
    %1256 = vmatpush.bf16.msra.mxu0 %v481
    %1257 = vmatpush.bf16.msra.mxu0 %v478
    %1258 = vmatpush.bf16.msra.mxu0 %v475
    %1259 = vmatpush.bf16.msra.mxu0 %v472
    %1260 = vmatpush.bf16.msra.mxu0 %v469
    %1261 = vmatpush.bf16.msra.mxu0 %v466
    %1262 = vmatmul.bf16.gmra.mxu0 %v1249
    %v1263 = vpop.f32.mrf.mxu0
    %v1264 = vadd.f32 0.0, %v1263
    %v1265 = vpop.f32.mrf.mxu0
    %1266 = vdwg.mxu0
    %1267 = vmatpush.bf16.msra.mxu0 %v488
    %1268 = vmatpush.bf16.msra.mxu0 %v485
    %1269 = vmatpush.bf16.msra.mxu0 %v482
    %1270 = vmatpush.bf16.msra.mxu0 %v479
    %1271 = vmatpush.bf16.msra.mxu0 %v476
    %1272 = vmatpush.bf16.msra.mxu0 %v473
    %1273 = vmatpush.bf16.msra.mxu0 %v470
    %1274 = vmatpush.bf16.msra.mxu0 %v467
    %1275 = vmatmul.bf16.gmra.mxu0 %v1249
    %v1276 = vpop.f32.mrf.mxu0
    %v1277 = vadd.f32 0.0, %v1276
    %v1278 = vpop.f32.mrf.mxu0
    %1279 = vdwg.mxu0
    %1280 = vmatpush.bf16.msra.mxu0 %v489
    %1281 = vmatpush.bf16.msra.mxu0 %v486
    %1282 = vmatpush.bf16.msra.mxu0 %v483
    %1283 = vmatpush.bf16.msra.mxu0 %v480
    %1284 = vmatpush.bf16.msra.mxu0 %v477
    %1285 = vmatpush.bf16.msra.mxu0 %v474
    %1286 = vmatpush.bf16.msra.mxu0 %v471
    %1287 = vmatpush.bf16.msra.mxu0 %v468
    %1288 = vmatmul.bf16.gmra.mxu0 %v1249
    %v1289 = vpop.f32.mrf.mxu0
    %v1290 = vadd.f32 0.0, %v1289
    %v1291 = vpop.f32.mrf.mxu0
    %1292 = vdwg.mxu0
    %v1295 = vrot.slane %v1277, 6
    %v1296 = vsel %vm268, %v1264, %v1295
    %v1298 = vadd.f32 %v1253, %v1296
    %v1299 = vxor.u32 %v1298, 2147483648
    %v1300 = vmul.f32 %v1299, 1.442695
    %v1301 = vpow.pop %v1300
    %v1302 = vadd.f32 %v1301, 1.0
    %v1303 = vrcp.pop %v1302
    %v1304 = vmul.f32 %v1302, %v1303
    %v1305 = vsub.f32 1.0, %v1304
    %v1306 = vmul.f32 %v1303, %v1305
    %v1307 = vadd.f32 %v1303, %v1306
    %vm1308 = vweird.f32 %v1302
    %vm1309 = vweird.f32 %v1303
    %vm1310 = vmor %vm1308, %vm1309
    %v1311 = vsel %vm1310, %v1303, %v1307
    %v1312 = vand.u32 2147483647, %v1302
    %vm1313 = vcmp.eq.f32.partialorder %v1312, 8.507059e+37
    %v1314 = vand.u32 %v1302, 2147483648
    %v1315 = vor.u32 1.1754944e-38, %v1314
    %v1316 = vsel %vm1313, %v1315, %v1311
    %v1317 = vmul.f32 1.0, %v1316
    %v1318 = vadd.f32 %v1290, %v579
    %v1319 = vmul.f32 %v1317, %v1318
    %v1321 = vrot.slane %v1253, 4
    %v1323 = vadd.f32 %v1321, %v1319
    %v1324 = vtanh.pop %v1323
    %v1325 = vsub.f32 %v1248, %v1324
    %v1327 = vrot.slane %v1317, 2
    %v1329 = vmul.f32 %v1327, %v1325
    %v1330 = vadd.f32 %v1324, %v1329
    %v1331 = vpack.c.bf16 %v1330, %v1330
    %s1332 = scalar_lea.vmem [#allocation11], 9
    %1333 = vst [vmem:[%s1332] sm:$0x1] %v1331
    %s1334 = scalar_lea.vmem [#allocation2], 60
    %v1335 = vld [vmem:[%s1334] sm:$0x3f]
    %1336 = vmatpush.bf16.msra.mxu0 %v487
    %1337 = vmatpush.bf16.msra.mxu0 %v484
    %1338 = vmatpush.bf16.msra.mxu0 %v481
    %1339 = vmatpush.bf16.msra.mxu0 %v478
    %1340 = vmatpush.bf16.msra.mxu0 %v475
    %1341 = vmatpush.bf16.msra.mxu0 %v472
    %1342 = vmatpush.bf16.msra.mxu0 %v469
    %1343 = vmatpush.bf16.msra.mxu0 %v466
    %1344 = vmatmul.bf16.gmra.mxu0 %v1331
    %v1345 = vpop.f32.mrf.mxu0
    %v1346 = vadd.f32 0.0, %v1345
    %v1347 = vpop.f32.mrf.mxu0
    %1348 = vdwg.mxu0
    %1349 = vmatpush.bf16.msra.mxu0 %v488
    %1350 = vmatpush.bf16.msra.mxu0 %v485
    %1351 = vmatpush.bf16.msra.mxu0 %v482
    %1352 = vmatpush.bf16.msra.mxu0 %v479
    %1353 = vmatpush.bf16.msra.mxu0 %v476
    %1354 = vmatpush.bf16.msra.mxu0 %v473
    %1355 = vmatpush.bf16.msra.mxu0 %v470
    %1356 = vmatpush.bf16.msra.mxu0 %v467
    %1357 = vmatmul.bf16.gmra.mxu0 %v1331
    %v1358 = vpop.f32.mrf.mxu0
    %v1359 = vadd.f32 0.0, %v1358
    %v1360 = vpop.f32.mrf.mxu0
    %1361 = vdwg.mxu0
    %1362 = vmatpush.bf16.msra.mxu0 %v489
    %1363 = vmatpush.bf16.msra.mxu0 %v486
    %1364 = vmatpush.bf16.msra.mxu0 %v483
    %1365 = vmatpush.bf16.msra.mxu0 %v480
    %1366 = vmatpush.bf16.msra.mxu0 %v477
    %1367 = vmatpush.bf16.msra.mxu0 %v474
    %1368 = vmatpush.bf16.msra.mxu0 %v471
    %1369 = vmatpush.bf16.msra.mxu0 %v468
    %1370 = vmatmul.bf16.gmra.mxu0 %v1331
    %v1371 = vpop.f32.mrf.mxu0
    %v1372 = vadd.f32 0.0, %v1371
    %v1373 = vpop.f32.mrf.mxu0
    %1374 = vdwg.mxu0
    %v1377 = vrot.slane %v1359, 6
    %v1378 = vsel %vm268, %v1346, %v1377
    %v1380 = vadd.f32 %v1335, %v1378
    %v1381 = vxor.u32 %v1380, 2147483648
    %v1382 = vmul.f32 %v1381, 1.442695
    %v1383 = vpow.pop %v1382
    %v1384 = vadd.f32 %v1383, 1.0
    %v1385 = vrcp.pop %v1384
    %v1386 = vmul.f32 %v1384, %v1385
    %v1387 = vsub.f32 1.0, %v1386
    %v1388 = vmul.f32 %v1385, %v1387
    %v1389 = vadd.f32 %v1385, %v1388
    %vm1390 = vweird.f32 %v1384
    %vm1391 = vweird.f32 %v1385
    %vm1392 = vmor %vm1390, %vm1391
    %v1393 = vsel %vm1392, %v1385, %v1389
    %v1394 = vand.u32 2147483647, %v1384
    %vm1395 = vcmp.eq.f32.partialorder %v1394, 8.507059e+37
    %v1396 = vand.u32 %v1384, 2147483648
    %v1397 = vor.u32 1.1754944e-38, %v1396
    %v1398 = vsel %vm1395, %v1397, %v1393
    %v1399 = vmul.f32 1.0, %v1398
    %v1400 = vadd.f32 %v1372, %v579
    %v1401 = vmul.f32 %v1399, %v1400
    %v1403 = vrot.slane %v1335, 4
    %v1405 = vadd.f32 %v1403, %v1401
    %v1406 = vtanh.pop %v1405
    %v1407 = vsub.f32 %v1330, %v1406
    %v1409 = vrot.slane %v1399, 2
    %v1411 = vmul.f32 %v1409, %v1407
    %v1412 = vadd.f32 %v1406, %v1411
    %v1413 = vpack.c.bf16 %v1412, %v1412
    %s1414 = scalar_lea.vmem [#allocation11], 10
    %1415 = vst [vmem:[%s1414] sm:$0x1] %v1413
    %s1416 = scalar_lea.vmem [#allocation2], 66
    %v1417 = vld [vmem:[%s1416] sm:$0x3f]
    %1418 = vmatpush.bf16.msra.mxu0 %v487
    %1419 = vmatpush.bf16.msra.mxu0 %v484
    %1420 = vmatpush.bf16.msra.mxu0 %v481
    %1421 = vmatpush.bf16.msra.mxu0 %v478
    %1422 = vmatpush.bf16.msra.mxu0 %v475
    %1423 = vmatpush.bf16.msra.mxu0 %v472
    %1424 = vmatpush.bf16.msra.mxu0 %v469
    %1425 = vmatpush.bf16.msra.mxu0 %v466
    %1426 = vmatmul.bf16.gmra.mxu0 %v1413
    %v1427 = vpop.f32.mrf.mxu0
    %v1428 = vadd.f32 0.0, %v1427
    %v1429 = vpop.f32.mrf.mxu0
    %1430 = vdwg.mxu0
    %1431 = vmatpush.bf16.msra.mxu0 %v488
    %1432 = vmatpush.bf16.msra.mxu0 %v485
    %1433 = vmatpush.bf16.msra.mxu0 %v482
    %1434 = vmatpush.bf16.msra.mxu0 %v479
    %1435 = vmatpush.bf16.msra.mxu0 %v476
    %1436 = vmatpush.bf16.msra.mxu0 %v473
    %1437 = vmatpush.bf16.msra.mxu0 %v470
    %1438 = vmatpush.bf16.msra.mxu0 %v467
    %1439 = vmatmul.bf16.gmra.mxu0 %v1413
    %v1440 = vpop.f32.mrf.mxu0
    %v1441 = vadd.f32 0.0, %v1440
    %v1442 = vpop.f32.mrf.mxu0
    %1443 = vdwg.mxu0
    %1444 = vmatpush.bf16.msra.mxu0 %v489
    %1445 = vmatpush.bf16.msra.mxu0 %v486
    %1446 = vmatpush.bf16.msra.mxu0 %v483
    %1447 = vmatpush.bf16.msra.mxu0 %v480
    %1448 = vmatpush.bf16.msra.mxu0 %v477
    %1449 = vmatpush.bf16.msra.mxu0 %v474
    %1450 = vmatpush.bf16.msra.mxu0 %v471
    %1451 = vmatpush.bf16.msra.mxu0 %v468
    %1452 = vmatmul.bf16.gmra.mxu0 %v1413
    %v1453 = vpop.f32.mrf.mxu0
    %v1454 = vadd.f32 0.0, %v1453
    %v1455 = vpop.f32.mrf.mxu0
    %1456 = vdwg.mxu0
    %v1459 = vrot.slane %v1441, 6
    %v1460 = vsel %vm268, %v1428, %v1459
    %v1462 = vadd.f32 %v1417, %v1460
    %v1463 = vxor.u32 %v1462, 2147483648
    %v1464 = vmul.f32 %v1463, 1.442695
    %v1465 = vpow.pop %v1464
    %v1466 = vadd.f32 %v1465, 1.0
    %v1467 = vrcp.pop %v1466
    %v1468 = vmul.f32 %v1466, %v1467
    %v1469 = vsub.f32 1.0, %v1468
    %v1470 = vmul.f32 %v1467, %v1469
    %v1471 = vadd.f32 %v1467, %v1470
    %vm1472 = vweird.f32 %v1466
    %vm1473 = vweird.f32 %v1467
    %vm1474 = vmor %vm1472, %vm1473
    %v1475 = vsel %vm1474, %v1467, %v1471
    %v1476 = vand.u32 2147483647, %v1466
    %vm1477 = vcmp.eq.f32.partialorder %v1476, 8.507059e+37
    %v1478 = vand.u32 %v1466, 2147483648
    %v1479 = vor.u32 1.1754944e-38, %v1478
    %v1480 = vsel %vm1477, %v1479, %v1475
    %v1481 = vmul.f32 1.0, %v1480
    %v1482 = vadd.f32 %v1454, %v579
    %v1483 = vmul.f32 %v1481, %v1482
    %v1485 = vrot.slane %v1417, 4
    %v1487 = vadd.f32 %v1485, %v1483
    %v1488 = vtanh.pop %v1487
    %v1489 = vsub.f32 %v1412, %v1488
    %v1491 = vrot.slane %v1481, 2
    %v1493 = vmul.f32 %v1491, %v1489
    %v1494 = vadd.f32 %v1488, %v1493
    %v1495 = vpack.c.bf16 %v1494, %v1494
    %s1496 = scalar_lea.vmem [#allocation11], 11
    %1497 = vst [vmem:[%s1496] sm:$0x1] %v1495
    %s1498 = scalar_lea.vmem [#allocation2], 72
    %v1499 = vld [vmem:[%s1498] sm:$0x3f]
    %1500 = vmatpush.bf16.msra.mxu0 %v487
    %1501 = vmatpush.bf16.msra.mxu0 %v484
    %1502 = vmatpush.bf16.msra.mxu0 %v481
    %1503 = vmatpush.bf16.msra.mxu0 %v478
    %1504 = vmatpush.bf16.msra.mxu0 %v475
    %1505 = vmatpush.bf16.msra.mxu0 %v472
    %1506 = vmatpush.bf16.msra.mxu0 %v469
    %1507 = vmatpush.bf16.msra.mxu0 %v466
    %1508 = vmatmul.bf16.gmra.mxu0 %v1495
    %v1509 = vpop.f32.mrf.mxu0
    %v1510 = vadd.f32 0.0, %v1509
    %v1511 = vpop.f32.mrf.mxu0
    %1512 = vdwg.mxu0
    %1513 = vmatpush.bf16.msra.mxu0 %v488
    %1514 = vmatpush.bf16.msra.mxu0 %v485
    %1515 = vmatpush.bf16.msra.mxu0 %v482
    %1516 = vmatpush.bf16.msra.mxu0 %v479
    %1517 = vmatpush.bf16.msra.mxu0 %v476
    %1518 = vmatpush.bf16.msra.mxu0 %v473
    %1519 = vmatpush.bf16.msra.mxu0 %v470
    %1520 = vmatpush.bf16.msra.mxu0 %v467
    %1521 = vmatmul.bf16.gmra.mxu0 %v1495
    %v1522 = vpop.f32.mrf.mxu0
    %v1523 = vadd.f32 0.0, %v1522
    %v1524 = vpop.f32.mrf.mxu0
    %1525 = vdwg.mxu0
    %1526 = vmatpush.bf16.msra.mxu0 %v489
    %1527 = vmatpush.bf16.msra.mxu0 %v486
    %1528 = vmatpush.bf16.msra.mxu0 %v483
    %1529 = vmatpush.bf16.msra.mxu0 %v480
    %1530 = vmatpush.bf16.msra.mxu0 %v477
    %1531 = vmatpush.bf16.msra.mxu0 %v474
    %1532 = vmatpush.bf16.msra.mxu0 %v471
    %1533 = vmatpush.bf16.msra.mxu0 %v468
    %1534 = vmatmul.bf16.gmra.mxu0 %v1495
    %v1535 = vpop.f32.mrf.mxu0
    %v1536 = vadd.f32 0.0, %v1535
    %v1537 = vpop.f32.mrf.mxu0
    %1538 = vdwg.mxu0
    %v1541 = vrot.slane %v1523, 6
    %v1542 = vsel %vm268, %v1510, %v1541
    %v1544 = vadd.f32 %v1499, %v1542
    %v1545 = vxor.u32 %v1544, 2147483648
    %v1546 = vmul.f32 %v1545, 1.442695
    %v1547 = vpow.pop %v1546
    %v1548 = vadd.f32 %v1547, 1.0
    %v1549 = vrcp.pop %v1548
    %v1550 = vmul.f32 %v1548, %v1549
    %v1551 = vsub.f32 1.0, %v1550
    %v1552 = vmul.f32 %v1549, %v1551
    %v1553 = vadd.f32 %v1549, %v1552
    %vm1554 = vweird.f32 %v1548
    %vm1555 = vweird.f32 %v1549
    %vm1556 = vmor %vm1554, %vm1555
    %v1557 = vsel %vm1556, %v1549, %v1553
    %v1558 = vand.u32 2147483647, %v1548
    %vm1559 = vcmp.eq.f32.partialorder %v1558, 8.507059e+37
    %v1560 = vand.u32 %v1548, 2147483648
    %v1561 = vor.u32 1.1754944e-38, %v1560
    %v1562 = vsel %vm1559, %v1561, %v1557
    %v1563 = vmul.f32 1.0, %v1562
    %v1564 = vadd.f32 %v1536, %v579
    %v1565 = vmul.f32 %v1563, %v1564
    %v1567 = vrot.slane %v1499, 4
    %v1569 = vadd.f32 %v1567, %v1565
    %v1570 = vtanh.pop %v1569
    %v1571 = vsub.f32 %v1494, %v1570
    %v1573 = vrot.slane %v1563, 2
    %v1575 = vmul.f32 %v1573, %v1571
    %v1576 = vadd.f32 %v1570, %v1575
    %v1577 = vpack.c.bf16 %v1576, %v1576
    %s1578 = scalar_lea.vmem [#allocation11], 12
    %1579 = vst [vmem:[%s1578] sm:$0x1] %v1577
    %s1580 = scalar_lea.vmem [#allocation2], 78
    %v1581 = vld [vmem:[%s1580] sm:$0x3f]
    %1582 = vmatpush.bf16.msra.mxu0 %v487
    %1583 = vmatpush.bf16.msra.mxu0 %v484
    %1584 = vmatpush.bf16.msra.mxu0 %v481
    %1585 = vmatpush.bf16.msra.mxu0 %v478
    %1586 = vmatpush.bf16.msra.mxu0 %v475
    %1587 = vmatpush.bf16.msra.mxu0 %v472
    %1588 = vmatpush.bf16.msra.mxu0 %v469
    %1589 = vmatpush.bf16.msra.mxu0 %v466
    %1590 = vmatmul.bf16.gmra.mxu0 %v1577
    %v1591 = vpop.f32.mrf.mxu0
    %v1592 = vadd.f32 0.0, %v1591
    %v1593 = vpop.f32.mrf.mxu0
    %1594 = vdwg.mxu0
    %1595 = vmatpush.bf16.msra.mxu0 %v488
    %1596 = vmatpush.bf16.msra.mxu0 %v485
    %1597 = vmatpush.bf16.msra.mxu0 %v482
    %1598 = vmatpush.bf16.msra.mxu0 %v479
    %1599 = vmatpush.bf16.msra.mxu0 %v476
    %1600 = vmatpush.bf16.msra.mxu0 %v473
    %1601 = vmatpush.bf16.msra.mxu0 %v470
    %1602 = vmatpush.bf16.msra.mxu0 %v467
    %1603 = vmatmul.bf16.gmra.mxu0 %v1577
    %v1604 = vpop.f32.mrf.mxu0
    %v1605 = vadd.f32 0.0, %v1604
    %v1606 = vpop.f32.mrf.mxu0
    %1607 = vdwg.mxu0
    %1608 = vmatpush.bf16.msra.mxu0 %v489
    %1609 = vmatpush.bf16.msra.mxu0 %v486
    %1610 = vmatpush.bf16.msra.mxu0 %v483
    %1611 = vmatpush.bf16.msra.mxu0 %v480
    %1612 = vmatpush.bf16.msra.mxu0 %v477
    %1613 = vmatpush.bf16.msra.mxu0 %v474
    %1614 = vmatpush.bf16.msra.mxu0 %v471
    %1615 = vmatpush.bf16.msra.mxu0 %v468
    %1616 = vmatmul.bf16.gmra.mxu0 %v1577
    %v1617 = vpop.f32.mrf.mxu0
    %v1618 = vadd.f32 0.0, %v1617
    %v1619 = vpop.f32.mrf.mxu0
    %1620 = vdwg.mxu0
    %v1623 = vrot.slane %v1605, 6
    %v1624 = vsel %vm268, %v1592, %v1623
    %v1626 = vadd.f32 %v1581, %v1624
    %v1627 = vxor.u32 %v1626, 2147483648
    %v1628 = vmul.f32 %v1627, 1.442695
    %v1629 = vpow.pop %v1628
    %v1630 = vadd.f32 %v1629, 1.0
    %v1631 = vrcp.pop %v1630
    %v1632 = vmul.f32 %v1630, %v1631
    %v1633 = vsub.f32 1.0, %v1632
    %v1634 = vmul.f32 %v1631, %v1633
    %v1635 = vadd.f32 %v1631, %v1634
    %vm1636 = vweird.f32 %v1630
    %vm1637 = vweird.f32 %v1631
    %vm1638 = vmor %vm1636, %vm1637
    %v1639 = vsel %vm1638, %v1631, %v1635
    %v1640 = vand.u32 2147483647, %v1630
    %vm1641 = vcmp.eq.f32.partialorder %v1640, 8.507059e+37
    %v1642 = vand.u32 %v1630, 2147483648
    %v1643 = vor.u32 1.1754944e-38, %v1642
    %v1644 = vsel %vm1641, %v1643, %v1639
    %v1645 = vmul.f32 1.0, %v1644
    %v1646 = vadd.f32 %v1618, %v579
    %v1647 = vmul.f32 %v1645, %v1646
    %v1649 = vrot.slane %v1581, 4
    %v1651 = vadd.f32 %v1649, %v1647
    %v1652 = vtanh.pop %v1651
    %v1653 = vsub.f32 %v1576, %v1652
    %v1655 = vrot.slane %v1645, 2
    %v1657 = vmul.f32 %v1655, %v1653
    %v1658 = vadd.f32 %v1652, %v1657
    %v1659 = vpack.c.bf16 %v1658, %v1658
    %s1660 = scalar_lea.vmem [#allocation11], 13
    %1661 = vst [vmem:[%s1660] sm:$0x1] %v1659
    %s1662 = scalar_lea.vmem [#allocation2], 84
    %v1663 = vld [vmem:[%s1662] sm:$0x3f]
    %1664 = vmatpush.bf16.msra.mxu0 %v487
    %1665 = vmatpush.bf16.msra.mxu0 %v484
    %1666 = vmatpush.bf16.msra.mxu0 %v481
    %1667 = vmatpush.bf16.msra.mxu0 %v478
    %1668 = vmatpush.bf16.msra.mxu0 %v475
    %1669 = vmatpush.bf16.msra.mxu0 %v472
    %1670 = vmatpush.bf16.msra.mxu0 %v469
    %1671 = vmatpush.bf16.msra.mxu0 %v466
    %1672 = vmatmul.bf16.gmra.mxu0 %v1659
    %v1673 = vpop.f32.mrf.mxu0
    %v1674 = vadd.f32 0.0, %v1673
    %v1675 = vpop.f32.mrf.mxu0
    %1676 = vdwg.mxu0
    %1677 = vmatpush.bf16.msra.mxu0 %v488
    %1678 = vmatpush.bf16.msra.mxu0 %v485
    %1679 = vmatpush.bf16.msra.mxu0 %v482
    %1680 = vmatpush.bf16.msra.mxu0 %v479
    %1681 = vmatpush.bf16.msra.mxu0 %v476
    %1682 = vmatpush.bf16.msra.mxu0 %v473
    %1683 = vmatpush.bf16.msra.mxu0 %v470
    %1684 = vmatpush.bf16.msra.mxu0 %v467
    %1685 = vmatmul.bf16.gmra.mxu0 %v1659
    %v1686 = vpop.f32.mrf.mxu0
    %v1687 = vadd.f32 0.0, %v1686
    %v1688 = vpop.f32.mrf.mxu0
    %1689 = vdwg.mxu0
    %1690 = vmatpush.bf16.msra.mxu0 %v489
    %1691 = vmatpush.bf16.msra.mxu0 %v486
    %1692 = vmatpush.bf16.msra.mxu0 %v483
    %1693 = vmatpush.bf16.msra.mxu0 %v480
    %1694 = vmatpush.bf16.msra.mxu0 %v477
    %1695 = vmatpush.bf16.msra.mxu0 %v474
    %1696 = vmatpush.bf16.msra.mxu0 %v471
    %1697 = vmatpush.bf16.msra.mxu0 %v468
    %1698 = vmatmul.bf16.gmra.mxu0 %v1659
    %v1699 = vpop.f32.mrf.mxu0
    %v1700 = vadd.f32 0.0, %v1699
    %v1701 = vpop.f32.mrf.mxu0
    %1702 = vdwg.mxu0
    %v1705 = vrot.slane %v1687, 6
    %v1706 = vsel %vm268, %v1674, %v1705
    %v1708 = vadd.f32 %v1663, %v1706
    %v1709 = vxor.u32 %v1708, 2147483648
    %v1710 = vmul.f32 %v1709, 1.442695
    %v1711 = vpow.pop %v1710
    %v1712 = vadd.f32 %v1711, 1.0
    %v1713 = vrcp.pop %v1712
    %v1714 = vmul.f32 %v1712, %v1713
    %v1715 = vsub.f32 1.0, %v1714
    %v1716 = vmul.f32 %v1713, %v1715
    %v1717 = vadd.f32 %v1713, %v1716
    %vm1718 = vweird.f32 %v1712
    %vm1719 = vweird.f32 %v1713
    %vm1720 = vmor %vm1718, %vm1719
    %v1721 = vsel %vm1720, %v1713, %v1717
    %v1722 = vand.u32 2147483647, %v1712
    %vm1723 = vcmp.eq.f32.partialorder %v1722, 8.507059e+37
    %v1724 = vand.u32 %v1712, 2147483648
    %v1725 = vor.u32 1.1754944e-38, %v1724
    %v1726 = vsel %vm1723, %v1725, %v1721
    %v1727 = vmul.f32 1.0, %v1726
    %v1728 = vadd.f32 %v1700, %v579
    %v1729 = vmul.f32 %v1727, %v1728
    %v1731 = vrot.slane %v1663, 4
    %v1733 = vadd.f32 %v1731, %v1729
    %v1734 = vtanh.pop %v1733
    %v1735 = vsub.f32 %v1658, %v1734
    %v1737 = vrot.slane %v1727, 2
    %v1739 = vmul.f32 %v1737, %v1735
    %v1740 = vadd.f32 %v1734, %v1739
    %v1741 = vpack.c.bf16 %v1740, %v1740
    %s1742 = scalar_lea.vmem [#allocation11], 14
    %1743 = vst [vmem:[%s1742] sm:$0x1] %v1741
    %s1744 = scalar_lea.vmem [#allocation2], 90
    %v1745 = vld [vmem:[%s1744] sm:$0x3f]
    %1746 = vmatpush.bf16.msra.mxu0 %v487
    %1747 = vmatpush.bf16.msra.mxu0 %v484
    %1748 = vmatpush.bf16.msra.mxu0 %v481
    %1749 = vmatpush.bf16.msra.mxu0 %v478
    %1750 = vmatpush.bf16.msra.mxu0 %v475
    %1751 = vmatpush.bf16.msra.mxu0 %v472
    %1752 = vmatpush.bf16.msra.mxu0 %v469
    %1753 = vmatpush.bf16.msra.mxu0 %v466
    %1754 = vmatmul.bf16.gmra.mxu0 %v1741
    %v1755 = vpop.f32.mrf.mxu0
    %v1756 = vadd.f32 0.0, %v1755
    %v1757 = vpop.f32.mrf.mxu0
    %1758 = vdwg.mxu0
    %1759 = vmatpush.bf16.msra.mxu0 %v488
    %1760 = vmatpush.bf16.msra.mxu0 %v485
    %1761 = vmatpush.bf16.msra.mxu0 %v482
    %1762 = vmatpush.bf16.msra.mxu0 %v479
    %1763 = vmatpush.bf16.msra.mxu0 %v476
    %1764 = vmatpush.bf16.msra.mxu0 %v473
    %1765 = vmatpush.bf16.msra.mxu0 %v470
    %1766 = vmatpush.bf16.msra.mxu0 %v467
    %1767 = vmatmul.bf16.gmra.mxu0 %v1741
    %v1768 = vpop.f32.mrf.mxu0
    %v1769 = vadd.f32 0.0, %v1768
    %v1770 = vpop.f32.mrf.mxu0
    %1771 = vdwg.mxu0
    %1772 = vmatpush.bf16.msra.mxu0 %v489
    %1773 = vmatpush.bf16.msra.mxu0 %v486
    %1774 = vmatpush.bf16.msra.mxu0 %v483
    %1775 = vmatpush.bf16.msra.mxu0 %v480
    %1776 = vmatpush.bf16.msra.mxu0 %v477
    %1777 = vmatpush.bf16.msra.mxu0 %v474
    %1778 = vmatpush.bf16.msra.mxu0 %v471
    %1779 = vmatpush.bf16.msra.mxu0 %v468
    %1780 = vmatmul.bf16.gmra.mxu0 %v1741
    %v1781 = vpop.f32.mrf.mxu0
    %v1782 = vadd.f32 0.0, %v1781
    %v1783 = vpop.f32.mrf.mxu0
    %1784 = vdwg.mxu0
    %v1787 = vrot.slane %v1769, 6
    %v1788 = vsel %vm268, %v1756, %v1787
    %v1790 = vadd.f32 %v1745, %v1788
    %v1791 = vxor.u32 %v1790, 2147483648
    %v1792 = vmul.f32 %v1791, 1.442695
    %v1793 = vpow.pop %v1792
    %v1794 = vadd.f32 %v1793, 1.0
    %v1795 = vrcp.pop %v1794
    %v1796 = vmul.f32 %v1794, %v1795
    %v1797 = vsub.f32 1.0, %v1796
    %v1798 = vmul.f32 %v1795, %v1797
    %v1799 = vadd.f32 %v1795, %v1798
    %vm1800 = vweird.f32 %v1794
    %vm1801 = vweird.f32 %v1795
    %vm1802 = vmor %vm1800, %vm1801
    %v1803 = vsel %vm1802, %v1795, %v1799
    %v1804 = vand.u32 2147483647, %v1794
    %vm1805 = vcmp.eq.f32.partialorder %v1804, 8.507059e+37
    %v1806 = vand.u32 %v1794, 2147483648
    %v1807 = vor.u32 1.1754944e-38, %v1806
    %v1808 = vsel %vm1805, %v1807, %v1803
    %v1809 = vmul.f32 1.0, %v1808
    %v1810 = vadd.f32 %v1782, %v579
    %v1811 = vmul.f32 %v1809, %v1810
    %v1813 = vrot.slane %v1745, 4
    %v1815 = vadd.f32 %v1813, %v1811
    %v1816 = vtanh.pop %v1815
    %v1817 = vsub.f32 %v1740, %v1816
    %v1819 = vrot.slane %v1809, 2
    %v1821 = vmul.f32 %v1819, %v1817
    %v1822 = vadd.f32 %v1816, %v1821
    %v1823 = vpack.c.bf16 %v1822, %v1822
    %s1824 = scalar_lea.vmem [#allocation11], 15
    %1825 = vst [vmem:[%s1824] sm:$0x1] %v1823
    %1826 = vst [vmem:[#allocation12] sm:$0x3] %v1822
    // Predicated region
    $region42: #{tpu_custom_call.1} parent=1 // pred_check
      _
    $region43: #{tpu_custom_call.1} parent=1 // pred_check_branch
      %1828 = sbr.rel (0) target = $region45
    $region44: #{tpu_custom_call.1} parent=1 // pred_region
      %1830 = vsyncadd [#allocation5], 0
      %s1831 = sshll.u32 [#allocation11], 4
      %s1832 = int_to_ptr.vmem [resolvable:$true] %s1831
      %s1833 = sshll.u32 %s5, 4
      %s1834 = int_to_ptr.hbm [resolvable:$true] %s1833
      %1839 = dma.vmem_to_hbm [thread:$0]  %s1832, 256, %s1834, [#allocation5], 16, 16, 1
    $region45: #{tpu_custom_call.1} parent=1 // pred_fallthru
      _
    // Predicated region
    $region46: #{tpu_custom_call.1} parent=1 // pred_check
      _
    $region47: #{tpu_custom_call.1} parent=1 // pred_check_branch
      %1841 = sbr.rel (0) target = $region49
    $region48: #{tpu_custom_call.1} parent=1 // pred_region
      %1843 = vsyncadd [#allocation13], 0
      %s1845 = sshll.u32 [#allocation12], 4
      %s1846 = int_to_ptr.vmem [resolvable:$true] %s1845
      %s1847 = sshll.u32 %s6, 4
      %s1848 = int_to_ptr.hbm [resolvable:$true] %s1847
      %1850 = dma.vmem_to_hbm [thread:$0]  %s1846, 32, %s1848, [#allocation13]
    $region49: #{tpu_custom_call.1} parent=1 // pred_fallthru
      _
    // Predicated region
    $region50: #{tpu_custom_call.1} parent=1 // pred_check
      _
    $region51: #{tpu_custom_call.1} parent=1 // pred_check_branch
      %1852 = sbr.rel (0) target = $region53
    $region52: #{tpu_custom_call.1} parent=1 // pred_region
      %1854 = dma.done [#allocation5], 256
    $region53: #{tpu_custom_call.1} parent=1 // pred_fallthru
      _
    // Predicated region
    $region54: #{tpu_custom_call.1} parent=1 // pred_check
      _
    $region55: #{tpu_custom_call.1} parent=1 // pred_check_branch
      %1856 = sbr.rel (0) target = $region57
    $region56: #{tpu_custom_call.1} parent=1 // pred_region
      %1858 = dma.done [#allocation13], 32
    $region57: #{tpu_custom_call.1} parent=1 // pred_fallthru
      _
    %1859 = vsyncpa [#allocation4], 1
    %1860 = vsyncpa [#allocation7], 1
    %1861 = vsyncpa [#allocation10], 1
    %1862 = vsyncpa [#allocation5], 1
    %1863 = vsyncpa [#allocation13], 1

</llo_original>
